<compile_context>
chip_gen: v7x
topology: tpu7x:2x2x1
jax: 0.10.0
libtpu: 0.0.40
codegen_flags: <defaults>
</compile_context>

<pallas_src>
import functools

import jax
import jax.numpy as jnp
from jax import lax
from jax.experimental import pallas as pl
from jax.experimental.pallas import tpu as pltpu

CG = 128  # lane-dense output-channel group width


# ---------------------------------------------------------------------------
# Fused kernel: conv (KH*KW MXU taps, f32 acc) + InstanceNorm (centered
# variance) + optional ReLU, for one image x one 128-wide channel group.
# ---------------------------------------------------------------------------
def _conv_norm_relu_kernel(x_ref, w_ref, o_ref, *, kh, kw, stride, ho, wo, cin,
                           inv_hw, eps, activ):
    """x_ref: (Hp, Wp, Cin) bf16   w_ref: (KH*KW, Cin, CG) bf16
    o_ref: (Ho*Wo, CG) f32 -- normalized (+ReLU'd) conv output."""
    hw = ho * wo

    if stride == 1:
        # Slice each tap directly off the VMEM ref (static slices, no full load).
        def tap(i, j):
            return x_ref[i:i + ho, j:j + wo, :]
    else:
        xt = x_ref[...]
        span_h = (ho - 1) * stride + 1
        span_w = (wo - 1) * stride + 1

        def tap(i, j):
            return xt[i:i + span_h:stride, j:j + span_w:stride, :]

    # Direct convolution as KH*KW shifted-slice MXU dots, accumulated in f32.
    acc = None
    for i in range(kh):
        for j in range(kw):
            xs = tap(i, j).reshape(hw, cin)
            part = jnp.dot(xs, w_ref[i * kw + j],
                           preferred_element_type=jnp.float32)
            acc = part if acc is None else acc + part

    # InstanceNorm with centered (two-pass) variance: no E[y^2]-E[y]^2
    # cancellation.  All math in f32; result resident, never spilled to HBM.
    mean = jnp.sum(acc, axis=0, keepdims=True) * inv_hw          # (1, CG)
    centered = acc - mean
    var = jnp.sum(centered * centered, axis=0, keepdims=True) * inv_hw
    z = centered * lax.rsqrt(var + eps)
    if activ == "relu":
        z = jnp.maximum(z, 0.0)
    o_ref[...] = z.astype(o_ref.dtype)


# ---------------------------------------------------------------------------
# Host-side glue
# ---------------------------------------------------------------------------
def _pad_nhwc(x, pad, padding_mode):
    if pad == 0:
        return x
    modes = {"zeros": "constant", "reflect": "reflect",
             "replicate": "edge", "circular": "wrap"}
    if padding_mode not in modes:
        raise ValueError(f"unknown padding_mode {padding_mode}")
    widths = ((0, 0), (pad, pad), (pad, pad), (0, 0))
    return jnp.pad(x, widths, mode=modes[padding_mode])


def _cdiv(a, b):
    return -(-a // b)


def _vmem_tile_bytes(shape, itemsize):
    """Conservative VMEM footprint of one block incl. (sublane, lane) padding."""
    shape = tuple(int(s) for s in shape)
    if len(shape) < 2:
        shape = (1,) * (2 - len(shape)) + shape
    sub = 32 // itemsize                       # 8 f32, 16 bf16 sublane packing
    lanes = _cdiv(shape[-1], 128) * 128
    subl = _cdiv(shape[-2], sub) * sub
    lead = 1
    for d in shape[:-2]:
        lead *= d
    return lead * subl * lanes * itemsize


def _tpu_vmem_capacity():
    try:
        return int(pltpu.get_tpu_info().vmem_capacity_bytes)
    except Exception:
        return 64 * 1024 * 1024                # conservative (v7x per-TC)


def _xla_fallback(x_nchw, weight_oihw, stride, padding, padding_mode, activ, eps):
    """Plain-XLA path for images whose per-channel-group footprint exceeds VMEM."""
    x_nhwc = jnp.transpose(x_nchw, (0, 2, 3, 1))
    x_pad = _pad_nhwc(x_nhwc, padding, padding_mode).astype(jnp.float32)
    w_hwio = jnp.transpose(weight_oihw, (2, 3, 1, 0)).astype(jnp.float32)
    y = lax.conv_general_dilated(
        x_pad, w_hwio, window_strides=(stride, stride), padding="VALID",
        dimension_numbers=("NHWC", "HWIO", "NHWC"))
    mean = jnp.mean(y, axis=(1, 2), keepdims=True)
    var = jnp.mean(jnp.square(y - mean), axis=(1, 2), keepdims=True)
    y = (y - mean) * lax.rsqrt(var + eps)
    if activ == "relu":
        y = jnp.maximum(y, 0.0)
    return jnp.transpose(y, (0, 3, 1, 2)).astype(x_nchw.dtype)


@functools.partial(jax.jit, static_argnames=(
    "stride", "padding", "padding_mode", "activ", "eps"))
def conv_norm_relu(x_nchw, weight_oihw, *, stride, padding, padding_mode,
                   activ, eps=1e-5):
    """Forward pass matching the PyTorch ConvNormRelu module (NCHW in/out)."""
    n, cin, h, w = x_nchw.shape
    cout, cin_w, kh, kw = weight_oihw.shape
    assert cin == cin_w

    # Layout + spatial padding (pure indexing glue, no data duplication).
    x_nhwc = jnp.transpose(x_nchw, (0, 2, 3, 1))
    x_pad = _pad_nhwc(x_nhwc, padding, padding_mode)
    hp, wp = x_pad.shape[1], x_pad.shape[2]
    ho = (hp - kh) // stride + 1
    wo = (wp - kw) // stride + 1
    hw = ho * wo

    cout_pad = max(CG, _cdiv(cout, CG) * CG)
    num_cg = cout_pad // CG

    # Generation-aware VMEM budgeting (64 MiB/TC on v7x, 128 MiB on v5e/v6e).
    cap = _tpu_vmem_capacity()
    vmem_limit = max(32 << 20, min((cap * 3) // 4, 100 << 20))
    x_blk = _vmem_tile_bytes((hp, wp, cin), 2)         # bf16 image block
    w_blk = _vmem_tile_bytes((kh * kw, cin, CG), 2)    # bf16 weight block
    o_blk = _vmem_tile_bytes((hw, CG), 4)              # f32 output block
    # double-buffered in/out blocks + live f32 values (acc / centered / z) + xt.
    working = 2 * x_blk + 2 * w_blk + 2 * o_blk + 4 * o_blk + x_blk
    fused_fits = working <= int(cap * 0.45)

    if not fused_fits:
        # TODO(synk): add a halo'd row-tiled two-pass Pallas path (bf16
        # intermediate + partial-stat reduction) for images whose per-channel-
        # group footprint exceeds the VMEM budget; plain XLA until then.
        return _xla_fallback(x_nchw, weight_oihw, stride, padding,
                             padding_mode, activ, eps)

    # bf16 activations/weights feed the MXU (halves DMA bytes); results differ
    # from the f32 PyTorch module at ~1e-2 relative error (documented).
    x_pad = x_pad.astype(jnp.bfloat16)
    w_flat = jnp.transpose(weight_oihw, (2, 3, 1, 0)).reshape(kh * kw, cin, cout)
    w_flat = jnp.pad(w_flat, ((0, 0), (0, 0), (0, cout_pad - cout)))
    w_flat = w_flat.astype(jnp.bfloat16)

    kernel = functools.partial(
        _conv_norm_relu_kernel, kh=kh, kw=kw, stride=stride, ho=ho, wo=wo,
        cin=cin, inv_hw=1.0 / float(hw), eps=float(eps), activ=activ)

    sq = pl.Squeezed()
    out_pad = pl.pallas_call(
        kernel,
        out_shape=jax.ShapeDtypeStruct((n, hw, cout_pad), jnp.float32),
        grid_spec=pltpu.PrefetchScalarGridSpec(
            num_scalar_prefetch=0,
            # g is innermost so the image block (index_map constant in g) stays
            # resident across channel groups; both axes independent -> parallel.
            grid=(n, num_cg),
            in_specs=[
                pl.BlockSpec((sq, hp, wp, cin), lambda b, g: (b, 0, 0, 0)),
                pl.BlockSpec((kh * kw, cin, CG), lambda b, g: (0, 0, g)),
            ],
            out_specs=pl.BlockSpec((sq, hw, CG), lambda b, g: (b, 0, g)),
        ),
        compiler_params=pltpu.CompilerParams(
            dimension_semantics=("parallel", "parallel"),
            vmem_limit_bytes=int(vmem_limit)),
    )(x_pad, w_flat)

    # NCHW tail kept for module parity; consumers that accept NHWC can skip the
    # transpose (it is a full extra HBM read+write of the output).
    out = out_pad[:, :, :cout].reshape(n, ho, wo, cout)
    return jnp.transpose(out, (0, 3, 1, 2)).astype(x_nchw.dtype)


# ---------------------------------------------------------------------------
# Pure-JAX reference (same bf16-quantized inputs, f32 math) for a sanity check.
# ---------------------------------------------------------------------------
def _reference(x_nchw, weight_oihw, stride, padding, padding_mode, activ,
               eps=1e-5):
    x_nhwc = jnp.transpose(x_nchw, (0, 2, 3, 1))
    x_pad = _pad_nhwc(x_nhwc, padding, padding_mode)
    x_pad = x_pad.astype(jnp.bfloat16).astype(jnp.float32)
    w_hwio = jnp.transpose(weight_oihw, (2, 3, 1, 0))
    w_hwio = w_hwio.astype(jnp.bfloat16).astype(jnp.float32)
    y = lax.conv_general_dilated(
        x_pad, w_hwio, window_strides=(stride, stride), padding="VALID",
        dimension_numbers=("NHWC", "HWIO", "NHWC"))
    mean = jnp.mean(y, axis=(1, 2), keepdims=True)
    var = jnp.mean(jnp.square(y - mean), axis=(1, 2), keepdims=True)
    y = (y - mean) * lax.rsqrt(var + eps)
    if activ == "relu":
        y = jnp.maximum(y, 0.0)
    return jnp.transpose(y, (0, 3, 1, 2))


if __name__ == "__main__":
    in_channels, out_channels = 4, 8
    kernel_size, stride, padding = 3, 1, 1
    padding_mode, activ = "zeros", "relu"

    key = jax.random.PRNGKey(0)
    kx, kw_ = jax.random.split(key)
    x = jax.random.normal(kx, (2, in_channels, 16, 16), dtype=jnp.float32)
    fan_in = in_channels * kernel_size * kernel_size
    weight = jax.random.uniform(
        kw_, (out_channels, in_channels, kernel_size, kernel_size),
        dtype=jnp.float32, minval=-1.0, maxval=1.0) / jnp.sqrt(float(fan_in))

    out = conv_norm_relu(x, weight, stride=stride, padding=padding,
                         padding_mode=padding_mode, activ=activ)
    out = jax.block_until_ready(out)
    assert out.shape == (2, out_channels, 16, 16)

    ref = _reference(x, weight, stride, padding, padding_mode, activ)
    err = float(jnp.max(jnp.abs(out - ref)))
    assert err < 1e-2, f"max abs err vs reference: {err}"

    print("KERNEL_OK")
</pallas_src>

<mosaic_0001>
module attributes {stable_mosaic.version = 11 : i64} {
  func.func @_conv_norm_relu_kernel(%arg0: i32, %arg1: i32, %arg2: memref<1x18x18x4xbf16, #tpu.memory_space<vmem>>, %arg3: memref<9x4x128xbf16, #tpu.memory_space<vmem>>, %arg4: memref<1x256x128xf32, #tpu.memory_space<vmem>>) attributes {dimension_semantics = [#tpu.dimension_semantics<parallel>, #tpu.dimension_semantics<parallel>], iteration_bounds = array<i64: 2, 1>, scalar_prefetch = 0 : i64, scratch_operands = 0 : i64, tpu.core_type = #tpu.core_type<tc>, window_params = [{transform_indices = @transform_0, window_bounds = array<i64: 1, 18, 18, 4>}, {transform_indices = @transform_1, window_bounds = array<i64: 9, 4, 128>}, {transform_indices = @transform_2, window_bounds = array<i64: 1, 256, 128>}]} {
    %c0 = arith.constant 0 : index
    %c0_0 = arith.constant 0 : index
    %c0_1 = arith.constant 0 : index
    %c0_2 = arith.constant 0 : index
    %0 = vector.load %arg2[%c0, %c0_0, %c0_1, %c0_2] : memref<1x18x18x4xbf16, #tpu.memory_space<vmem>>, vector<1x16x16x4xbf16>
    %1 = vector.shape_cast %0 : vector<1x16x16x4xbf16> to vector<16x16x4xbf16>
    %2 = vector.shape_cast %1 : vector<16x16x4xbf16> to vector<256x4xbf16>
    %c0_3 = arith.constant 0 : index
    %c0_4 = arith.constant 0 : index
    %c0_5 = arith.constant 0 : index
    %3 = vector.load %arg3[%c0_3, %c0_4, %c0_5] : memref<9x4x128xbf16, #tpu.memory_space<vmem>>, vector<1x4x128xbf16>
    %4 = vector.shape_cast %3 : vector<1x4x128xbf16> to vector<4x128xbf16>
    %cst = arith.constant dense<0.000000e+00> : vector<256x128xf32>
    %5 = tpu.matmul %2, %4, %cst {dimension_numbers = #tpu.dot_dimension_numbers<[1], [0], [0], [1], [0, 0, 1, 1], [], []>} : vector<256x4xbf16>, vector<4x128xbf16>, vector<256x128xf32> -> vector<256x128xf32>
    %c0_6 = arith.constant 0 : index
    %c0_7 = arith.constant 0 : index
    %c1 = arith.constant 1 : index
    %c0_8 = arith.constant 0 : index
    %6 = vector.load %arg2[%c0_6, %c0_7, %c1, %c0_8] : memref<1x18x18x4xbf16, #tpu.memory_space<vmem>>, vector<1x16x16x4xbf16>
    %7 = vector.shape_cast %6 : vector<1x16x16x4xbf16> to vector<16x16x4xbf16>
    %8 = vector.shape_cast %7 : vector<16x16x4xbf16> to vector<256x4xbf16>
    %c1_9 = arith.constant 1 : index
    %c0_10 = arith.constant 0 : index
    %c0_11 = arith.constant 0 : index
    %9 = vector.load %arg3[%c1_9, %c0_10, %c0_11] : memref<9x4x128xbf16, #tpu.memory_space<vmem>>, vector<1x4x128xbf16>
    %10 = vector.shape_cast %9 : vector<1x4x128xbf16> to vector<4x128xbf16>
    %cst_12 = arith.constant dense<0.000000e+00> : vector<256x128xf32>
    %11 = tpu.matmul %8, %10, %cst_12 {dimension_numbers = #tpu.dot_dimension_numbers<[1], [0], [0], [1], [0, 0, 1, 1], [], []>} : vector<256x4xbf16>, vector<4x128xbf16>, vector<256x128xf32> -> vector<256x128xf32>
    %12 = arith.addf %5, %11 : vector<256x128xf32>
    %c0_13 = arith.constant 0 : index
    %c0_14 = arith.constant 0 : index
    %c2 = arith.constant 2 : index
    %c0_15 = arith.constant 0 : index
    %13 = vector.load %arg2[%c0_13, %c0_14, %c2, %c0_15] : memref<1x18x18x4xbf16, #tpu.memory_space<vmem>>, vector<1x16x16x4xbf16>
    %14 = vector.shape_cast %13 : vector<1x16x16x4xbf16> to vector<16x16x4xbf16>
    %15 = vector.shape_cast %14 : vector<16x16x4xbf16> to vector<256x4xbf16>
    %c2_16 = arith.constant 2 : index
    %c0_17 = arith.constant 0 : index
    %c0_18 = arith.constant 0 : index
    %16 = vector.load %arg3[%c2_16, %c0_17, %c0_18] : memref<9x4x128xbf16, #tpu.memory_space<vmem>>, vector<1x4x128xbf16>
    %17 = vector.shape_cast %16 : vector<1x4x128xbf16> to vector<4x128xbf16>
    %cst_19 = arith.constant dense<0.000000e+00> : vector<256x128xf32>
    %18 = tpu.matmul %15, %17, %cst_19 {dimension_numbers = #tpu.dot_dimension_numbers<[1], [0], [0], [1], [0, 0, 1, 1], [], []>} : vector<256x4xbf16>, vector<4x128xbf16>, vector<256x128xf32> -> vector<256x128xf32>
    %19 = arith.addf %12, %18 : vector<256x128xf32>
    %c0_20 = arith.constant 0 : index
    %c1_21 = arith.constant 1 : index
    %c0_22 = arith.constant 0 : index
    %c0_23 = arith.constant 0 : index
    %20 = vector.load %arg2[%c0_20, %c1_21, %c0_22, %c0_23] : memref<1x18x18x4xbf16, #tpu.memory_space<vmem>>, vector<1x16x16x4xbf16>
    %21 = vector.shape_cast %20 : vector<1x16x16x4xbf16> to vector<16x16x4xbf16>
    %22 = vector.shape_cast %21 : vector<16x16x4xbf16> to vector<256x4xbf16>
    %c3 = arith.constant 3 : index
    %c0_24 = arith.constant 0 : index
    %c0_25 = arith.constant 0 : index
    %23 = vector.load %arg3[%c3, %c0_24, %c0_25] : memref<9x4x128xbf16, #tpu.memory_space<vmem>>, vector<1x4x128xbf16>
    %24 = vector.shape_cast %23 : vector<1x4x128xbf16> to vector<4x128xbf16>
    %cst_26 = arith.constant dense<0.000000e+00> : vector<256x128xf32>
    %25 = tpu.matmul %22, %24, %cst_26 {dimension_numbers = #tpu.dot_dimension_numbers<[1], [0], [0], [1], [0, 0, 1, 1], [], []>} : vector<256x4xbf16>, vector<4x128xbf16>, vector<256x128xf32> -> vector<256x128xf32>
    %26 = arith.addf %19, %25 : vector<256x128xf32>
    %c0_27 = arith.constant 0 : index
    %c1_28 = arith.constant 1 : index
    %c1_29 = arith.constant 1 : index
    %c0_30 = arith.constant 0 : index
    %27 = vector.load %arg2[%c0_27, %c1_28, %c1_29, %c0_30] : memref<1x18x18x4xbf16, #tpu.memory_space<vmem>>, vector<1x16x16x4xbf16>
    %28 = vector.shape_cast %27 : vector<1x16x16x4xbf16> to vector<16x16x4xbf16>
    %29 = vector.shape_cast %28 : vector<16x16x4xbf16> to vector<256x4xbf16>
    %c4 = arith.constant 4 : index
    %c0_31 = arith.constant 0 : index
    %c0_32 = arith.constant 0 : index
    %30 = vector.load %arg3[%c4, %c0_31, %c0_32] : memref<9x4x128xbf16, #tpu.memory_space<vmem>>, vector<1x4x128xbf16>
    %31 = vector.shape_cast %30 : vector<1x4x128xbf16> to vector<4x128xbf16>
    %cst_33 = arith.constant dense<0.000000e+00> : vector<256x128xf32>
    %32 = tpu.matmul %29, %31, %cst_33 {dimension_numbers = #tpu.dot_dimension_numbers<[1], [0], [0], [1], [0, 0, 1, 1], [], []>} : vector<256x4xbf16>, vector<4x128xbf16>, vector<256x128xf32> -> vector<256x128xf32>
    %33 = arith.addf %26, %32 : vector<256x128xf32>
    %c0_34 = arith.constant 0 : index
    %c1_35 = arith.constant 1 : index
    %c2_36 = arith.constant 2 : index
    %c0_37 = arith.constant 0 : index
    %34 = vector.load %arg2[%c0_34, %c1_35, %c2_36, %c0_37] : memref<1x18x18x4xbf16, #tpu.memory_space<vmem>>, vector<1x16x16x4xbf16>
    %35 = vector.shape_cast %34 : vector<1x16x16x4xbf16> to vector<16x16x4xbf16>
    %36 = vector.shape_cast %35 : vector<16x16x4xbf16> to vector<256x4xbf16>
    %c5 = arith.constant 5 : index
    %c0_38 = arith.constant 0 : index
    %c0_39 = arith.constant 0 : index
    %37 = vector.load %arg3[%c5, %c0_38, %c0_39] : memref<9x4x128xbf16, #tpu.memory_space<vmem>>, vector<1x4x128xbf16>
    %38 = vector.shape_cast %37 : vector<1x4x128xbf16> to vector<4x128xbf16>
    %cst_40 = arith.constant dense<0.000000e+00> : vector<256x128xf32>
    %39 = tpu.matmul %36, %38, %cst_40 {dimension_numbers = #tpu.dot_dimension_numbers<[1], [0], [0], [1], [0, 0, 1, 1], [], []>} : vector<256x4xbf16>, vector<4x128xbf16>, vector<256x128xf32> -> vector<256x128xf32>
    %40 = arith.addf %33, %39 : vector<256x128xf32>
    %c0_41 = arith.constant 0 : index
    %c2_42 = arith.constant 2 : index
    %c0_43 = arith.constant 0 : index
    %c0_44 = arith.constant 0 : index
    %41 = vector.load %arg2[%c0_41, %c2_42, %c0_43, %c0_44] : memref<1x18x18x4xbf16, #tpu.memory_space<vmem>>, vector<1x16x16x4xbf16>
    %42 = vector.shape_cast %41 : vector<1x16x16x4xbf16> to vector<16x16x4xbf16>
    %43 = vector.shape_cast %42 : vector<16x16x4xbf16> to vector<256x4xbf16>
    %c6 = arith.constant 6 : index
    %c0_45 = arith.constant 0 : index
    %c0_46 = arith.constant 0 : index
    %44 = vector.load %arg3[%c6, %c0_45, %c0_46] : memref<9x4x128xbf16, #tpu.memory_space<vmem>>, vector<1x4x128xbf16>
    %45 = vector.shape_cast %44 : vector<1x4x128xbf16> to vector<4x128xbf16>
    %cst_47 = arith.constant dense<0.000000e+00> : vector<256x128xf32>
    %46 = tpu.matmul %43, %45, %cst_47 {dimension_numbers = #tpu.dot_dimension_numbers<[1], [0], [0], [1], [0, 0, 1, 1], [], []>} : vector<256x4xbf16>, vector<4x128xbf16>, vector<256x128xf32> -> vector<256x128xf32>
    %47 = arith.addf %40, %46 : vector<256x128xf32>
    %c0_48 = arith.constant 0 : index
    %c2_49 = arith.constant 2 : index
    %c1_50 = arith.constant 1 : index
    %c0_51 = arith.constant 0 : index
    %48 = vector.load %arg2[%c0_48, %c2_49, %c1_50, %c0_51] : memref<1x18x18x4xbf16, #tpu.memory_space<vmem>>, vector<1x16x16x4xbf16>
    %49 = vector.shape_cast %48 : vector<1x16x16x4xbf16> to vector<16x16x4xbf16>
    %50 = vector.shape_cast %49 : vector<16x16x4xbf16> to vector<256x4xbf16>
    %c7 = arith.constant 7 : index
    %c0_52 = arith.constant 0 : index
    %c0_53 = arith.constant 0 : index
    %51 = vector.load %arg3[%c7, %c0_52, %c0_53] : memref<9x4x128xbf16, #tpu.memory_space<vmem>>, vector<1x4x128xbf16>
    %52 = vector.shape_cast %51 : vector<1x4x128xbf16> to vector<4x128xbf16>
    %cst_54 = arith.constant dense<0.000000e+00> : vector<256x128xf32>
    %53 = tpu.matmul %50, %52, %cst_54 {dimension_numbers = #tpu.dot_dimension_numbers<[1], [0], [0], [1], [0, 0, 1, 1], [], []>} : vector<256x4xbf16>, vector<4x128xbf16>, vector<256x128xf32> -> vector<256x128xf32>
    %54 = arith.addf %47, %53 : vector<256x128xf32>
    %c0_55 = arith.constant 0 : index
    %c2_56 = arith.constant 2 : index
    %c2_57 = arith.constant 2 : index
    %c0_58 = arith.constant 0 : index
    %55 = vector.load %arg2[%c0_55, %c2_56, %c2_57, %c0_58] : memref<1x18x18x4xbf16, #tpu.memory_space<vmem>>, vector<1x16x16x4xbf16>
    %56 = vector.shape_cast %55 : vector<1x16x16x4xbf16> to vector<16x16x4xbf16>
    %57 = vector.shape_cast %56 : vector<16x16x4xbf16> to vector<256x4xbf16>
    %c8 = arith.constant 8 : index
    %c0_59 = arith.constant 0 : index
    %c0_60 = arith.constant 0 : index
    %58 = vector.load %arg3[%c8, %c0_59, %c0_60] : memref<9x4x128xbf16, #tpu.memory_space<vmem>>, vector<1x4x128xbf16>
    %59 = vector.shape_cast %58 : vector<1x4x128xbf16> to vector<4x128xbf16>
    %cst_61 = arith.constant dense<0.000000e+00> : vector<256x128xf32>
    %60 = tpu.matmul %57, %59, %cst_61 {dimension_numbers = #tpu.dot_dimension_numbers<[1], [0], [0], [1], [0, 0, 1, 1], [], []>} : vector<256x4xbf16>, vector<4x128xbf16>, vector<256x128xf32> -> vector<256x128xf32>
    %61 = arith.addf %54, %60 : vector<256x128xf32>
    %cst_62 = arith.constant dense<0.000000e+00> : vector<128xf32>
    %62 = vector.multi_reduction <add>, %61, %cst_62 [0] : vector<256x128xf32> to vector<128xf32>
    %63 = vector.shape_cast %62 : vector<128xf32> to vector<1x128xf32>
    %cst_63 = arith.constant 3.906250e-03 : f32
    %64 = vector.broadcast %cst_63 : f32 to vector<1x128xf32>
    %65 = arith.mulf %63, %64 : vector<1x128xf32>
    %66 = vector.broadcast %65 : vector<1x128xf32> to vector<256x128xf32>
    %67 = arith.subf %61, %66 : vector<256x128xf32>
    %68 = arith.mulf %67, %67 : vector<256x128xf32>
    %cst_64 = arith.constant dense<0.000000e+00> : vector<128xf32>
    %69 = vector.multi_reduction <add>, %68, %cst_64 [0] : vector<256x128xf32> to vector<128xf32>
    %70 = vector.shape_cast %69 : vector<128xf32> to vector<1x128xf32>
    %cst_65 = arith.constant 3.906250e-03 : f32
    %71 = vector.broadcast %cst_65 : f32 to vector<1x128xf32>
    %72 = arith.mulf %70, %71 : vector<1x128xf32>
    %cst_66 = arith.constant 9.99999974E-6 : f32
    %73 = vector.broadcast %cst_66 : f32 to vector<1x128xf32>
    %74 = arith.addf %72, %73 : vector<1x128xf32>
    %75 = math.rsqrt %74 : vector<1x128xf32>
    %76 = vector.broadcast %75 : vector<1x128xf32> to vector<256x128xf32>
    %77 = arith.mulf %67, %76 : vector<256x128xf32>
    %cst_67 = arith.constant 0.000000e+00 : f32
    %78 = vector.broadcast %cst_67 : f32 to vector<256x128xf32>
    %79 = arith.maximumf %77, %78 : vector<256x128xf32>
    %c0_68 = arith.constant 0 : index
    %c0_69 = arith.constant 0 : index
    %c0_70 = arith.constant 0 : index
    %80 = vector.load %arg4[%c0_68, %c0_69, %c0_70] : memref<1x256x128xf32, #tpu.memory_space<vmem>>, vector<1x256x128xf32>
    %81 = vector.shape_cast %80 : vector<1x256x128xf32> to vector<256x128xf32>
    %82 = vector.shape_cast %79 : vector<256x128xf32> to vector<1x256x128xf32>
    tpu.vector_store %arg4[%c0_68, %c0_69, %c0_70], %82 {strides = array<i32>} : memref<1x256x128xf32, #tpu.memory_space<vmem>>, vector<1x256x128xf32>,
    return
  }
  func.func @transform_0(%arg0: i32, %arg1: i32) -> (i32, i32, i32, i32) {
    %c0_i32 = arith.constant 0 : i32
    %c0_i32_0 = arith.constant 0 : i32
    %c0_i32_1 = arith.constant 0 : i32
    %c0_i32_2 = arith.constant 0 : i32
    return %arg0, %c0_i32, %c0_i32_0, %c0_i32_1 : i32, i32, i32, i32
  }
  func.func @transform_1(%arg0: i32, %arg1: i32) -> (i32, i32, i32) {
    %c0_i32 = arith.constant 0 : i32
    %c0_i32_0 = arith.constant 0 : i32
    %c0_i32_1 = arith.constant 0 : i32
    return %c0_i32, %c0_i32_0, %arg1 : i32, i32, i32
  }
  func.func @transform_2(%arg0: i32, %arg1: i32) -> (i32, i32, i32) {
    %c0_i32 = arith.constant 0 : i32
    %c0_i32_0 = arith.constant 0 : i32
    return %arg0, %c0_i32, %arg1 : i32, i32, i32
  }
}

</mosaic_0001>

<llo_original>
// kernel: conv_norm_relu.1
$region0: #{conv_norm_relu.1}
  #allocation0 [shape = 'u32[]', space=smem, size = 0x4, offset = 0x4, fixed_abs, tag = 'smem constant byte address 0x4 - core index']
  #allocation1 [shape = 'u32[144,128]{1,0:T(1,128)}', space=vmem, size = 0x12000, scoped, tag = 'internal scratch']
  %s0 = inlined_call_operand.vmem [shape: bf16[2,18,18,4], index: 0, kind: input, shape index: {}]
  %s1 = inlined_call_operand.vmem [shape: bf16[9,4,128], index: 1, kind: input, shape index: {}]
  %s2 = inlined_call_operand.vmem [shape: f32[2,256,128], index: 2, kind: output, shape index: {}]
  %s3 = sld [smem:[#allocation0]]
  $region41: #{conv_norm_relu.1} parent=0
    _
  %s5 = ssub.s32 1, %s3
  %s6 = scalar_select 0, %s5, %s3
  loop: start=0, step=1, limit=4
  $region2: #{conv_norm_relu.1} parent=0 // loop_pre_header
    _
  $region3: #{conv_norm_relu.1} parent=0 // loop_header
    %s8 = sphi 0, %s12
    %p9 = scmp.ge.s32.totalorder %s8, 4
    %s15 = sphi 0, %s27
    %s16 = sphi 0, %s23
    %s17 = sphi 0, %s15
    %s18 = sphi 0, %s16
    %s19 = sphi 0, %s17
    %s20 = sphi 0, %s18
    %s30 = sphi 0, %s32
    %s33 = sphi 0, %s30
    %s34 = sphi 0, %s33
    %s50 = sphi 0, %s34
    %s56 = sphi 0, %s58
    %s59 = sphi 0, %s56
    %s60 = sphi 0, %s59
    %s76 = sphi 0, %s60
    %s84 = sphi 0, %s86
    %s87 = sphi 0, %s84
    %s88 = sphi 0, %s87
    %s104 = sphi 0, %s88
  $region4: #{conv_norm_relu.1} parent=0 // loop_header_branch
    %11 = sbr.rel (%p9) target = $region8
  $region5: #{conv_norm_relu.1} parent=0 // loop_body
    %s13 = ssub.s32 %s8, 1
    %s14 = ssub.s32 %s8, 2
    %s21 = sadd.s32 1, %s16
    %p22 = scmp.ge.s32.totalorder %s21, 1
    %s23 = scalar_select %p22, 0, %s21
    %s24 = sadd.s32 1, %s15
    %s25 = scalar_select %p22, %s24, %s15
    %p26 = scmp.ge.s32.totalorder %s25, 2
    %s27 = scalar_select %p26, 0, %s25
    %s28 = ssub.s32 %s15, %s27
    %p29 = scmp.eq.s32.totalorder %s28, 0
    %s31 = sadd.s32 %s30, 1
    %s32 = scalar_select %p29, %s30, %s31
    %p35 = pneg %p29
    %p36 = scmp.eq.s32.totalorder %s8, 1
    %p37 = por %p35, %p36
    %p38 = scmp.ne.s32.totalorder %s30, %s33
    %p39 = scmp.eq.s32.totalorder %s8, 0
    %p40 = por %p38, %p39
    %p41 = scmp.ne.s32.totalorder %s30, %s33
    %p42 = scmp.eq.s32.totalorder %s13, 1
    %p43 = por %p41, %p42
    %p44 = scmp.ne.s32.totalorder %s33, %s34
    %p45 = scmp.eq.s32.totalorder %s13, 0
    %p46 = por %p44, %p45
    %p47 = scmp.ne.s32.totalorder %s33, %s34
    %p48 = scmp.eq.s32.totalorder %s14, 1
    %p49 = por %p47, %p48
    %p51 = scmp.ne.s32.totalorder %s34, %s50
    %p52 = scmp.eq.s32.totalorder %s14, 0
    %p53 = por %p51, %p52
    %s54 = ssub.s32 %s16, %s23
    %p55 = scmp.eq.s32.totalorder %s54, 0
    %s57 = sadd.s32 %s56, 1
    %s58 = scalar_select %p55, %s56, %s57
    %p61 = pneg %p55
    %p62 = scmp.eq.s32.totalorder %s8, 1
    %p63 = por %p61, %p62
    %p64 = scmp.ne.s32.totalorder %s56, %s59
    %p65 = scmp.eq.s32.totalorder %s8, 0
    %p66 = por %p64, %p65
    %p67 = scmp.ne.s32.totalorder %s56, %s59
    %p68 = scmp.eq.s32.totalorder %s13, 1
    %p69 = por %p67, %p68
    %p70 = scmp.ne.s32.totalorder %s59, %s60
    %p71 = scmp.eq.s32.totalorder %s13, 0
    %p72 = por %p70, %p71
    %p73 = scmp.ne.s32.totalorder %s59, %s60
    %p74 = scmp.eq.s32.totalorder %s14, 1
    %p75 = por %p73, %p74
    %p77 = scmp.ne.s32.totalorder %s60, %s76
    %p78 = scmp.eq.s32.totalorder %s14, 0
    %p79 = por %p77, %p78
    %s80 = ssub.s32 %s15, %s27
    %s81 = ssub.s32 %s16, %s23
    %s82 = sor.u32 %s80, %s81
    %p83 = scmp.eq.s32.totalorder %s82, 0
    %s85 = sadd.s32 %s84, 1
    %s86 = scalar_select %p83, %s84, %s85
    %p89 = pneg %p83
    %p90 = scmp.eq.s32.totalorder %s8, 1
    %p91 = por %p89, %p90
    %p92 = scmp.ne.s32.totalorder %s84, %s87
    %p93 = scmp.eq.s32.totalorder %s8, 0
    %p94 = por %p92, %p93
    %p95 = scmp.ne.s32.totalorder %s84, %s87
    %p96 = scmp.eq.s32.totalorder %s13, 1
    %p97 = por %p95, %p96
    %p98 = scmp.ne.s32.totalorder %s87, %s88
    %p99 = scmp.eq.s32.totalorder %s13, 0
    %p100 = por %p98, %p99
    %p101 = scmp.ne.s32.totalorder %s87, %s88
    %p102 = scmp.eq.s32.totalorder %s14, 1
    %p103 = por %p101, %p102
    %p105 = scmp.ne.s32.totalorder %s88, %s104
    %p106 = scmp.eq.s32.totalorder %s14, 0
    %p107 = por %p105, %p106
    %p108 = scmp.le.s32.totalorder 1, %s8
    %p109 = scmp.lt.s32.totalorder %s8, 3
    %p110 = pnand %p108, %p109
    %p111 = pneg %p110
    // Predicated region
    $region9: #{conv_norm_relu.1} parent=5 // pred_check
      _
    $region10: #{conv_norm_relu.1} parent=5 // pred_check_branch
      %113 = sbr.rel (%p110) target = $region12
    $region11: #{conv_norm_relu.1} parent=5 // pred_region
      %s114 = ssub.s32 %s8, 1
      // Predicated region
      $region13: #{conv_norm_relu.1} parent=11 // pred_check
        %p115 = pneg %p72
      $region14: #{conv_norm_relu.1} parent=11 // pred_check_branch
        %117 = sbr.rel (%p115) target = $region16
      $region15: #{conv_norm_relu.1} parent=11 // pred_region
        %p118 = scmp.lt.s32.totalorder %s18, 0
        %s119 = scalar_select %p118, %s18, 0
        %s120 = smul.addr %s119, 2
        %s121 = scalar_lea.vmem %s1, %s120
      $region16: #{conv_norm_relu.1} parent=11 // pred_fallthru
        _
    $region12: #{conv_norm_relu.1} parent=5 // pred_fallthru
      _
    %p122 = scmp.lt.s32.totalorder %s8, 2
    // Predicated region
    $region17: #{conv_norm_relu.1} parent=5 // pred_check
      %p123 = pneg %p122
    $region18: #{conv_norm_relu.1} parent=5 // pred_check_branch
      %125 = sbr.rel (%p123) target = $region20
    $region19: #{conv_norm_relu.1} parent=5 // pred_region
      // Predicated region
      $region21: #{conv_norm_relu.1} parent=19 // pred_check
        %p126 = pneg %p40
      $region22: #{conv_norm_relu.1} parent=19 // pred_check_branch
        %128 = sbr.rel (%p126) target = $region24
      $region23: #{conv_norm_relu.1} parent=19 // pred_region
        %p129 = scmp.lt.s32.totalorder %s15, 1
        %s130 = scalar_select %p129, %s15, 1
        %s131 = smul.addr %s130, 54
        %s132 = smul.addr %s131, 4
        %s133 = scalar_lea.vmem %s0, %s132
      $region24: #{conv_norm_relu.1} parent=19 // pred_fallthru
        _
    $region20: #{conv_norm_relu.1} parent=5 // pred_fallthru
      _
    %p134 = scmp.le.s32.totalorder 1, %s8
    %p135 = scmp.lt.s32.totalorder %s8, 3
    %p136 = pnand %p134, %p135
    %p137 = pneg %p136
    // Predicated region
    $region25: #{conv_norm_relu.1} parent=5 // pred_check
      _
    $region26: #{conv_norm_relu.1} parent=5 // pred_check_branch
      %139 = sbr.rel (%p136) target = $region28
    $region27: #{conv_norm_relu.1} parent=5 // pred_region
      %s140 = ssub.s32 %s8, 1
      %p141 = scmp.lt.s32.totalorder %s17, 1
      %s142 = scalar_select %p141, %s17, 1
      %s143 = smul.addr %s142, 54
      %s144 = smul.addr %s143, 4
      %s145 = scalar_lea.vmem %s0, %s144
      %p146 = pneg %p46
      %p147 = pneg %p43
      %p148 = scmp.lt.s32.totalorder %s18, 0
      %s149 = scalar_select %p148, %s18, 0
      %s150 = smul.addr %s149, 2
      %s151 = scalar_lea.vmem %s1, %s150
      %p152 = pneg %p72
      %p153 = pneg %p69
      %p154 = pneg %p100
      %p155 = pneg %p97
      %p156 = scmp.lt.s32.totalorder %s17, 1
      %s157 = scalar_select %p156, %s17, 1
      %p158 = scmp.lt.s32.totalorder %s18, 0
      %s159 = scalar_select %p158, %s18, 0
      %s160 = smul.addr %s157, 32
      %s161 = sadd.s32 %s159, %s160
      %s162 = smul.addr %s161, 8
      %s163 = scalar_lea.vmem %s2, %s162
      %p164 = scmp.lt.s32.totalorder %s17, 1
      %s165 = scalar_select %p164, %s17, 1
      %s166 = smul.addr %s165, 54
      %s167 = smul.addr %s166, 4
      %s168 = scalar_lea.vmem %s0, %s167
      %p169 = scmp.lt.s32.totalorder %s18, 0
      %s170 = scalar_select %p169, %s18, 0
      %s171 = smul.addr %s170, 2
      %s172 = scalar_lea.vmem %s1, %s171
      %p173 = scmp.lt.s32.totalorder %s17, 1
      %s174 = scalar_select %p173, %s17, 1
      %p175 = scmp.lt.s32.totalorder %s18, 0
      %s176 = scalar_select %p175, %s18, 0
      %s177 = smul.addr %s174, 32
      %s178 = sadd.s32 %s176, %s177
      %s179 = smul.addr %s178, 8
      %s180 = scalar_lea.vmem %s2, %s179
      %v182 = vld [vmem:[%s168] sm:$0xf]
      %v183 = vld [vmem:[%s168 + $0x4] sm:$0xf]
      %v184 = vld [vmem:[%s168 + $0xc] sm:$0xf]
      %v185 = vld [vmem:[%s168 + $0x10] sm:$0xf]
      %v186 = vld [vmem:[%s168 + $0x18] sm:$0xf]
      %v187 = vld [vmem:[%s168 + $0x1c] sm:$0xf]
      %v188 = vld [vmem:[%s168 + $0x24] sm:$0xf]
      %v189 = vld [vmem:[%s168 + $0x28] sm:$0xf]
      %v190 = vld [vmem:[%s168 + $0x30] sm:$0xf]
      %v191 = vld [vmem:[%s168 + $0x34] sm:$0xf]
      %v192 = vld [vmem:[%s168 + $0x3c] sm:$0xf]
      %v193 = vld [vmem:[%s168 + $0x40] sm:$0xf]
      %v194 = vld [vmem:[%s168 + $0x48] sm:$0xf]
      %v195 = vld [vmem:[%s168 + $0x4c] sm:$0xf]
      %v196 = vld [vmem:[%s168 + $0x54] sm:$0xf]
      %v197 = vld [vmem:[%s168 + $0x58] sm:$0xf]
      %v198 = vld [vmem:[%s168 + $0x60] sm:$0xf]
      %v199 = vld [vmem:[%s168 + $0x64] sm:$0xf]
      %v200 = vld [vmem:[%s168 + $0x6c] sm:$0xf]
      %v201 = vld [vmem:[%s168 + $0x70] sm:$0xf]
      %v202 = vld [vmem:[%s168 + $0x78] sm:$0xf]
      %v203 = vld [vmem:[%s168 + $0x7c] sm:$0xf]
      %v204 = vld [vmem:[%s168 + $0x84] sm:$0xf]
      %v205 = vld [vmem:[%s168 + $0x88] sm:$0xf]
      %v206 = vld [vmem:[%s168 + $0x90] sm:$0xf]
      %v207 = vld [vmem:[%s168 + $0x94] sm:$0xf]
      %v208 = vld [vmem:[%s168 + $0x9c] sm:$0xf]
      %v209 = vld [vmem:[%s168 + $0xa0] sm:$0xf]
      %v210 = vld [vmem:[%s168 + $0xa8] sm:$0xf]
      %v211 = vld [vmem:[%s168 + $0xac] sm:$0xf]
      %v212 = vld [vmem:[%s168 + $0xb4] sm:$0xf]
      %v213 = vld [vmem:[%s168 + $0xb8] sm:$0xf]
      %v214 = vld [vmem:[%s172] sm:$0x3]
      %v215 = vld [vmem:[%s168 + $0x8] sm:$0x1]
      %v216 = vld [vmem:[%s168 + $0x14] sm:$0x1]
      %v217 = vld [vmem:[%s168 + $0x20] sm:$0x1]
      %v218 = vld [vmem:[%s168 + $0x2c] sm:$0x1]
      %v219 = vld [vmem:[%s168 + $0x38] sm:$0x1]
      %v220 = vld [vmem:[%s168 + $0x44] sm:$0x1]
      %v221 = vld [vmem:[%s168 + $0x50] sm:$0x1]
      %v222 = vld [vmem:[%s168 + $0x5c] sm:$0x1]
      %v223 = vld [vmem:[%s168 + $0x68] sm:$0x1]
      %v224 = vld [vmem:[%s168 + $0x74] sm:$0x1]
      %v225 = vld [vmem:[%s168 + $0x80] sm:$0x1]
      %v226 = vld [vmem:[%s168 + $0x8c] sm:$0x1]
      %v227 = vld [vmem:[%s168 + $0x98] sm:$0x1]
      %v228 = vld [vmem:[%s168 + $0xa4] sm:$0x1]
      %v229 = vld [vmem:[%s168 + $0xb0] sm:$0x1]
      %v230 = vld [vmem:[%s168 + $0xbc] sm:$0x1]
      %vm231 = vsmask.f32 3328
      %vm232 = vsmask.f32 7440
      %vm233 = vmor %vm231, %vm232
      %v235 = vshrl.u32 %v182, 16
      %v237 = vrot.slane %v235, 4
      %v238 = vshll.u32 %v182, 16
      %v240 = vrot.slane %v238, 5
      %v241 = vor.u32 %v237, %v240
      %v242 = vrot.slane %v241, 4
      %v244 = vshll.u32 %v183, 16
      %v246 = vrot.slane %v244, 5
      %v247 = vsel %vm233, %v242, %v246
      %v248 = vshrl.u32 %v183, 16
      %v250 = vrot.slane %v248, 4
      %v251 = vor.u32 %v250, %v246
      %v252 = vrot.slane %v251, 4
      %v254 = vshll.u32 %v215, 16
      %v256 = vrot.slane %v254, 5
      %v257 = vsel %vm233, %v252, %v256
      %v259 = vshrl.u32 %v184, 16
      %v261 = vrot.slane %v259, 4
      %v262 = vshll.u32 %v184, 16
      %v264 = vrot.slane %v262, 5
      %v265 = vor.u32 %v261, %v264
      %v266 = vrot.slane %v265, 4
      %v268 = vshll.u32 %v185, 16
      %v270 = vrot.slane %v268, 5
      %v271 = vsel %vm233, %v266, %v270
      %v272 = vshrl.u32 %v185, 16
      %v274 = vrot.slane %v272, 4
      %v275 = vor.u32 %v274, %v270
      %v276 = vrot.slane %v275, 4
      %v278 = vshll.u32 %v216, 16
      %v280 = vrot.slane %v278, 5
      %v281 = vsel %vm233, %v276, %v280
      %v283 = vshrl.u32 %v186, 16
      %v285 = vrot.slane %v283, 4
      %v286 = vshll.u32 %v186, 16
      %v288 = vrot.slane %v286, 5
      %v289 = vor.u32 %v285, %v288
      %v290 = vrot.slane %v289, 4
      %v292 = vshll.u32 %v187, 16
      %v294 = vrot.slane %v292, 5
      %v295 = vsel %vm233, %v290, %v294
      %v296 = vshrl.u32 %v187, 16
      %v298 = vrot.slane %v296, 4
      %v299 = vor.u32 %v298, %v294
      %v300 = vrot.slane %v299, 4
      %v302 = vshll.u32 %v217, 16
      %v304 = vrot.slane %v302, 5
      %v305 = vsel %vm233, %v300, %v304
      %v307 = vshrl.u32 %v188, 16
      %v309 = vrot.slane %v307, 4
      %v310 = vshll.u32 %v188, 16
      %v312 = vrot.slane %v310, 5
      %v313 = vor.u32 %v309, %v312
      %v314 = vrot.slane %v313, 4
      %v316 = vshll.u32 %v189, 16
      %v318 = vrot.slane %v316, 5
      %v319 = vsel %vm233, %v314, %v318
      %v320 = vshrl.u32 %v189, 16
      %v322 = vrot.slane %v320, 4
      %v323 = vor.u32 %v322, %v318
      %v324 = vrot.slane %v323, 4
      %v326 = vshll.u32 %v218, 16
      %v328 = vrot.slane %v326, 5
      %v329 = vsel %vm233, %v324, %v328
      %v331 = vshrl.u32 %v190, 16
      %v333 = vrot.slane %v331, 4
      %v334 = vshll.u32 %v190, 16
      %v336 = vrot.slane %v334, 5
      %v337 = vor.u32 %v333, %v336
      %v338 = vrot.slane %v337, 4
      %v340 = vshll.u32 %v191, 16
      %v342 = vrot.slane %v340, 5
      %v343 = vsel %vm233, %v338, %v342
      %v344 = vshrl.u32 %v191, 16
      %v346 = vrot.slane %v344, 4
      %v347 = vor.u32 %v346, %v342
      %v348 = vrot.slane %v347, 4
      %v350 = vshll.u32 %v219, 16
      %v352 = vrot.slane %v350, 5
      %v353 = vsel %vm233, %v348, %v352
      %v355 = vshrl.u32 %v192, 16
      %v357 = vrot.slane %v355, 4
      %v358 = vshll.u32 %v192, 16
      %v360 = vrot.slane %v358, 5
      %v361 = vor.u32 %v357, %v360
      %v362 = vrot.slane %v361, 4
      %v364 = vshll.u32 %v193, 16
      %v366 = vrot.slane %v364, 5
      %v367 = vsel %vm233, %v362, %v366
      %v368 = vshrl.u32 %v193, 16
      %v370 = vrot.slane %v368, 4
      %v371 = vor.u32 %v370, %v366
      %v372 = vrot.slane %v371, 4
      %v374 = vshll.u32 %v220, 16
      %v376 = vrot.slane %v374, 5
      %v377 = vsel %vm233, %v372, %v376
      %v379 = vshrl.u32 %v194, 16
      %v381 = vrot.slane %v379, 4
      %v382 = vshll.u32 %v194, 16
      %v384 = vrot.slane %v382, 5
      %v385 = vor.u32 %v381, %v384
      %v386 = vrot.slane %v385, 4
      %v388 = vshll.u32 %v195, 16
      %v390 = vrot.slane %v388, 5
      %v391 = vsel %vm233, %v386, %v390
      %v392 = vshrl.u32 %v195, 16
      %v394 = vrot.slane %v392, 4
      %v395 = vor.u32 %v394, %v390
      %v396 = vrot.slane %v395, 4
      %v398 = vshll.u32 %v221, 16
      %v400 = vrot.slane %v398, 5
      %v401 = vsel %vm233, %v396, %v400
      %v403 = vshrl.u32 %v196, 16
      %v405 = vrot.slane %v403, 4
      %v406 = vshll.u32 %v196, 16
      %v408 = vrot.slane %v406, 5
      %v409 = vor.u32 %v405, %v408
      %v410 = vrot.slane %v409, 4
      %v412 = vshll.u32 %v197, 16
      %v414 = vrot.slane %v412, 5
      %v415 = vsel %vm233, %v410, %v414
      %v416 = vshrl.u32 %v197, 16
      %v418 = vrot.slane %v416, 4
      %v419 = vor.u32 %v418, %v414
      %v420 = vrot.slane %v419, 4
      %v422 = vshll.u32 %v222, 16
      %v424 = vrot.slane %v422, 5
      %v425 = vsel %vm233, %v420, %v424
      %v427 = vshrl.u32 %v198, 16
      %v429 = vrot.slane %v427, 4
      %v430 = vshll.u32 %v198, 16
      %v432 = vrot.slane %v430, 5
      %v433 = vor.u32 %v429, %v432
      %v434 = vrot.slane %v433, 4
      %v436 = vshll.u32 %v199, 16
      %v438 = vrot.slane %v436, 5
      %v439 = vsel %vm233, %v434, %v438
      %v440 = vshrl.u32 %v199, 16
      %v442 = vrot.slane %v440, 4
      %v443 = vor.u32 %v442, %v438
      %v444 = vrot.slane %v443, 4
      %v446 = vshll.u32 %v223, 16
      %v448 = vrot.slane %v446, 5
      %v449 = vsel %vm233, %v444, %v448
      %v451 = vshrl.u32 %v200, 16
      %v453 = vrot.slane %v451, 4
      %v454 = vshll.u32 %v200, 16
      %v456 = vrot.slane %v454, 5
      %v457 = vor.u32 %v453, %v456
      %v458 = vrot.slane %v457, 4
      %v460 = vshll.u32 %v201, 16
      %v462 = vrot.slane %v460, 5
      %v463 = vsel %vm233, %v458, %v462
      %v464 = vshrl.u32 %v201, 16
      %v466 = vrot.slane %v464, 4
      %v467 = vor.u32 %v466, %v462
      %v468 = vrot.slane %v467, 4
      %v470 = vshll.u32 %v224, 16
      %v472 = vrot.slane %v470, 5
      %v473 = vsel %vm233, %v468, %v472
      %v475 = vshrl.u32 %v202, 16
      %v477 = vrot.slane %v475, 4
      %v478 = vshll.u32 %v202, 16
      %v480 = vrot.slane %v478, 5
      %v481 = vor.u32 %v477, %v480
      %v482 = vrot.slane %v481, 4
      %v484 = vshll.u32 %v203, 16
      %v486 = vrot.slane %v484, 5
      %v487 = vsel %vm233, %v482, %v486
      %v488 = vshrl.u32 %v203, 16
      %v490 = vrot.slane %v488, 4
      %v491 = vor.u32 %v490, %v486
      %v492 = vrot.slane %v491, 4
      %v494 = vshll.u32 %v225, 16
      %v496 = vrot.slane %v494, 5
      %v497 = vsel %vm233, %v492, %v496
      %v499 = vshrl.u32 %v204, 16
      %v501 = vrot.slane %v499, 4
      %v502 = vshll.u32 %v204, 16
      %v504 = vrot.slane %v502, 5
      %v505 = vor.u32 %v501, %v504
      %v506 = vrot.slane %v505, 4
      %v508 = vshll.u32 %v205, 16
      %v510 = vrot.slane %v508, 5
      %v511 = vsel %vm233, %v506, %v510
      %v512 = vshrl.u32 %v205, 16
      %v514 = vrot.slane %v512, 4
      %v515 = vor.u32 %v514, %v510
      %v516 = vrot.slane %v515, 4
      %v518 = vshll.u32 %v226, 16
      %v520 = vrot.slane %v518, 5
      %v521 = vsel %vm233, %v516, %v520
      %v523 = vshrl.u32 %v206, 16
      %v525 = vrot.slane %v523, 4
      %v526 = vshll.u32 %v206, 16
      %v528 = vrot.slane %v526, 5
      %v529 = vor.u32 %v525, %v528
      %v530 = vrot.slane %v529, 4
      %v532 = vshll.u32 %v207, 16
      %v534 = vrot.slane %v532, 5
      %v535 = vsel %vm233, %v530, %v534
      %v536 = vshrl.u32 %v207, 16
      %v538 = vrot.slane %v536, 4
      %v539 = vor.u32 %v538, %v534
      %v540 = vrot.slane %v539, 4
      %v542 = vshll.u32 %v227, 16
      %v544 = vrot.slane %v542, 5
      %v545 = vsel %vm233, %v540, %v544
      %v547 = vshrl.u32 %v208, 16
      %v549 = vrot.slane %v547, 4
      %v550 = vshll.u32 %v208, 16
      %v552 = vrot.slane %v550, 5
      %v553 = vor.u32 %v549, %v552
      %v554 = vrot.slane %v553, 4
      %v556 = vshll.u32 %v209, 16
      %v558 = vrot.slane %v556, 5
      %v559 = vsel %vm233, %v554, %v558
      %v560 = vshrl.u32 %v209, 16
      %v562 = vrot.slane %v560, 4
      %v563 = vor.u32 %v562, %v558
      %v564 = vrot.slane %v563, 4
      %v566 = vshll.u32 %v228, 16
      %v568 = vrot.slane %v566, 5
      %v569 = vsel %vm233, %v564, %v568
      %v571 = vshrl.u32 %v210, 16
      %v573 = vrot.slane %v571, 4
      %v574 = vshll.u32 %v210, 16
      %v576 = vrot.slane %v574, 5
      %v577 = vor.u32 %v573, %v576
      %v578 = vrot.slane %v577, 4
      %v580 = vshll.u32 %v211, 16
      %v582 = vrot.slane %v580, 5
      %v583 = vsel %vm233, %v578, %v582
      %v584 = vshrl.u32 %v211, 16
      %v586 = vrot.slane %v584, 4
      %v587 = vor.u32 %v586, %v582
      %v588 = vrot.slane %v587, 4
      %v590 = vshll.u32 %v229, 16
      %v592 = vrot.slane %v590, 5
      %v593 = vsel %vm233, %v588, %v592
      %v595 = vshrl.u32 %v212, 16
      %v597 = vrot.slane %v595, 4
      %v598 = vshll.u32 %v212, 16
      %v600 = vrot.slane %v598, 5
      %v601 = vor.u32 %v597, %v600
      %v602 = vrot.slane %v601, 4
      %v604 = vshll.u32 %v213, 16
      %v606 = vrot.slane %v604, 5
      %v607 = vsel %vm233, %v602, %v606
      %v608 = vshrl.u32 %v213, 16
      %v610 = vrot.slane %v608, 4
      %v611 = vor.u32 %v610, %v606
      %v612 = vrot.slane %v611, 4
      %v614 = vshll.u32 %v230, 16
      %v616 = vrot.slane %v614, 5
      %v617 = vsel %vm233, %v612, %v616
      %s618 = scalar_lea.vmem %s172, 2
      %v619 = vld [vmem:[%s618] sm:$0x3]
      %v620 = vunpack.c.l.b16 %v247
      %v621 = vunpack.c.l.b16 %v257
      %v622 = vunpack.c.l.b16 %v271
      %v623 = vunpack.c.l.b16 %v281
      %v624 = vunpack.c.l.b16 %v295
      %v625 = vunpack.c.l.b16 %v305
      %v626 = vunpack.c.l.b16 %v319
      %v627 = vunpack.c.l.b16 %v329
      %v628 = vunpack.c.l.b16 %v343
      %v629 = vunpack.c.l.b16 %v353
      %v630 = vunpack.c.l.b16 %v367
      %v631 = vunpack.c.l.b16 %v377
      %v632 = vunpack.c.l.b16 %v391
      %v633 = vunpack.c.l.b16 %v401
      %v634 = vunpack.c.l.b16 %v415
      %v635 = vunpack.c.l.b16 %v425
      %v636 = vunpack.c.l.b16 %v439
      %v637 = vunpack.c.l.b16 %v449
      %v638 = vunpack.c.l.b16 %v463
      %v639 = vunpack.c.l.b16 %v473
      %v640 = vunpack.c.l.b16 %v487
      %v641 = vunpack.c.l.b16 %v497
      %v642 = vunpack.c.l.b16 %v511
      %v643 = vunpack.c.l.b16 %v521
      %v644 = vunpack.c.l.b16 %v535
      %v645 = vunpack.c.l.b16 %v545
      %v646 = vunpack.c.l.b16 %v559
      %v647 = vunpack.c.l.b16 %v569
      %v648 = vunpack.c.l.b16 %v583
      %v649 = vunpack.c.l.b16 %v593
      %v650 = vunpack.c.l.b16 %v607
      %v651 = vunpack.c.l.b16 %v617
      %v652 = vpack.c.b16 %v621, %v620
      %v653 = vpack.c.b16 %v623, %v622
      %v654 = vpack.c.b16 %v625, %v624
      %v655 = vpack.c.b16 %v627, %v626
      %v656 = vpack.c.b16 %v629, %v628
      %v657 = vpack.c.b16 %v631, %v630
      %v658 = vpack.c.b16 %v633, %v632
      %v659 = vpack.c.b16 %v635, %v634
      %v660 = vpack.c.b16 %v637, %v636
      %v661 = vpack.c.b16 %v639, %v638
      %v662 = vpack.c.b16 %v641, %v640
      %v663 = vpack.c.b16 %v643, %v642
      %v664 = vpack.c.b16 %v645, %v644
      %v665 = vpack.c.b16 %v647, %v646
      %v666 = vpack.c.b16 %v649, %v648
      %v667 = vpack.c.b16 %v651, %v650
      %vm668 = vcmask 31744
      %v670 = vsel %vm668, %v652, 0
      %v673 = vsel %vm668, %v653, 0
      %v676 = vsel %vm668, %v654, 0
      %v679 = vsel %vm668, %v655, 0
      %v682 = vsel %vm668, %v656, 0
      %v685 = vsel %vm668, %v657, 0
      %v688 = vsel %vm668, %v658, 0
      %v691 = vsel %vm668, %v659, 0
      %v694 = vsel %vm668, %v660, 0
      %v697 = vsel %vm668, %v661, 0
      %v700 = vsel %vm668, %v662, 0
      %v703 = vsel %vm668, %v663, 0
      %v706 = vsel %vm668, %v664, 0
      %v709 = vsel %vm668, %v665, 0
      %v712 = vsel %vm668, %v666, 0
      %v715 = vsel %vm668, %v667, 0
      %vm717 = vcmask 1041408
      %v719 = vsel %vm717, %v619, 0
      %721 = vmatprep.subr.bf16.mxu0 0
      %722 = vmatpush1.bf16.msra.mxu0 %v719
      %723 = vmatprep.subr.bf16.mxu0 0
      %724 = vmatpush1.bf16.msra.mxu0 0
      %725 = vmatprep.subr.bf16.mxu0 0
      %726 = vmatpush1.bf16.msra.mxu0 0
      %727 = vmatprep.subr.bf16.mxu0 0
      %728 = vmatpush1.bf16.msra.mxu0 0
      %729 = vmatprep.subr.bf16.mxu0 0
      %730 = vmatpush1.bf16.msra.mxu0 0
      %731 = vmatprep.subr.bf16.mxu0 0
      %732 = vmatpush1.bf16.msra.mxu0 0
      %733 = vmatprep.subr.bf16.mxu0 0
      %734 = vmatpush1.bf16.msra.mxu0 0
      %735 = vmatprep.subr.bf16.mxu0 0
      %736 = vmatpush1.bf16.msra.mxu0 0
      %737 = vmatprep.subr.bf16.mxu0 0
      %738 = vmatpush1.bf16.msra.mxu0 0
      %739 = vmatprep.subr.bf16.mxu0 0
      %740 = vmatpush1.bf16.msra.mxu0 0
      %741 = vmatprep.subr.bf16.mxu0 0
      %742 = vmatpush1.bf16.msra.mxu0 0
      %743 = vmatprep.subr.bf16.mxu0 0
      %744 = vmatpush1.bf16.msra.mxu0 0
      %745 = vmatprep.subr.bf16.mxu0 0
      %746 = vmatpush1.bf16.msra.mxu0 0
      %747 = vmatprep.subr.bf16.mxu0 0
      %748 = vmatpush1.bf16.msra.mxu0 0
      %749 = vmatprep.subr.bf16.mxu0 0
      %750 = vmatpush1.bf16.msra.mxu0 0
      %751 = vmatprep.subr.bf16.mxu0 0
      %752 = vmatpush1.bf16.msra.mxu0 0
      %753 = vmatprep.mubr.bf16.mxu0 0
      %754 = vmatmul.mubr.bf16.gmra.mrb[0].mxu0 %v670
      %v755 = vpop.f32.mrb[0].mxu0
      %v756 = vadd.f32 0.0, %v755
      %v757 = vpop.f32.mrb[0].mxu0
      %v758 = vpop.f32.mrb[0].mxu0
      %v759 = vadd.f32 0.0, %v758
      %v760 = vpop.f32.mrb[0].mxu0
      %761 = vmatprep.mubr.bf16.mxu0 0
      %762 = vmatmul.mubr.bf16.gmra.mrb[0].mxu0 %v673
      %v763 = vpop.f32.mrb[0].mxu0
      %v764 = vadd.f32 0.0, %v763
      %v765 = vpop.f32.mrb[0].mxu0
      %v766 = vpop.f32.mrb[0].mxu0
      %v767 = vadd.f32 0.0, %v766
      %v768 = vpop.f32.mrb[0].mxu0
      %769 = vmatprep.mubr.bf16.mxu0 0
      %770 = vmatmul.mubr.bf16.gmra.mrb[0].mxu0 %v676
      %v771 = vpop.f32.mrb[0].mxu0
      %v772 = vadd.f32 0.0, %v771
      %v773 = vpop.f32.mrb[0].mxu0
      %v774 = vpop.f32.mrb[0].mxu0
      %v775 = vadd.f32 0.0, %v774
      %v776 = vpop.f32.mrb[0].mxu0
      %777 = vmatprep.mubr.bf16.mxu0 0
      %778 = vmatmul.mubr.bf16.gmra.mrb[0].mxu0 %v679
      %v779 = vpop.f32.mrb[0].mxu0
      %v780 = vadd.f32 0.0, %v779
      %v781 = vpop.f32.mrb[0].mxu0
      %v782 = vpop.f32.mrb[0].mxu0
      %v783 = vadd.f32 0.0, %v782
      %v784 = vpop.f32.mrb[0].mxu0
      %785 = vmatprep.mubr.bf16.mxu0 0
      %786 = vmatmul.mubr.bf16.gmra.mrb[0].mxu0 %v682
      %v787 = vpop.f32.mrb[0].mxu0
      %v788 = vadd.f32 0.0, %v787
      %v789 = vpop.f32.mrb[0].mxu0
      %v790 = vpop.f32.mrb[0].mxu0
      %v791 = vadd.f32 0.0, %v790
      %v792 = vpop.f32.mrb[0].mxu0
      %793 = vmatprep.mubr.bf16.mxu0 0
      %794 = vmatmul.mubr.bf16.gmra.mrb[0].mxu0 %v685
      %v795 = vpop.f32.mrb[0].mxu0
      %v796 = vadd.f32 0.0, %v795
      %v797 = vpop.f32.mrb[0].mxu0
      %v798 = vpop.f32.mrb[0].mxu0
      %v799 = vadd.f32 0.0, %v798
      %v800 = vpop.f32.mrb[0].mxu0
      %801 = vmatprep.mubr.bf16.mxu0 0
      %802 = vmatmul.mubr.bf16.gmra.mrb[0].mxu0 %v688
      %v803 = vpop.f32.mrb[0].mxu0
      %v804 = vadd.f32 0.0, %v803
      %v805 = vpop.f32.mrb[0].mxu0
      %v806 = vpop.f32.mrb[0].mxu0
      %v807 = vadd.f32 0.0, %v806
      %v808 = vpop.f32.mrb[0].mxu0
      %809 = vmatprep.mubr.bf16.mxu0 0
      %810 = vmatmul.mubr.bf16.gmra.mrb[0].mxu0 %v691
      %v811 = vpop.f32.mrb[0].mxu0
      %v812 = vadd.f32 0.0, %v811
      %v813 = vpop.f32.mrb[0].mxu0
      %v814 = vpop.f32.mrb[0].mxu0
      %v815 = vadd.f32 0.0, %v814
      %v816 = vpop.f32.mrb[0].mxu0
      %817 = vmatprep.mubr.bf16.mxu0 0
      %818 = vmatmul.mubr.bf16.gmra.mrb[0].mxu0 %v694
      %v819 = vpop.f32.mrb[0].mxu0
      %v820 = vadd.f32 0.0, %v819
      %v821 = vpop.f32.mrb[0].mxu0
      %v822 = vpop.f32.mrb[0].mxu0
      %v823 = vadd.f32 0.0, %v822
      %v824 = vpop.f32.mrb[0].mxu0
      %825 = vmatprep.mubr.bf16.mxu0 0
      %826 = vmatmul.mubr.bf16.gmra.mrb[0].mxu0 %v697
      %v827 = vpop.f32.mrb[0].mxu0
      %v828 = vadd.f32 0.0, %v827
      %v829 = vpop.f32.mrb[0].mxu0
      %v830 = vpop.f32.mrb[0].mxu0
      %v831 = vadd.f32 0.0, %v830
      %v832 = vpop.f32.mrb[0].mxu0
      %833 = vmatprep.mubr.bf16.mxu0 0
      %834 = vmatmul.mubr.bf16.gmra.mrb[0].mxu0 %v700
      %v835 = vpop.f32.mrb[0].mxu0
      %v836 = vadd.f32 0.0, %v835
      %v837 = vpop.f32.mrb[0].mxu0
      %v838 = vpop.f32.mrb[0].mxu0
      %v839 = vadd.f32 0.0, %v838
      %v840 = vpop.f32.mrb[0].mxu0
      %841 = vmatprep.mubr.bf16.mxu0 0
      %842 = vmatmul.mubr.bf16.gmra.mrb[0].mxu0 %v703
      %v843 = vpop.f32.mrb[0].mxu0
      %v844 = vadd.f32 0.0, %v843
      %v845 = vpop.f32.mrb[0].mxu0
      %v846 = vpop.f32.mrb[0].mxu0
      %v847 = vadd.f32 0.0, %v846
      %v848 = vpop.f32.mrb[0].mxu0
      %849 = vmatprep.mubr.bf16.mxu0 0
      %850 = vmatmul.mubr.bf16.gmra.mrb[0].mxu0 %v706
      %v851 = vpop.f32.mrb[0].mxu0
      %v852 = vadd.f32 0.0, %v851
      %v853 = vpop.f32.mrb[0].mxu0
      %v854 = vpop.f32.mrb[0].mxu0
      %v855 = vadd.f32 0.0, %v854
      %v856 = vpop.f32.mrb[0].mxu0
      %857 = vmatprep.mubr.bf16.mxu0 0
      %858 = vmatmul.mubr.bf16.gmra.mrb[0].mxu0 %v709
      %v859 = vpop.f32.mrb[0].mxu0
      %v860 = vadd.f32 0.0, %v859
      %v861 = vpop.f32.mrb[0].mxu0
      %v862 = vpop.f32.mrb[0].mxu0
      %v863 = vadd.f32 0.0, %v862
      %v864 = vpop.f32.mrb[0].mxu0
      %865 = vmatprep.mubr.bf16.mxu0 0
      %866 = vmatmul.mubr.bf16.gmra.mrb[0].mxu0 %v712
      %v867 = vpop.f32.mrb[0].mxu0
      %v868 = vadd.f32 0.0, %v867
      %v869 = vpop.f32.mrb[0].mxu0
      %v870 = vpop.f32.mrb[0].mxu0
      %v871 = vadd.f32 0.0, %v870
      %v872 = vpop.f32.mrb[0].mxu0
      %873 = vmatprep.mubr.bf16.mxu0 0
      %874 = vmatmul.mubr.bf16.gmra.mrb[0].mxu0 %v715
      %v875 = vpop.f32.mrb[0].mxu0
      %v876 = vadd.f32 0.0, %v875
      %v877 = vpop.f32.mrb[0].mxu0
      %v878 = vpop.f32.mrb[0].mxu0
      %v879 = vadd.f32 0.0, %v878
      %v880 = vpop.f32.mrb[0].mxu0
      %881 = vdwg.mxu0
      %v914 = vunpack.c.l.b16 %v182
      %v915 = vunpack.c.l.b16 %v183
      %v916 = vunpack.c.l.b16 %v184
      %v917 = vunpack.c.l.b16 %v185
      %v918 = vunpack.c.l.b16 %v186
      %v919 = vunpack.c.l.b16 %v187
      %v920 = vunpack.c.l.b16 %v188
      %v921 = vunpack.c.l.b16 %v189
      %v922 = vunpack.c.l.b16 %v190
      %v923 = vunpack.c.l.b16 %v191
      %v924 = vunpack.c.l.b16 %v192
      %v925 = vunpack.c.l.b16 %v193
      %v926 = vunpack.c.l.b16 %v194
      %v927 = vunpack.c.l.b16 %v195
      %v928 = vunpack.c.l.b16 %v196
      %v929 = vunpack.c.l.b16 %v197
      %v930 = vunpack.c.l.b16 %v198
      %v931 = vunpack.c.l.b16 %v199
      %v932 = vunpack.c.l.b16 %v200
      %v933 = vunpack.c.l.b16 %v201
      %v934 = vunpack.c.l.b16 %v202
      %v935 = vunpack.c.l.b16 %v203
      %v936 = vunpack.c.l.b16 %v204
      %v937 = vunpack.c.l.b16 %v205
      %v938 = vunpack.c.l.b16 %v206
      %v939 = vunpack.c.l.b16 %v207
      %v940 = vunpack.c.l.b16 %v208
      %v941 = vunpack.c.l.b16 %v209
      %v942 = vunpack.c.l.b16 %v210
      %v943 = vunpack.c.l.b16 %v211
      %v944 = vunpack.c.l.b16 %v212
      %v945 = vunpack.c.l.b16 %v213
      %v946 = vpack.c.b16 %v915, %v914
      %v947 = vpack.c.b16 %v917, %v916
      %v948 = vpack.c.b16 %v919, %v918
      %v949 = vpack.c.b16 %v921, %v920
      %v950 = vpack.c.b16 %v923, %v922
      %v951 = vpack.c.b16 %v925, %v924
      %v952 = vpack.c.b16 %v927, %v926
      %v953 = vpack.c.b16 %v929, %v928
      %v954 = vpack.c.b16 %v931, %v930
      %v955 = vpack.c.b16 %v933, %v932
      %v956 = vpack.c.b16 %v935, %v934
      %v957 = vpack.c.b16 %v937, %v936
      %v958 = vpack.c.b16 %v939, %v938
      %v959 = vpack.c.b16 %v941, %v940
      %v960 = vpack.c.b16 %v943, %v942
      %v961 = vpack.c.b16 %v945, %v944
      %v963 = vsel %vm668, %v946, 0
      %v966 = vsel %vm668, %v947, 0
      %v969 = vsel %vm668, %v948, 0
      %v972 = vsel %vm668, %v949, 0
      %v975 = vsel %vm668, %v950, 0
      %v978 = vsel %vm668, %v951, 0
      %v981 = vsel %vm668, %v952, 0
      %v984 = vsel %vm668, %v953, 0
      %v987 = vsel %vm668, %v954, 0
      %v990 = vsel %vm668, %v955, 0
      %v993 = vsel %vm668, %v956, 0
      %v996 = vsel %vm668, %v957, 0
      %v999 = vsel %vm668, %v958, 0
      %v1002 = vsel %vm668, %v959, 0
      %v1005 = vsel %vm668, %v960, 0
      %v1008 = vsel %vm668, %v961, 0
      %v1011 = vsel %vm717, %v214, 0
      %1013 = vmatprep.subr.bf16.mxu0 0
      %1014 = vmatpush1.bf16.msra.mxu0 %v1011
      %1015 = vmatprep.subr.bf16.mxu0 0
      %1016 = vmatpush1.bf16.msra.mxu0 0
      %1017 = vmatprep.subr.bf16.mxu0 0
      %1018 = vmatpush1.bf16.msra.mxu0 0
      %1019 = vmatprep.subr.bf16.mxu0 0
      %1020 = vmatpush1.bf16.msra.mxu0 0
      %1021 = vmatprep.subr.bf16.mxu0 0
      %1022 = vmatpush1.bf16.msra.mxu0 0
      %1023 = vmatprep.subr.bf16.mxu0 0
      %1024 = vmatpush1.bf16.msra.mxu0 0
      %1025 = vmatprep.subr.bf16.mxu0 0
      %1026 = vmatpush1.bf16.msra.mxu0 0
      %1027 = vmatprep.subr.bf16.mxu0 0
      %1028 = vmatpush1.bf16.msra.mxu0 0
      %1029 = vmatprep.subr.bf16.mxu0 0
      %1030 = vmatpush1.bf16.msra.mxu0 0
      %1031 = vmatprep.subr.bf16.mxu0 0
      %1032 = vmatpush1.bf16.msra.mxu0 0
      %1033 = vmatprep.subr.bf16.mxu0 0
      %1034 = vmatpush1.bf16.msra.mxu0 0
      %1035 = vmatprep.subr.bf16.mxu0 0
      %1036 = vmatpush1.bf16.msra.mxu0 0
      %1037 = vmatprep.subr.bf16.mxu0 0
      %1038 = vmatpush1.bf16.msra.mxu0 0
      %1039 = vmatprep.subr.bf16.mxu0 0
      %1040 = vmatpush1.bf16.msra.mxu0 0
      %1041 = vmatprep.subr.bf16.mxu0 0
      %1042 = vmatpush1.bf16.msra.mxu0 0
      %1043 = vmatprep.subr.bf16.mxu0 0
      %1044 = vmatpush1.bf16.msra.mxu0 0
      %1045 = vmatprep.mubr.bf16.mxu0 0
      %1046 = vmatmul.mubr.bf16.gmra.mrb[0].mxu0 %v963
      %v1047 = vpop.f32.mrb[0].mxu0
      %v1048 = vadd.f32 %v756, %v1047
      %v1049 = vpop.f32.mrb[0].mxu0
      %v1050 = vpop.f32.mrb[0].mxu0
      %v1051 = vadd.f32 %v759, %v1050
      %v1052 = vpop.f32.mrb[0].mxu0
      %1053 = vmatprep.mubr.bf16.mxu0 0
      %1054 = vmatmul.mubr.bf16.gmra.mrb[0].mxu0 %v966
      %v1055 = vpop.f32.mrb[0].mxu0
      %v1056 = vadd.f32 %v764, %v1055
      %v1057 = vpop.f32.mrb[0].mxu0
      %v1058 = vpop.f32.mrb[0].mxu0
      %v1059 = vadd.f32 %v767, %v1058
      %v1060 = vpop.f32.mrb[0].mxu0
      %1061 = vmatprep.mubr.bf16.mxu0 0
      %1062 = vmatmul.mubr.bf16.gmra.mrb[0].mxu0 %v969
      %v1063 = vpop.f32.mrb[0].mxu0
      %v1064 = vadd.f32 %v772, %v1063
      %v1065 = vpop.f32.mrb[0].mxu0
      %v1066 = vpop.f32.mrb[0].mxu0
      %v1067 = vadd.f32 %v775, %v1066
      %v1068 = vpop.f32.mrb[0].mxu0
      %1069 = vmatprep.mubr.bf16.mxu0 0
      %1070 = vmatmul.mubr.bf16.gmra.mrb[0].mxu0 %v972
      %v1071 = vpop.f32.mrb[0].mxu0
      %v1072 = vadd.f32 %v780, %v1071
      %v1073 = vpop.f32.mrb[0].mxu0
      %v1074 = vpop.f32.mrb[0].mxu0
      %v1075 = vadd.f32 %v783, %v1074
      %v1076 = vpop.f32.mrb[0].mxu0
      %1077 = vmatprep.mubr.bf16.mxu0 0
      %1078 = vmatmul.mubr.bf16.gmra.mrb[0].mxu0 %v975
      %v1079 = vpop.f32.mrb[0].mxu0
      %v1080 = vadd.f32 %v788, %v1079
      %v1081 = vpop.f32.mrb[0].mxu0
      %v1082 = vpop.f32.mrb[0].mxu0
      %v1083 = vadd.f32 %v791, %v1082
      %v1084 = vpop.f32.mrb[0].mxu0
      %1085 = vmatprep.mubr.bf16.mxu0 0
      %1086 = vmatmul.mubr.bf16.gmra.mrb[0].mxu0 %v978
      %v1087 = vpop.f32.mrb[0].mxu0
      %v1088 = vadd.f32 %v796, %v1087
      %v1089 = vpop.f32.mrb[0].mxu0
      %v1090 = vpop.f32.mrb[0].mxu0
      %v1091 = vadd.f32 %v799, %v1090
      %v1092 = vpop.f32.mrb[0].mxu0
      %1093 = vmatprep.mubr.bf16.mxu0 0
      %1094 = vmatmul.mubr.bf16.gmra.mrb[0].mxu0 %v981
      %v1095 = vpop.f32.mrb[0].mxu0
      %v1096 = vadd.f32 %v804, %v1095
      %v1097 = vpop.f32.mrb[0].mxu0
      %v1098 = vpop.f32.mrb[0].mxu0
      %v1099 = vadd.f32 %v807, %v1098
      %v1100 = vpop.f32.mrb[0].mxu0
      %1101 = vmatprep.mubr.bf16.mxu0 0
      %1102 = vmatmul.mubr.bf16.gmra.mrb[0].mxu0 %v984
      %v1103 = vpop.f32.mrb[0].mxu0
      %v1104 = vadd.f32 %v812, %v1103
      %v1105 = vpop.f32.mrb[0].mxu0
      %v1106 = vpop.f32.mrb[0].mxu0
      %v1107 = vadd.f32 %v815, %v1106
      %v1108 = vpop.f32.mrb[0].mxu0
      %1109 = vmatprep.mubr.bf16.mxu0 0
      %1110 = vmatmul.mubr.bf16.gmra.mrb[0].mxu0 %v987
      %v1111 = vpop.f32.mrb[0].mxu0
      %v1112 = vadd.f32 %v820, %v1111
      %v1113 = vpop.f32.mrb[0].mxu0
      %v1114 = vpop.f32.mrb[0].mxu0
      %v1115 = vadd.f32 %v823, %v1114
      %v1116 = vpop.f32.mrb[0].mxu0
      %1117 = vmatprep.mubr.bf16.mxu0 0
      %1118 = vmatmul.mubr.bf16.gmra.mrb[0].mxu0 %v990
      %v1119 = vpop.f32.mrb[0].mxu0
      %v1120 = vadd.f32 %v828, %v1119
      %v1121 = vpop.f32.mrb[0].mxu0
      %v1122 = vpop.f32.mrb[0].mxu0
      %v1123 = vadd.f32 %v831, %v1122
      %v1124 = vpop.f32.mrb[0].mxu0
      %1125 = vmatprep.mubr.bf16.mxu0 0
      %1126 = vmatmul.mubr.bf16.gmra.mrb[0].mxu0 %v993
      %v1127 = vpop.f32.mrb[0].mxu0
      %v1128 = vadd.f32 %v836, %v1127
      %v1129 = vpop.f32.mrb[0].mxu0
      %v1130 = vpop.f32.mrb[0].mxu0
      %v1131 = vadd.f32 %v839, %v1130
      %v1132 = vpop.f32.mrb[0].mxu0
      %1133 = vmatprep.mubr.bf16.mxu0 0
      %1134 = vmatmul.mubr.bf16.gmra.mrb[0].mxu0 %v996
      %v1135 = vpop.f32.mrb[0].mxu0
      %v1136 = vadd.f32 %v844, %v1135
      %v1137 = vpop.f32.mrb[0].mxu0
      %v1138 = vpop.f32.mrb[0].mxu0
      %v1139 = vadd.f32 %v847, %v1138
      %v1140 = vpop.f32.mrb[0].mxu0
      %1141 = vmatprep.mubr.bf16.mxu0 0
      %1142 = vmatmul.mubr.bf16.gmra.mrb[0].mxu0 %v999
      %v1143 = vpop.f32.mrb[0].mxu0
      %v1144 = vadd.f32 %v852, %v1143
      %v1145 = vpop.f32.mrb[0].mxu0
      %v1146 = vpop.f32.mrb[0].mxu0
      %v1147 = vadd.f32 %v855, %v1146
      %v1148 = vpop.f32.mrb[0].mxu0
      %1149 = vmatprep.mubr.bf16.mxu0 0
      %1150 = vmatmul.mubr.bf16.gmra.mrb[0].mxu0 %v1002
      %v1151 = vpop.f32.mrb[0].mxu0
      %v1152 = vadd.f32 %v860, %v1151
      %v1153 = vpop.f32.mrb[0].mxu0
      %v1154 = vpop.f32.mrb[0].mxu0
      %v1155 = vadd.f32 %v863, %v1154
      %v1156 = vpop.f32.mrb[0].mxu0
      %1157 = vmatprep.mubr.bf16.mxu0 0
      %1158 = vmatmul.mubr.bf16.gmra.mrb[0].mxu0 %v1005
      %v1159 = vpop.f32.mrb[0].mxu0
      %v1160 = vadd.f32 %v868, %v1159
      %v1161 = vpop.f32.mrb[0].mxu0
      %v1162 = vpop.f32.mrb[0].mxu0
      %v1163 = vadd.f32 %v871, %v1162
      %v1164 = vpop.f32.mrb[0].mxu0
      %1165 = vmatprep.mubr.bf16.mxu0 0
      %1166 = vmatmul.mubr.bf16.gmra.mrb[0].mxu0 %v1008
      %v1167 = vpop.f32.mrb[0].mxu0
      %v1168 = vadd.f32 %v876, %v1167
      %v1169 = vpop.f32.mrb[0].mxu0
      %v1170 = vpop.f32.mrb[0].mxu0
      %v1171 = vadd.f32 %v879, %v1170
      %v1172 = vpop.f32.mrb[0].mxu0
      %1173 = vdwg.mxu0
      %v1174 = vld [vmem:[%s168] sm:$0xe]
      %v1175 = vld [vmem:[%s168 + $0xc] sm:$0xe]
      %v1176 = vld [vmem:[%s168 + $0x18] sm:$0xe]
      %v1177 = vld [vmem:[%s168 + $0x24] sm:$0xe]
      %v1178 = vld [vmem:[%s168 + $0x30] sm:$0xe]
      %v1179 = vld [vmem:[%s168 + $0x3c] sm:$0xe]
      %v1180 = vld [vmem:[%s168 + $0x48] sm:$0xe]
      %v1181 = vld [vmem:[%s168 + $0x54] sm:$0xe]
      %v1182 = vld [vmem:[%s168 + $0x60] sm:$0xe]
      %v1183 = vld [vmem:[%s168 + $0x6c] sm:$0xe]
      %v1184 = vld [vmem:[%s168 + $0x78] sm:$0xe]
      %v1185 = vld [vmem:[%s168 + $0x84] sm:$0xe]
      %v1186 = vld [vmem:[%s168 + $0x90] sm:$0xe]
      %v1187 = vld [vmem:[%s168 + $0x9c] sm:$0xe]
      %v1188 = vld [vmem:[%s168 + $0xa8] sm:$0xe]
      %v1189 = vld [vmem:[%s168 + $0xb4] sm:$0xe]
      %vm1222 = vcmask 1042432
      %vm1223 = vcmask 1046532
      %vm1224 = vmor %vm1222, %vm1223
      %v1225 = vrot.slane %v1174, 5
      %v1226 = vrot.slane %v1225, 4
      %v1227 = vrot.slane %v183, 5
      %v1228 = vsel %vm1224, %v1226, %v1227
      %v1229 = vrot.slane %v1227, 4
      %v1230 = vrot.slane %v215, 5
      %v1231 = vsel %vm1224, %v1229, %v1230
      %v1232 = vrot.slane %v1175, 5
      %v1233 = vrot.slane %v1232, 4
      %v1234 = vrot.slane %v185, 5
      %v1235 = vsel %vm1224, %v1233, %v1234
      %v1236 = vrot.slane %v1234, 4
      %v1237 = vrot.slane %v216, 5
      %v1238 = vsel %vm1224, %v1236, %v1237
      %v1239 = vrot.slane %v1176, 5
      %v1240 = vrot.slane %v1239, 4
      %v1241 = vrot.slane %v187, 5
      %v1242 = vsel %vm1224, %v1240, %v1241
      %v1243 = vrot.slane %v1241, 4
      %v1244 = vrot.slane %v217, 5
      %v1245 = vsel %vm1224, %v1243, %v1244
      %v1246 = vrot.slane %v1177, 5
      %v1247 = vrot.slane %v1246, 4
      %v1248 = vrot.slane %v189, 5
      %v1249 = vsel %vm1224, %v1247, %v1248
      %v1250 = vrot.slane %v1248, 4
      %v1251 = vrot.slane %v218, 5
      %v1252 = vsel %vm1224, %v1250, %v1251
      %v1253 = vrot.slane %v1178, 5
      %v1254 = vrot.slane %v1253, 4
      %v1255 = vrot.slane %v191, 5
      %v1256 = vsel %vm1224, %v1254, %v1255
      %v1257 = vrot.slane %v1255, 4
      %v1258 = vrot.slane %v219, 5
      %v1259 = vsel %vm1224, %v1257, %v1258
      %v1260 = vrot.slane %v1179, 5
      %v1261 = vrot.slane %v1260, 4
      %v1262 = vrot.slane %v193, 5
      %v1263 = vsel %vm1224, %v1261, %v1262
      %v1264 = vrot.slane %v1262, 4
      %v1265 = vrot.slane %v220, 5
      %v1266 = vsel %vm1224, %v1264, %v1265
      %v1267 = vrot.slane %v1180, 5
      %v1268 = vrot.slane %v1267, 4
      %v1269 = vrot.slane %v195, 5
      %v1270 = vsel %vm1224, %v1268, %v1269
      %v1271 = vrot.slane %v1269, 4
      %v1272 = vrot.slane %v221, 5
      %v1273 = vsel %vm1224, %v1271, %v1272
      %v1274 = vrot.slane %v1181, 5
      %v1275 = vrot.slane %v1274, 4
      %v1276 = vrot.slane %v197, 5
      %v1277 = vsel %vm1224, %v1275, %v1276
      %v1278 = vrot.slane %v1276, 4
      %v1279 = vrot.slane %v222, 5
      %v1280 = vsel %vm1224, %v1278, %v1279
      %v1281 = vrot.slane %v1182, 5
      %v1282 = vrot.slane %v1281, 4
      %v1283 = vrot.slane %v199, 5
      %v1284 = vsel %vm1224, %v1282, %v1283
      %v1285 = vrot.slane %v1283, 4
      %v1286 = vrot.slane %v223, 5
      %v1287 = vsel %vm1224, %v1285, %v1286
      %v1288 = vrot.slane %v1183, 5
      %v1289 = vrot.slane %v1288, 4
      %v1290 = vrot.slane %v201, 5
      %v1291 = vsel %vm1224, %v1289, %v1290
      %v1292 = vrot.slane %v1290, 4
      %v1293 = vrot.slane %v224, 5
      %v1294 = vsel %vm1224, %v1292, %v1293
      %v1295 = vrot.slane %v1184, 5
      %v1296 = vrot.slane %v1295, 4
      %v1297 = vrot.slane %v203, 5
      %v1298 = vsel %vm1224, %v1296, %v1297
      %v1299 = vrot.slane %v1297, 4
      %v1300 = vrot.slane %v225, 5
      %v1301 = vsel %vm1224, %v1299, %v1300
      %v1302 = vrot.slane %v1185, 5
      %v1303 = vrot.slane %v1302, 4
      %v1304 = vrot.slane %v205, 5
      %v1305 = vsel %vm1224, %v1303, %v1304
      %v1306 = vrot.slane %v1304, 4
      %v1307 = vrot.slane %v226, 5
      %v1308 = vsel %vm1224, %v1306, %v1307
      %v1309 = vrot.slane %v1186, 5
      %v1310 = vrot.slane %v1309, 4
      %v1311 = vrot.slane %v207, 5
      %v1312 = vsel %vm1224, %v1310, %v1311
      %v1313 = vrot.slane %v1311, 4
      %v1314 = vrot.slane %v227, 5
      %v1315 = vsel %vm1224, %v1313, %v1314
      %v1316 = vrot.slane %v1187, 5
      %v1317 = vrot.slane %v1316, 4
      %v1318 = vrot.slane %v209, 5
      %v1319 = vsel %vm1224, %v1317, %v1318
      %v1320 = vrot.slane %v1318, 4
      %v1321 = vrot.slane %v228, 5
      %v1322 = vsel %vm1224, %v1320, %v1321
      %v1323 = vrot.slane %v1188, 5
      %v1324 = vrot.slane %v1323, 4
      %v1325 = vrot.slane %v211, 5
      %v1326 = vsel %vm1224, %v1324, %v1325
      %v1327 = vrot.slane %v1325, 4
      %v1328 = vrot.slane %v229, 5
      %v1329 = vsel %vm1224, %v1327, %v1328
      %v1330 = vrot.slane %v1189, 5
      %v1331 = vrot.slane %v1330, 4
      %v1332 = vrot.slane %v213, 5
      %v1333 = vsel %vm1224, %v1331, %v1332
      %v1334 = vrot.slane %v1332, 4
      %v1335 = vrot.slane %v230, 5
      %v1336 = vsel %vm1224, %v1334, %v1335
      %s1337 = scalar_lea.vmem %s172, 4
      %v1338 = vld [vmem:[%s1337] sm:$0x3]
      %v1339 = vunpack.c.l.b16 %v1228
      %v1340 = vunpack.c.l.b16 %v1231
      %v1341 = vunpack.c.l.b16 %v1235
      %v1342 = vunpack.c.l.b16 %v1238
      %v1343 = vunpack.c.l.b16 %v1242
      %v1344 = vunpack.c.l.b16 %v1245
      %v1345 = vunpack.c.l.b16 %v1249
      %v1346 = vunpack.c.l.b16 %v1252
      %v1347 = vunpack.c.l.b16 %v1256
      %v1348 = vunpack.c.l.b16 %v1259
      %v1349 = vunpack.c.l.b16 %v1263
      %v1350 = vunpack.c.l.b16 %v1266
      %v1351 = vunpack.c.l.b16 %v1270
      %v1352 = vunpack.c.l.b16 %v1273
      %v1353 = vunpack.c.l.b16 %v1277
      %v1354 = vunpack.c.l.b16 %v1280
      %v1355 = vunpack.c.l.b16 %v1284
      %v1356 = vunpack.c.l.b16 %v1287
      %v1357 = vunpack.c.l.b16 %v1291
      %v1358 = vunpack.c.l.b16 %v1294
      %v1359 = vunpack.c.l.b16 %v1298
      %v1360 = vunpack.c.l.b16 %v1301
      %v1361 = vunpack.c.l.b16 %v1305
      %v1362 = vunpack.c.l.b16 %v1308
      %v1363 = vunpack.c.l.b16 %v1312
      %v1364 = vunpack.c.l.b16 %v1315
      %v1365 = vunpack.c.l.b16 %v1319
      %v1366 = vunpack.c.l.b16 %v1322
      %v1367 = vunpack.c.l.b16 %v1326
      %v1368 = vunpack.c.l.b16 %v1329
      %v1369 = vunpack.c.l.b16 %v1333
      %v1370 = vunpack.c.l.b16 %v1336
      %v1371 = vpack.c.b16 %v1340, %v1339
      %v1372 = vpack.c.b16 %v1342, %v1341
      %v1373 = vpack.c.b16 %v1344, %v1343
      %v1374 = vpack.c.b16 %v1346, %v1345
      %v1375 = vpack.c.b16 %v1348, %v1347
      %v1376 = vpack.c.b16 %v1350, %v1349
      %v1377 = vpack.c.b16 %v1352, %v1351
      %v1378 = vpack.c.b16 %v1354, %v1353
      %v1379 = vpack.c.b16 %v1356, %v1355
      %v1380 = vpack.c.b16 %v1358, %v1357
      %v1381 = vpack.c.b16 %v1360, %v1359
      %v1382 = vpack.c.b16 %v1362, %v1361
      %v1383 = vpack.c.b16 %v1364, %v1363
      %v1384 = vpack.c.b16 %v1366, %v1365
      %v1385 = vpack.c.b16 %v1368, %v1367
      %v1386 = vpack.c.b16 %v1370, %v1369
      %v1388 = vsel %vm668, %v1371, 0
      %v1391 = vsel %vm668, %v1372, 0
      %v1394 = vsel %vm668, %v1373, 0
      %v1397 = vsel %vm668, %v1374, 0
      %v1400 = vsel %vm668, %v1375, 0
      %v1403 = vsel %vm668, %v1376, 0
      %v1406 = vsel %vm668, %v1377, 0
      %v1409 = vsel %vm668, %v1378, 0
      %v1412 = vsel %vm668, %v1379, 0
      %v1415 = vsel %vm668, %v1380, 0
      %v1418 = vsel %vm668, %v1381, 0
      %v1421 = vsel %vm668, %v1382, 0
      %v1424 = vsel %vm668, %v1383, 0
      %v1427 = vsel %vm668, %v1384, 0
      %v1430 = vsel %vm668, %v1385, 0
      %v1433 = vsel %vm668, %v1386, 0
      %v1436 = vsel %vm717, %v1338, 0
      %1438 = vmatprep.subr.bf16.mxu0 0
      %1439 = vmatpush1.bf16.msra.mxu0 %v1436
      %1440 = vmatprep.subr.bf16.mxu0 0
      %1441 = vmatpush1.bf16.msra.mxu0 0
      %1442 = vmatprep.subr.bf16.mxu0 0
      %1443 = vmatpush1.bf16.msra.mxu0 0
      %1444 = vmatprep.subr.bf16.mxu0 0
      %1445 = vmatpush1.bf16.msra.mxu0 0
      %1446 = vmatprep.subr.bf16.mxu0 0
      %1447 = vmatpush1.bf16.msra.mxu0 0
      %1448 = vmatprep.subr.bf16.mxu0 0
      %1449 = vmatpush1.bf16.msra.mxu0 0
      %1450 = vmatprep.subr.bf16.mxu0 0
      %1451 = vmatpush1.bf16.msra.mxu0 0
      %1452 = vmatprep.subr.bf16.mxu0 0
      %1453 = vmatpush1.bf16.msra.mxu0 0
      %1454 = vmatprep.subr.bf16.mxu0 0
      %1455 = vmatpush1.bf16.msra.mxu0 0
      %1456 = vmatprep.subr.bf16.mxu0 0
      %1457 = vmatpush1.bf16.msra.mxu0 0
      %1458 = vmatprep.subr.bf16.mxu0 0
      %1459 = vmatpush1.bf16.msra.mxu0 0
      %1460 = vmatprep.subr.bf16.mxu0 0
      %1461 = vmatpush1.bf16.msra.mxu0 0
      %1462 = vmatprep.subr.bf16.mxu0 0
      %1463 = vmatpush1.bf16.msra.mxu0 0
      %1464 = vmatprep.subr.bf16.mxu0 0
      %1465 = vmatpush1.bf16.msra.mxu0 0
      %1466 = vmatprep.subr.bf16.mxu0 0
      %1467 = vmatpush1.bf16.msra.mxu0 0
      %1468 = vmatprep.subr.bf16.mxu0 0
      %1469 = vmatpush1.bf16.msra.mxu0 0
      %1470 = vmatprep.mubr.bf16.mxu0 0
      %1471 = vmatmul.mubr.bf16.gmra.mrb[0].mxu0 %v1388
      %v1472 = vpop.f32.mrb[0].mxu0
      %v1473 = vadd.f32 0.0, %v1472
      %v1474 = vpop.f32.mrb[0].mxu0
      %v1475 = vpop.f32.mrb[0].mxu0
      %v1476 = vadd.f32 0.0, %v1475
      %v1477 = vpop.f32.mrb[0].mxu0
      %1478 = vmatprep.mubr.bf16.mxu0 0
      %1479 = vmatmul.mubr.bf16.gmra.mrb[0].mxu0 %v1391
      %v1480 = vpop.f32.mrb[0].mxu0
      %v1481 = vadd.f32 0.0, %v1480
      %v1482 = vpop.f32.mrb[0].mxu0
      %v1483 = vpop.f32.mrb[0].mxu0
      %v1484 = vadd.f32 0.0, %v1483
      %v1485 = vpop.f32.mrb[0].mxu0
      %1486 = vmatprep.mubr.bf16.mxu0 0
      %1487 = vmatmul.mubr.bf16.gmra.mrb[0].mxu0 %v1394
      %v1488 = vpop.f32.mrb[0].mxu0
      %v1489 = vadd.f32 0.0, %v1488
      %v1490 = vpop.f32.mrb[0].mxu0
      %v1491 = vpop.f32.mrb[0].mxu0
      %v1492 = vadd.f32 0.0, %v1491
      %v1493 = vpop.f32.mrb[0].mxu0
      %1494 = vmatprep.mubr.bf16.mxu0 0
      %1495 = vmatmul.mubr.bf16.gmra.mrb[0].mxu0 %v1397
      %v1496 = vpop.f32.mrb[0].mxu0
      %v1497 = vadd.f32 0.0, %v1496
      %v1498 = vpop.f32.mrb[0].mxu0
      %v1499 = vpop.f32.mrb[0].mxu0
      %v1500 = vadd.f32 0.0, %v1499
      %v1501 = vpop.f32.mrb[0].mxu0
      %1502 = vmatprep.mubr.bf16.mxu0 0
      %1503 = vmatmul.mubr.bf16.gmra.mrb[0].mxu0 %v1400
      %v1504 = vpop.f32.mrb[0].mxu0
      %v1505 = vadd.f32 0.0, %v1504
      %v1506 = vpop.f32.mrb[0].mxu0
      %v1507 = vpop.f32.mrb[0].mxu0
      %v1508 = vadd.f32 0.0, %v1507
      %v1509 = vpop.f32.mrb[0].mxu0
      %1510 = vmatprep.mubr.bf16.mxu0 0
      %1511 = vmatmul.mubr.bf16.gmra.mrb[0].mxu0 %v1403
      %v1512 = vpop.f32.mrb[0].mxu0
      %v1513 = vadd.f32 0.0, %v1512
      %v1514 = vpop.f32.mrb[0].mxu0
      %v1515 = vpop.f32.mrb[0].mxu0
      %v1516 = vadd.f32 0.0, %v1515
      %v1517 = vpop.f32.mrb[0].mxu0
      %1518 = vmatprep.mubr.bf16.mxu0 0
      %1519 = vmatmul.mubr.bf16.gmra.mrb[0].mxu0 %v1406
      %v1520 = vpop.f32.mrb[0].mxu0
      %v1521 = vadd.f32 0.0, %v1520
      %v1522 = vpop.f32.mrb[0].mxu0
      %v1523 = vpop.f32.mrb[0].mxu0
      %v1524 = vadd.f32 0.0, %v1523
      %v1525 = vpop.f32.mrb[0].mxu0
      %1526 = vmatprep.mubr.bf16.mxu0 0
      %1527 = vmatmul.mubr.bf16.gmra.mrb[0].mxu0 %v1409
      %v1528 = vpop.f32.mrb[0].mxu0
      %v1529 = vadd.f32 0.0, %v1528
      %v1530 = vpop.f32.mrb[0].mxu0
      %v1531 = vpop.f32.mrb[0].mxu0
      %v1532 = vadd.f32 0.0, %v1531
      %v1533 = vpop.f32.mrb[0].mxu0
      %1534 = vmatprep.mubr.bf16.mxu0 0
      %1535 = vmatmul.mubr.bf16.gmra.mrb[0].mxu0 %v1412
      %v1536 = vpop.f32.mrb[0].mxu0
      %v1537 = vadd.f32 0.0, %v1536
      %v1538 = vpop.f32.mrb[0].mxu0
      %v1539 = vpop.f32.mrb[0].mxu0
      %v1540 = vadd.f32 0.0, %v1539
      %v1541 = vpop.f32.mrb[0].mxu0
      %1542 = vmatprep.mubr.bf16.mxu0 0
      %1543 = vmatmul.mubr.bf16.gmra.mrb[0].mxu0 %v1415
      %v1544 = vpop.f32.mrb[0].mxu0
      %v1545 = vadd.f32 0.0, %v1544
      %v1546 = vpop.f32.mrb[0].mxu0
      %v1547 = vpop.f32.mrb[0].mxu0
      %v1548 = vadd.f32 0.0, %v1547
      %v1549 = vpop.f32.mrb[0].mxu0
      %1550 = vmatprep.mubr.bf16.mxu0 0
      %1551 = vmatmul.mubr.bf16.gmra.mrb[0].mxu0 %v1418
      %v1552 = vpop.f32.mrb[0].mxu0
      %v1553 = vadd.f32 0.0, %v1552
      %v1554 = vpop.f32.mrb[0].mxu0
      %v1555 = vpop.f32.mrb[0].mxu0
      %v1556 = vadd.f32 0.0, %v1555
      %v1557 = vpop.f32.mrb[0].mxu0
      %1558 = vmatprep.mubr.bf16.mxu0 0
      %1559 = vmatmul.mubr.bf16.gmra.mrb[0].mxu0 %v1421
      %v1560 = vpop.f32.mrb[0].mxu0
      %v1561 = vadd.f32 0.0, %v1560
      %v1562 = vpop.f32.mrb[0].mxu0
      %v1563 = vpop.f32.mrb[0].mxu0
      %v1564 = vadd.f32 0.0, %v1563
      %v1565 = vpop.f32.mrb[0].mxu0
      %1566 = vmatprep.mubr.bf16.mxu0 0
      %1567 = vmatmul.mubr.bf16.gmra.mrb[0].mxu0 %v1424
      %v1568 = vpop.f32.mrb[0].mxu0
      %v1569 = vadd.f32 0.0, %v1568
      %v1570 = vpop.f32.mrb[0].mxu0
      %v1571 = vpop.f32.mrb[0].mxu0
      %v1572 = vadd.f32 0.0, %v1571
      %v1573 = vpop.f32.mrb[0].mxu0
      %1574 = vmatprep.mubr.bf16.mxu0 0
      %1575 = vmatmul.mubr.bf16.gmra.mrb[0].mxu0 %v1427
      %v1576 = vpop.f32.mrb[0].mxu0
      %v1577 = vadd.f32 0.0, %v1576
      %v1578 = vpop.f32.mrb[0].mxu0
      %v1579 = vpop.f32.mrb[0].mxu0
      %v1580 = vadd.f32 0.0, %v1579
      %v1581 = vpop.f32.mrb[0].mxu0
      %1582 = vmatprep.mubr.bf16.mxu0 0
      %1583 = vmatmul.mubr.bf16.gmra.mrb[0].mxu0 %v1430
      %v1584 = vpop.f32.mrb[0].mxu0
      %v1585 = vadd.f32 0.0, %v1584
      %v1586 = vpop.f32.mrb[0].mxu0
      %v1587 = vpop.f32.mrb[0].mxu0
      %v1588 = vadd.f32 0.0, %v1587
      %v1589 = vpop.f32.mrb[0].mxu0
      %1590 = vmatprep.mubr.bf16.mxu0 0
      %1591 = vmatmul.mubr.bf16.gmra.mrb[0].mxu0 %v1433
      %v1592 = vpop.f32.mrb[0].mxu0
      %v1593 = vadd.f32 0.0, %v1592
      %v1594 = vpop.f32.mrb[0].mxu0
      %v1595 = vpop.f32.mrb[0].mxu0
      %v1596 = vadd.f32 0.0, %v1595
      %v1597 = vpop.f32.mrb[0].mxu0
      %1598 = vdwg.mxu0
      %v1599 = vadd.f32 %v1048, %v1473
      %v1600 = vadd.f32 %v1051, %v1476
      %v1601 = vadd.f32 %v1056, %v1481
      %v1602 = vadd.f32 %v1059, %v1484
      %v1603 = vadd.f32 %v1064, %v1489
      %v1604 = vadd.f32 %v1067, %v1492
      %v1605 = vadd.f32 %v1072, %v1497
      %v1606 = vadd.f32 %v1075, %v1500
      %v1607 = vadd.f32 %v1080, %v1505
      %v1608 = vadd.f32 %v1083, %v1508
      %v1609 = vadd.f32 %v1088, %v1513
      %v1610 = vadd.f32 %v1091, %v1516
      %v1611 = vadd.f32 %v1096, %v1521
      %v1612 = vadd.f32 %v1099, %v1524
      %v1613 = vadd.f32 %v1104, %v1529
      %v1614 = vadd.f32 %v1107, %v1532
      %v1615 = vadd.f32 %v1112, %v1537
      %v1616 = vadd.f32 %v1115, %v1540
      %v1617 = vadd.f32 %v1120, %v1545
      %v1618 = vadd.f32 %v1123, %v1548
      %v1619 = vadd.f32 %v1128, %v1553
      %v1620 = vadd.f32 %v1131, %v1556
      %v1621 = vadd.f32 %v1136, %v1561
      %v1622 = vadd.f32 %v1139, %v1564
      %v1623 = vadd.f32 %v1144, %v1569
      %v1624 = vadd.f32 %v1147, %v1572
      %v1625 = vadd.f32 %v1152, %v1577
      %v1626 = vadd.f32 %v1155, %v1580
      %v1627 = vadd.f32 %v1160, %v1585
      %v1628 = vadd.f32 %v1163, %v1588
      %v1629 = vadd.f32 %v1168, %v1593
      %v1630 = vadd.f32 %v1171, %v1596
      %s1631 = scalar_lea.vmem %s168, 12
      %v1632 = vld [vmem:[%s1631] sm:$0xf]
      %v1633 = vld [vmem:[%s1631 + $0x4] sm:$0xf]
      %v1634 = vld [vmem:[%s1631 + $0xc] sm:$0xf]
      %v1635 = vld [vmem:[%s1631 + $0x10] sm:$0xf]
      %v1636 = vld [vmem:[%s1631 + $0x18] sm:$0xf]
      %v1637 = vld [vmem:[%s1631 + $0x1c] sm:$0xf]
      %v1638 = vld [vmem:[%s1631 + $0x24] sm:$0xf]
      %v1639 = vld [vmem:[%s1631 + $0x28] sm:$0xf]
      %v1640 = vld [vmem:[%s1631 + $0x30] sm:$0xf]
      %v1641 = vld [vmem:[%s1631 + $0x34] sm:$0xf]
      %v1642 = vld [vmem:[%s1631 + $0x3c] sm:$0xf]
      %v1643 = vld [vmem:[%s1631 + $0x40] sm:$0xf]
      %v1644 = vld [vmem:[%s1631 + $0x48] sm:$0xf]
      %v1645 = vld [vmem:[%s1631 + $0x4c] sm:$0xf]
      %v1646 = vld [vmem:[%s1631 + $0x54] sm:$0xf]
      %v1647 = vld [vmem:[%s1631 + $0x58] sm:$0xf]
      %v1648 = vld [vmem:[%s1631 + $0x60] sm:$0xf]
      %v1649 = vld [vmem:[%s1631 + $0x64] sm:$0xf]
      %v1650 = vld [vmem:[%s1631 + $0x6c] sm:$0xf]
      %v1651 = vld [vmem:[%s1631 + $0x70] sm:$0xf]
      %v1652 = vld [vmem:[%s1631 + $0x78] sm:$0xf]
      %v1653 = vld [vmem:[%s1631 + $0x7c] sm:$0xf]
      %v1654 = vld [vmem:[%s1631 + $0x84] sm:$0xf]
      %v1655 = vld [vmem:[%s1631 + $0x88] sm:$0xf]
      %v1656 = vld [vmem:[%s1631 + $0x90] sm:$0xf]
      %v1657 = vld [vmem:[%s1631 + $0x94] sm:$0xf]
      %v1658 = vld [vmem:[%s1631 + $0x9c] sm:$0xf]
      %v1659 = vld [vmem:[%s1631 + $0xa0] sm:$0xf]
      %v1660 = vld [vmem:[%s1631 + $0xa8] sm:$0xf]
      %v1661 = vld [vmem:[%s1631 + $0xac] sm:$0xf]
      %v1662 = vld [vmem:[%s1631 + $0xb4] sm:$0xf]
      %v1663 = vld [vmem:[%s1631 + $0xb8] sm:$0xf]
      %s1664 = scalar_lea.vmem %s172, 6
      %v1665 = vld [vmem:[%s1664] sm:$0x3]
      %v1698 = vunpack.c.l.b16 %v1632
      %v1699 = vunpack.c.l.b16 %v1633
      %v1700 = vunpack.c.l.b16 %v1634
      %v1701 = vunpack.c.l.b16 %v1635
      %v1702 = vunpack.c.l.b16 %v1636
      %v1703 = vunpack.c.l.b16 %v1637
      %v1704 = vunpack.c.l.b16 %v1638
      %v1705 = vunpack.c.l.b16 %v1639
      %v1706 = vunpack.c.l.b16 %v1640
      %v1707 = vunpack.c.l.b16 %v1641
      %v1708 = vunpack.c.l.b16 %v1642
      %v1709 = vunpack.c.l.b16 %v1643
      %v1710 = vunpack.c.l.b16 %v1644
      %v1711 = vunpack.c.l.b16 %v1645
      %v1712 = vunpack.c.l.b16 %v1646
      %v1713 = vunpack.c.l.b16 %v1647
      %v1714 = vunpack.c.l.b16 %v1648
      %v1715 = vunpack.c.l.b16 %v1649
      %v1716 = vunpack.c.l.b16 %v1650
      %v1717 = vunpack.c.l.b16 %v1651
      %v1718 = vunpack.c.l.b16 %v1652
      %v1719 = vunpack.c.l.b16 %v1653
      %v1720 = vunpack.c.l.b16 %v1654
      %v1721 = vunpack.c.l.b16 %v1655
      %v1722 = vunpack.c.l.b16 %v1656
      %v1723 = vunpack.c.l.b16 %v1657
      %v1724 = vunpack.c.l.b16 %v1658
      %v1725 = vunpack.c.l.b16 %v1659
      %v1726 = vunpack.c.l.b16 %v1660
      %v1727 = vunpack.c.l.b16 %v1661
      %v1728 = vunpack.c.l.b16 %v1662
      %v1729 = vunpack.c.l.b16 %v1663
      %v1730 = vpack.c.b16 %v1699, %v1698
      %v1731 = vpack.c.b16 %v1701, %v1700
      %v1732 = vpack.c.b16 %v1703, %v1702
      %v1733 = vpack.c.b16 %v1705, %v1704
      %v1734 = vpack.c.b16 %v1707, %v1706
      %v1735 = vpack.c.b16 %v1709, %v1708
      %v1736 = vpack.c.b16 %v1711, %v1710
      %v1737 = vpack.c.b16 %v1713, %v1712
      %v1738 = vpack.c.b16 %v1715, %v1714
      %v1739 = vpack.c.b16 %v1717, %v1716
      %v1740 = vpack.c.b16 %v1719, %v1718
      %v1741 = vpack.c.b16 %v1721, %v1720
      %v1742 = vpack.c.b16 %v1723, %v1722
      %v1743 = vpack.c.b16 %v1725, %v1724
      %v1744 = vpack.c.b16 %v1727, %v1726
      %v1745 = vpack.c.b16 %v1729, %v1728
      %v1747 = vsel %vm668, %v1730, 0
      %v1750 = vsel %vm668, %v1731, 0
      %v1753 = vsel %vm668, %v1732, 0
      %v1756 = vsel %vm668, %v1733, 0
      %v1759 = vsel %vm668, %v1734, 0
      %v1762 = vsel %vm668, %v1735, 0
      %v1765 = vsel %vm668, %v1736, 0
      %v1768 = vsel %vm668, %v1737, 0
      %v1771 = vsel %vm668, %v1738, 0
      %v1774 = vsel %vm668, %v1739, 0
      %v1777 = vsel %vm668, %v1740, 0
      %v1780 = vsel %vm668, %v1741, 0
      %v1783 = vsel %vm668, %v1742, 0
      %v1786 = vsel %vm668, %v1743, 0
      %v1789 = vsel %vm668, %v1744, 0
      %v1792 = vsel %vm668, %v1745, 0
      %v1795 = vsel %vm717, %v1665, 0
      %1797 = vmatprep.subr.bf16.mxu0 0
      %1798 = vmatpush1.bf16.msra.mxu0 %v1795
      %1799 = vmatprep.subr.bf16.mxu0 0
      %1800 = vmatpush1.bf16.msra.mxu0 0
      %1801 = vmatprep.subr.bf16.mxu0 0
      %1802 = vmatpush1.bf16.msra.mxu0 0
      %1803 = vmatprep.subr.bf16.mxu0 0
      %1804 = vmatpush1.bf16.msra.mxu0 0
      %1805 = vmatprep.subr.bf16.mxu0 0
      %1806 = vmatpush1.bf16.msra.mxu0 0
      %1807 = vmatprep.subr.bf16.mxu0 0
      %1808 = vmatpush1.bf16.msra.mxu0 0
      %1809 = vmatprep.subr.bf16.mxu0 0
      %1810 = vmatpush1.bf16.msra.mxu0 0
      %1811 = vmatprep.subr.bf16.mxu0 0
      %1812 = vmatpush1.bf16.msra.mxu0 0
      %1813 = vmatprep.subr.bf16.mxu0 0
      %1814 = vmatpush1.bf16.msra.mxu0 0
      %1815 = vmatprep.subr.bf16.mxu0 0
      %1816 = vmatpush1.bf16.msra.mxu0 0
      %1817 = vmatprep.subr.bf16.mxu0 0
      %1818 = vmatpush1.bf16.msra.mxu0 0
      %1819 = vmatprep.subr.bf16.mxu0 0
      %1820 = vmatpush1.bf16.msra.mxu0 0
      %1821 = vmatprep.subr.bf16.mxu0 0
      %1822 = vmatpush1.bf16.msra.mxu0 0
      %1823 = vmatprep.subr.bf16.mxu0 0
      %1824 = vmatpush1.bf16.msra.mxu0 0
      %1825 = vmatprep.subr.bf16.mxu0 0
      %1826 = vmatpush1.bf16.msra.mxu0 0
      %1827 = vmatprep.subr.bf16.mxu0 0
      %1828 = vmatpush1.bf16.msra.mxu0 0
      %1829 = vmatprep.mubr.bf16.mxu0 0
      %1830 = vmatmul.mubr.bf16.gmra.mrb[0].mxu0 %v1747
      %v1831 = vpop.f32.mrb[0].mxu0
      %v1832 = vadd.f32 0.0, %v1831
      %v1833 = vpop.f32.mrb[0].mxu0
      %v1834 = vpop.f32.mrb[0].mxu0
      %v1835 = vadd.f32 0.0, %v1834
      %v1836 = vpop.f32.mrb[0].mxu0
      %1837 = vmatprep.mubr.bf16.mxu0 0
      %1838 = vmatmul.mubr.bf16.gmra.mrb[0].mxu0 %v1750
      %v1839 = vpop.f32.mrb[0].mxu0
      %v1840 = vadd.f32 0.0, %v1839
      %v1841 = vpop.f32.mrb[0].mxu0
      %v1842 = vpop.f32.mrb[0].mxu0
      %v1843 = vadd.f32 0.0, %v1842
      %v1844 = vpop.f32.mrb[0].mxu0
      %1845 = vmatprep.mubr.bf16.mxu0 0
      %1846 = vmatmul.mubr.bf16.gmra.mrb[0].mxu0 %v1753
      %v1847 = vpop.f32.mrb[0].mxu0
      %v1848 = vadd.f32 0.0, %v1847
      %v1849 = vpop.f32.mrb[0].mxu0
      %v1850 = vpop.f32.mrb[0].mxu0
      %v1851 = vadd.f32 0.0, %v1850
      %v1852 = vpop.f32.mrb[0].mxu0
      %1853 = vmatprep.mubr.bf16.mxu0 0
      %1854 = vmatmul.mubr.bf16.gmra.mrb[0].mxu0 %v1756
      %v1855 = vpop.f32.mrb[0].mxu0
      %v1856 = vadd.f32 0.0, %v1855
      %v1857 = vpop.f32.mrb[0].mxu0
      %v1858 = vpop.f32.mrb[0].mxu0
      %v1859 = vadd.f32 0.0, %v1858
      %v1860 = vpop.f32.mrb[0].mxu0
      %1861 = vmatprep.mubr.bf16.mxu0 0
      %1862 = vmatmul.mubr.bf16.gmra.mrb[0].mxu0 %v1759
      %v1863 = vpop.f32.mrb[0].mxu0
      %v1864 = vadd.f32 0.0, %v1863
      %v1865 = vpop.f32.mrb[0].mxu0
      %v1866 = vpop.f32.mrb[0].mxu0
      %v1867 = vadd.f32 0.0, %v1866
      %v1868 = vpop.f32.mrb[0].mxu0
      %1869 = vmatprep.mubr.bf16.mxu0 0
      %1870 = vmatmul.mubr.bf16.gmra.mrb[0].mxu0 %v1762
      %v1871 = vpop.f32.mrb[0].mxu0
      %v1872 = vadd.f32 0.0, %v1871
      %v1873 = vpop.f32.mrb[0].mxu0
      %v1874 = vpop.f32.mrb[0].mxu0
      %v1875 = vadd.f32 0.0, %v1874
      %v1876 = vpop.f32.mrb[0].mxu0
      %1877 = vmatprep.mubr.bf16.mxu0 0
      %1878 = vmatmul.mubr.bf16.gmra.mrb[0].mxu0 %v1765
      %v1879 = vpop.f32.mrb[0].mxu0
      %v1880 = vadd.f32 0.0, %v1879
      %v1881 = vpop.f32.mrb[0].mxu0
      %v1882 = vpop.f32.mrb[0].mxu0
      %v1883 = vadd.f32 0.0, %v1882
      %v1884 = vpop.f32.mrb[0].mxu0
      %1885 = vmatprep.mubr.bf16.mxu0 0
      %1886 = vmatmul.mubr.bf16.gmra.mrb[0].mxu0 %v1768
      %v1887 = vpop.f32.mrb[0].mxu0
      %v1888 = vadd.f32 0.0, %v1887
      %v1889 = vpop.f32.mrb[0].mxu0
      %v1890 = vpop.f32.mrb[0].mxu0
      %v1891 = vadd.f32 0.0, %v1890
      %v1892 = vpop.f32.mrb[0].mxu0
      %1893 = vmatprep.mubr.bf16.mxu0 0
      %1894 = vmatmul.mubr.bf16.gmra.mrb[0].mxu0 %v1771
      %v1895 = vpop.f32.mrb[0].mxu0
      %v1896 = vadd.f32 0.0, %v1895
      %v1897 = vpop.f32.mrb[0].mxu0
      %v1898 = vpop.f32.mrb[0].mxu0
      %v1899 = vadd.f32 0.0, %v1898
      %v1900 = vpop.f32.mrb[0].mxu0
      %1901 = vmatprep.mubr.bf16.mxu0 0
      %1902 = vmatmul.mubr.bf16.gmra.mrb[0].mxu0 %v1774
      %v1903 = vpop.f32.mrb[0].mxu0
      %v1904 = vadd.f32 0.0, %v1903
      %v1905 = vpop.f32.mrb[0].mxu0
      %v1906 = vpop.f32.mrb[0].mxu0
      %v1907 = vadd.f32 0.0, %v1906
      %v1908 = vpop.f32.mrb[0].mxu0
      %1909 = vmatprep.mubr.bf16.mxu0 0
      %1910 = vmatmul.mubr.bf16.gmra.mrb[0].mxu0 %v1777
      %v1911 = vpop.f32.mrb[0].mxu0
      %v1912 = vadd.f32 0.0, %v1911
      %v1913 = vpop.f32.mrb[0].mxu0
      %v1914 = vpop.f32.mrb[0].mxu0
      %v1915 = vadd.f32 0.0, %v1914
      %v1916 = vpop.f32.mrb[0].mxu0
      %1917 = vmatprep.mubr.bf16.mxu0 0
      %1918 = vmatmul.mubr.bf16.gmra.mrb[0].mxu0 %v1780
      %v1919 = vpop.f32.mrb[0].mxu0
      %v1920 = vadd.f32 0.0, %v1919
      %v1921 = vpop.f32.mrb[0].mxu0
      %v1922 = vpop.f32.mrb[0].mxu0
      %v1923 = vadd.f32 0.0, %v1922
      %v1924 = vpop.f32.mrb[0].mxu0
      %1925 = vmatprep.mubr.bf16.mxu0 0
      %1926 = vmatmul.mubr.bf16.gmra.mrb[0].mxu0 %v1783
      %v1927 = vpop.f32.mrb[0].mxu0
      %v1928 = vadd.f32 0.0, %v1927
      %v1929 = vpop.f32.mrb[0].mxu0
      %v1930 = vpop.f32.mrb[0].mxu0
      %v1931 = vadd.f32 0.0, %v1930
      %v1932 = vpop.f32.mrb[0].mxu0
      %1933 = vmatprep.mubr.bf16.mxu0 0
      %1934 = vmatmul.mubr.bf16.gmra.mrb[0].mxu0 %v1786
      %v1935 = vpop.f32.mrb[0].mxu0
      %v1936 = vadd.f32 0.0, %v1935
      %v1937 = vpop.f32.mrb[0].mxu0
      %v1938 = vpop.f32.mrb[0].mxu0
      %v1939 = vadd.f32 0.0, %v1938
      %v1940 = vpop.f32.mrb[0].mxu0
      %1941 = vmatprep.mubr.bf16.mxu0 0
      %1942 = vmatmul.mubr.bf16.gmra.mrb[0].mxu0 %v1789
      %v1943 = vpop.f32.mrb[0].mxu0
      %v1944 = vadd.f32 0.0, %v1943
      %v1945 = vpop.f32.mrb[0].mxu0
      %v1946 = vpop.f32.mrb[0].mxu0
      %v1947 = vadd.f32 0.0, %v1946
      %v1948 = vpop.f32.mrb[0].mxu0
      %1949 = vmatprep.mubr.bf16.mxu0 0
      %1950 = vmatmul.mubr.bf16.gmra.mrb[0].mxu0 %v1792
      %v1951 = vpop.f32.mrb[0].mxu0
      %v1952 = vadd.f32 0.0, %v1951
      %v1953 = vpop.f32.mrb[0].mxu0
      %v1954 = vpop.f32.mrb[0].mxu0
      %v1955 = vadd.f32 0.0, %v1954
      %v1956 = vpop.f32.mrb[0].mxu0
      %1957 = vdwg.mxu0
      %v1958 = vadd.f32 %v1599, %v1832
      %v1959 = vadd.f32 %v1600, %v1835
      %v1960 = vadd.f32 %v1601, %v1840
      %v1961 = vadd.f32 %v1602, %v1843
      %v1962 = vadd.f32 %v1603, %v1848
      %v1963 = vadd.f32 %v1604, %v1851
      %v1964 = vadd.f32 %v1605, %v1856
      %v1965 = vadd.f32 %v1606, %v1859
      %v1966 = vadd.f32 %v1607, %v1864
      %v1967 = vadd.f32 %v1608, %v1867
      %v1968 = vadd.f32 %v1609, %v1872
      %v1969 = vadd.f32 %v1610, %v1875
      %v1970 = vadd.f32 %v1611, %v1880
      %v1971 = vadd.f32 %v1612, %v1883
      %v1972 = vadd.f32 %v1613, %v1888
      %v1973 = vadd.f32 %v1614, %v1891
      %v1974 = vadd.f32 %v1615, %v1896
      %v1975 = vadd.f32 %v1616, %v1899
      %v1976 = vadd.f32 %v1617, %v1904
      %v1977 = vadd.f32 %v1618, %v1907
      %v1978 = vadd.f32 %v1619, %v1912
      %v1979 = vadd.f32 %v1620, %v1915
      %v1980 = vadd.f32 %v1621, %v1920
      %v1981 = vadd.f32 %v1622, %v1923
      %v1982 = vadd.f32 %v1623, %v1928
      %v1983 = vadd.f32 %v1624, %v1931
      %v1984 = vadd.f32 %v1625, %v1936
      %v1985 = vadd.f32 %v1626, %v1939
      %v1986 = vadd.f32 %v1627, %v1944
      %v1987 = vadd.f32 %v1628, %v1947
      %v1988 = vadd.f32 %v1629, %v1952
      %v1989 = vadd.f32 %v1630, %v1955
      %v1990 = vld [vmem:[%s1631] sm:$0xf]
      %v1991 = vld [vmem:[%s1631 + $0x4] sm:$0xf]
      %v1992 = vld [vmem:[%s1631 + $0x8] sm:$0x1]
      %v1993 = vld [vmem:[%s1631 + $0xc] sm:$0xf]
      %v1994 = vld [vmem:[%s1631 + $0x10] sm:$0xf]
      %v1995 = vld [vmem:[%s1631 + $0x14] sm:$0x1]
      %v1996 = vld [vmem:[%s1631 + $0x18] sm:$0xf]
      %v1997 = vld [vmem:[%s1631 + $0x1c] sm:$0xf]
      %v1998 = vld [vmem:[%s1631 + $0x20] sm:$0x1]
      %v1999 = vld [vmem:[%s1631 + $0x24] sm:$0xf]
      %v2000 = vld [vmem:[%s1631 + $0x28] sm:$0xf]
      %v2001 = vld [vmem:[%s1631 + $0x2c] sm:$0x1]
      %v2002 = vld [vmem:[%s1631 + $0x30] sm:$0xf]
      %v2003 = vld [vmem:[%s1631 + $0x34] sm:$0xf]
      %v2004 = vld [vmem:[%s1631 + $0x38] sm:$0x1]
      %v2005 = vld [vmem:[%s1631 + $0x3c] sm:$0xf]
      %v2006 = vld [vmem:[%s1631 + $0x40] sm:$0xf]
      %v2007 = vld [vmem:[%s1631 + $0x44] sm:$0x1]
      %v2008 = vld [vmem:[%s1631 + $0x48] sm:$0xf]
      %v2009 = vld [vmem:[%s1631 + $0x4c] sm:$0xf]
      %v2010 = vld [vmem:[%s1631 + $0x50] sm:$0x1]
      %v2011 = vld [vmem:[%s1631 + $0x54] sm:$0xf]
      %v2012 = vld [vmem:[%s1631 + $0x58] sm:$0xf]
      %v2013 = vld [vmem:[%s1631 + $0x5c] sm:$0x1]
      %v2014 = vld [vmem:[%s1631 + $0x60] sm:$0xf]
      %v2015 = vld [vmem:[%s1631 + $0x64] sm:$0xf]
      %v2016 = vld [vmem:[%s1631 + $0x68] sm:$0x1]
      %v2017 = vld [vmem:[%s1631 + $0x6c] sm:$0xf]
      %v2018 = vld [vmem:[%s1631 + $0x70] sm:$0xf]
      %v2019 = vld [vmem:[%s1631 + $0x74] sm:$0x1]
      %v2020 = vld [vmem:[%s1631 + $0x78] sm:$0xf]
      %v2021 = vld [vmem:[%s1631 + $0x7c] sm:$0xf]
      %v2022 = vld [vmem:[%s1631 + $0x80] sm:$0x1]
      %v2023 = vld [vmem:[%s1631 + $0x84] sm:$0xf]
      %v2024 = vld [vmem:[%s1631 + $0x88] sm:$0xf]
      %v2025 = vld [vmem:[%s1631 + $0x8c] sm:$0x1]
      %v2026 = vld [vmem:[%s1631 + $0x90] sm:$0xf]
      %v2027 = vld [vmem:[%s1631 + $0x94] sm:$0xf]
      %v2028 = vld [vmem:[%s1631 + $0x98] sm:$0x1]
      %v2029 = vld [vmem:[%s1631 + $0x9c] sm:$0xf]
      %v2030 = vld [vmem:[%s1631 + $0xa0] sm:$0xf]
      %v2031 = vld [vmem:[%s1631 + $0xa4] sm:$0x1]
      %v2032 = vld [vmem:[%s1631 + $0xa8] sm:$0xf]
      %v2033 = vld [vmem:[%s1631 + $0xac] sm:$0xf]
      %v2034 = vld [vmem:[%s1631 + $0xb0] sm:$0x1]
      %v2035 = vld [vmem:[%s1631 + $0xb4] sm:$0xf]
      %v2036 = vld [vmem:[%s1631 + $0xb8] sm:$0xf]
      %v2037 = vld [vmem:[%s1631 + $0xbc] sm:$0x1]
      %v2039 = vshrl.u32 %v1990, 16
      %v2041 = vrot.slane %v2039, 4
      %v2042 = vshll.u32 %v1990, 16
      %v2044 = vrot.slane %v2042, 5
      %v2045 = vor.u32 %v2041, %v2044
      %v2046 = vrot.slane %v2045, 4
      %v2048 = vshll.u32 %v1991, 16
      %v2050 = vrot.slane %v2048, 5
      %v2051 = vsel %vm233, %v2046, %v2050
      %v2052 = vshrl.u32 %v1991, 16
      %v2054 = vrot.slane %v2052, 4
      %v2055 = vor.u32 %v2054, %v2050
      %v2056 = vrot.slane %v2055, 4
      %v2058 = vshll.u32 %v1992, 16
      %v2060 = vrot.slane %v2058, 5
      %v2061 = vsel %vm233, %v2056, %v2060
      %v2063 = vshrl.u32 %v1993, 16
      %v2065 = vrot.slane %v2063, 4
      %v2066 = vshll.u32 %v1993, 16
      %v2068 = vrot.slane %v2066, 5
      %v2069 = vor.u32 %v2065, %v2068
      %v2070 = vrot.slane %v2069, 4
      %v2072 = vshll.u32 %v1994, 16
      %v2074 = vrot.slane %v2072, 5
      %v2075 = vsel %vm233, %v2070, %v2074
      %v2076 = vshrl.u32 %v1994, 16
      %v2078 = vrot.slane %v2076, 4
      %v2079 = vor.u32 %v2078, %v2074
      %v2080 = vrot.slane %v2079, 4
      %v2082 = vshll.u32 %v1995, 16
      %v2084 = vrot.slane %v2082, 5
      %v2085 = vsel %vm233, %v2080, %v2084
      %v2087 = vshrl.u32 %v1996, 16
      %v2089 = vrot.slane %v2087, 4
      %v2090 = vshll.u32 %v1996, 16
      %v2092 = vrot.slane %v2090, 5
      %v2093 = vor.u32 %v2089, %v2092
      %v2094 = vrot.slane %v2093, 4
      %v2096 = vshll.u32 %v1997, 16
      %v2098 = vrot.slane %v2096, 5
      %v2099 = vsel %vm233, %v2094, %v2098
      %v2100 = vshrl.u32 %v1997, 16
      %v2102 = vrot.slane %v2100, 4
      %v2103 = vor.u32 %v2102, %v2098
      %v2104 = vrot.slane %v2103, 4
      %v2106 = vshll.u32 %v1998, 16
      %v2108 = vrot.slane %v2106, 5
      %v2109 = vsel %vm233, %v2104, %v2108
      %v2111 = vshrl.u32 %v1999, 16
      %v2113 = vrot.slane %v2111, 4
      %v2114 = vshll.u32 %v1999, 16
      %v2116 = vrot.slane %v2114, 5
      %v2117 = vor.u32 %v2113, %v2116
      %v2118 = vrot.slane %v2117, 4
      %v2120 = vshll.u32 %v2000, 16
      %v2122 = vrot.slane %v2120, 5
      %v2123 = vsel %vm233, %v2118, %v2122
      %v2124 = vshrl.u32 %v2000, 16
      %v2126 = vrot.slane %v2124, 4
      %v2127 = vor.u32 %v2126, %v2122
      %v2128 = vrot.slane %v2127, 4
      %v2130 = vshll.u32 %v2001, 16
      %v2132 = vrot.slane %v2130, 5
      %v2133 = vsel %vm233, %v2128, %v2132
      %v2135 = vshrl.u32 %v2002, 16
      %v2137 = vrot.slane %v2135, 4
      %v2138 = vshll.u32 %v2002, 16
      %v2140 = vrot.slane %v2138, 5
      %v2141 = vor.u32 %v2137, %v2140
      %v2142 = vrot.slane %v2141, 4
      %v2144 = vshll.u32 %v2003, 16
      %v2146 = vrot.slane %v2144, 5
      %v2147 = vsel %vm233, %v2142, %v2146
      %v2148 = vshrl.u32 %v2003, 16
      %v2150 = vrot.slane %v2148, 4
      %v2151 = vor.u32 %v2150, %v2146
      %v2152 = vrot.slane %v2151, 4
      %v2154 = vshll.u32 %v2004, 16
      %v2156 = vrot.slane %v2154, 5
      %v2157 = vsel %vm233, %v2152, %v2156
      %v2159 = vshrl.u32 %v2005, 16
      %v2161 = vrot.slane %v2159, 4
      %v2162 = vshll.u32 %v2005, 16
      %v2164 = vrot.slane %v2162, 5
      %v2165 = vor.u32 %v2161, %v2164
      %v2166 = vrot.slane %v2165, 4
      %v2168 = vshll.u32 %v2006, 16
      %v2170 = vrot.slane %v2168, 5
      %v2171 = vsel %vm233, %v2166, %v2170
      %v2172 = vshrl.u32 %v2006, 16
      %v2174 = vrot.slane %v2172, 4
      %v2175 = vor.u32 %v2174, %v2170
      %v2176 = vrot.slane %v2175, 4
      %v2178 = vshll.u32 %v2007, 16
      %v2180 = vrot.slane %v2178, 5
      %v2181 = vsel %vm233, %v2176, %v2180
      %v2183 = vshrl.u32 %v2008, 16
      %v2185 = vrot.slane %v2183, 4
      %v2186 = vshll.u32 %v2008, 16
      %v2188 = vrot.slane %v2186, 5
      %v2189 = vor.u32 %v2185, %v2188
      %v2190 = vrot.slane %v2189, 4
      %v2192 = vshll.u32 %v2009, 16
      %v2194 = vrot.slane %v2192, 5
      %v2195 = vsel %vm233, %v2190, %v2194
      %v2196 = vshrl.u32 %v2009, 16
      %v2198 = vrot.slane %v2196, 4
      %v2199 = vor.u32 %v2198, %v2194
      %v2200 = vrot.slane %v2199, 4
      %v2202 = vshll.u32 %v2010, 16
      %v2204 = vrot.slane %v2202, 5
      %v2205 = vsel %vm233, %v2200, %v2204
      %v2207 = vshrl.u32 %v2011, 16
      %v2209 = vrot.slane %v2207, 4
      %v2210 = vshll.u32 %v2011, 16
      %v2212 = vrot.slane %v2210, 5
      %v2213 = vor.u32 %v2209, %v2212
      %v2214 = vrot.slane %v2213, 4
      %v2216 = vshll.u32 %v2012, 16
      %v2218 = vrot.slane %v2216, 5
      %v2219 = vsel %vm233, %v2214, %v2218
      %v2220 = vshrl.u32 %v2012, 16
      %v2222 = vrot.slane %v2220, 4
      %v2223 = vor.u32 %v2222, %v2218
      %v2224 = vrot.slane %v2223, 4
      %v2226 = vshll.u32 %v2013, 16
      %v2228 = vrot.slane %v2226, 5
      %v2229 = vsel %vm233, %v2224, %v2228
      %v2231 = vshrl.u32 %v2014, 16
      %v2233 = vrot.slane %v2231, 4
      %v2234 = vshll.u32 %v2014, 16
      %v2236 = vrot.slane %v2234, 5
      %v2237 = vor.u32 %v2233, %v2236
      %v2238 = vrot.slane %v2237, 4
      %v2240 = vshll.u32 %v2015, 16
      %v2242 = vrot.slane %v2240, 5
      %v2243 = vsel %vm233, %v2238, %v2242
      %v2244 = vshrl.u32 %v2015, 16
      %v2246 = vrot.slane %v2244, 4
      %v2247 = vor.u32 %v2246, %v2242
      %v2248 = vrot.slane %v2247, 4
      %v2250 = vshll.u32 %v2016, 16
      %v2252 = vrot.slane %v2250, 5
      %v2253 = vsel %vm233, %v2248, %v2252
      %v2255 = vshrl.u32 %v2017, 16
      %v2257 = vrot.slane %v2255, 4
      %v2258 = vshll.u32 %v2017, 16
      %v2260 = vrot.slane %v2258, 5
      %v2261 = vor.u32 %v2257, %v2260
      %v2262 = vrot.slane %v2261, 4
      %v2264 = vshll.u32 %v2018, 16
      %v2266 = vrot.slane %v2264, 5
      %v2267 = vsel %vm233, %v2262, %v2266
      %v2268 = vshrl.u32 %v2018, 16
      %v2270 = vrot.slane %v2268, 4
      %v2271 = vor.u32 %v2270, %v2266
      %v2272 = vrot.slane %v2271, 4
      %v2274 = vshll.u32 %v2019, 16
      %v2276 = vrot.slane %v2274, 5
      %v2277 = vsel %vm233, %v2272, %v2276
      %v2279 = vshrl.u32 %v2020, 16
      %v2281 = vrot.slane %v2279, 4
      %v2282 = vshll.u32 %v2020, 16
      %v2284 = vrot.slane %v2282, 5
      %v2285 = vor.u32 %v2281, %v2284
      %v2286 = vrot.slane %v2285, 4
      %v2288 = vshll.u32 %v2021, 16
      %v2290 = vrot.slane %v2288, 5
      %v2291 = vsel %vm233, %v2286, %v2290
      %v2292 = vshrl.u32 %v2021, 16
      %v2294 = vrot.slane %v2292, 4
      %v2295 = vor.u32 %v2294, %v2290
      %v2296 = vrot.slane %v2295, 4
      %v2298 = vshll.u32 %v2022, 16
      %v2300 = vrot.slane %v2298, 5
      %v2301 = vsel %vm233, %v2296, %v2300
      %v2303 = vshrl.u32 %v2023, 16
      %v2305 = vrot.slane %v2303, 4
      %v2306 = vshll.u32 %v2023, 16
      %v2308 = vrot.slane %v2306, 5
      %v2309 = vor.u32 %v2305, %v2308
      %v2310 = vrot.slane %v2309, 4
      %v2312 = vshll.u32 %v2024, 16
      %v2314 = vrot.slane %v2312, 5
      %v2315 = vsel %vm233, %v2310, %v2314
      %v2316 = vshrl.u32 %v2024, 16
      %v2318 = vrot.slane %v2316, 4
      %v2319 = vor.u32 %v2318, %v2314
      %v2320 = vrot.slane %v2319, 4
      %v2322 = vshll.u32 %v2025, 16
      %v2324 = vrot.slane %v2322, 5
      %v2325 = vsel %vm233, %v2320, %v2324
      %v2327 = vshrl.u32 %v2026, 16
      %v2329 = vrot.slane %v2327, 4
      %v2330 = vshll.u32 %v2026, 16
      %v2332 = vrot.slane %v2330, 5
      %v2333 = vor.u32 %v2329, %v2332
      %v2334 = vrot.slane %v2333, 4
      %v2336 = vshll.u32 %v2027, 16
      %v2338 = vrot.slane %v2336, 5
      %v2339 = vsel %vm233, %v2334, %v2338
      %v2340 = vshrl.u32 %v2027, 16
      %v2342 = vrot.slane %v2340, 4
      %v2343 = vor.u32 %v2342, %v2338
      %v2344 = vrot.slane %v2343, 4
      %v2346 = vshll.u32 %v2028, 16
      %v2348 = vrot.slane %v2346, 5
      %v2349 = vsel %vm233, %v2344, %v2348
      %v2351 = vshrl.u32 %v2029, 16
      %v2353 = vrot.slane %v2351, 4
      %v2354 = vshll.u32 %v2029, 16
      %v2356 = vrot.slane %v2354, 5
      %v2357 = vor.u32 %v2353, %v2356
      %v2358 = vrot.slane %v2357, 4
      %v2360 = vshll.u32 %v2030, 16
      %v2362 = vrot.slane %v2360, 5
      %v2363 = vsel %vm233, %v2358, %v2362
      %v2364 = vshrl.u32 %v2030, 16
      %v2366 = vrot.slane %v2364, 4
      %v2367 = vor.u32 %v2366, %v2362
      %v2368 = vrot.slane %v2367, 4
      %v2370 = vshll.u32 %v2031, 16
      %v2372 = vrot.slane %v2370, 5
      %v2373 = vsel %vm233, %v2368, %v2372
      %v2375 = vshrl.u32 %v2032, 16
      %v2377 = vrot.slane %v2375, 4
      %v2378 = vshll.u32 %v2032, 16
      %v2380 = vrot.slane %v2378, 5
      %v2381 = vor.u32 %v2377, %v2380
      %v2382 = vrot.slane %v2381, 4
      %v2384 = vshll.u32 %v2033, 16
      %v2386 = vrot.slane %v2384, 5
      %v2387 = vsel %vm233, %v2382, %v2386
      %v2388 = vshrl.u32 %v2033, 16
      %v2390 = vrot.slane %v2388, 4
      %v2391 = vor.u32 %v2390, %v2386
      %v2392 = vrot.slane %v2391, 4
      %v2394 = vshll.u32 %v2034, 16
      %v2396 = vrot.slane %v2394, 5
      %v2397 = vsel %vm233, %v2392, %v2396
      %v2399 = vshrl.u32 %v2035, 16
      %v2401 = vrot.slane %v2399, 4
      %v2402 = vshll.u32 %v2035, 16
      %v2404 = vrot.slane %v2402, 5
      %v2405 = vor.u32 %v2401, %v2404
      %v2406 = vrot.slane %v2405, 4
      %v2408 = vshll.u32 %v2036, 16
      %v2410 = vrot.slane %v2408, 5
      %v2411 = vsel %vm233, %v2406, %v2410
      %v2412 = vshrl.u32 %v2036, 16
      %v2414 = vrot.slane %v2412, 4
      %v2415 = vor.u32 %v2414, %v2410
      %v2416 = vrot.slane %v2415, 4
      %v2418 = vshll.u32 %v2037, 16
      %v2420 = vrot.slane %v2418, 5
      %v2421 = vsel %vm233, %v2416, %v2420
      %s2422 = scalar_lea.vmem %s172, 8
      %v2423 = vld [vmem:[%s2422] sm:$0x3]
      %v2424 = vunpack.c.l.b16 %v2051
      %v2425 = vunpack.c.l.b16 %v2061
      %v2426 = vunpack.c.l.b16 %v2075
      %v2427 = vunpack.c.l.b16 %v2085
      %v2428 = vunpack.c.l.b16 %v2099
      %v2429 = vunpack.c.l.b16 %v2109
      %v2430 = vunpack.c.l.b16 %v2123
      %v2431 = vunpack.c.l.b16 %v2133
      %v2432 = vunpack.c.l.b16 %v2147
      %v2433 = vunpack.c.l.b16 %v2157
      %v2434 = vunpack.c.l.b16 %v2171
      %v2435 = vunpack.c.l.b16 %v2181
      %v2436 = vunpack.c.l.b16 %v2195
      %v2437 = vunpack.c.l.b16 %v2205
      %v2438 = vunpack.c.l.b16 %v2219
      %v2439 = vunpack.c.l.b16 %v2229
      %v2440 = vunpack.c.l.b16 %v2243
      %v2441 = vunpack.c.l.b16 %v2253
      %v2442 = vunpack.c.l.b16 %v2267
      %v2443 = vunpack.c.l.b16 %v2277
      %v2444 = vunpack.c.l.b16 %v2291
      %v2445 = vunpack.c.l.b16 %v2301
      %v2446 = vunpack.c.l.b16 %v2315
      %v2447 = vunpack.c.l.b16 %v2325
      %v2448 = vunpack.c.l.b16 %v2339
      %v2449 = vunpack.c.l.b16 %v2349
      %v2450 = vunpack.c.l.b16 %v2363
      %v2451 = vunpack.c.l.b16 %v2373
      %v2452 = vunpack.c.l.b16 %v2387
      %v2453 = vunpack.c.l.b16 %v2397
      %v2454 = vunpack.c.l.b16 %v2411
      %v2455 = vunpack.c.l.b16 %v2421
      %v2456 = vpack.c.b16 %v2425, %v2424
      %v2457 = vpack.c.b16 %v2427, %v2426
      %v2458 = vpack.c.b16 %v2429, %v2428
      %v2459 = vpack.c.b16 %v2431, %v2430
      %v2460 = vpack.c.b16 %v2433, %v2432
      %v2461 = vpack.c.b16 %v2435, %v2434
      %v2462 = vpack.c.b16 %v2437, %v2436
      %v2463 = vpack.c.b16 %v2439, %v2438
      %v2464 = vpack.c.b16 %v2441, %v2440
      %v2465 = vpack.c.b16 %v2443, %v2442
      %v2466 = vpack.c.b16 %v2445, %v2444
      %v2467 = vpack.c.b16 %v2447, %v2446
      %v2468 = vpack.c.b16 %v2449, %v2448
      %v2469 = vpack.c.b16 %v2451, %v2450
      %v2470 = vpack.c.b16 %v2453, %v2452
      %v2471 = vpack.c.b16 %v2455, %v2454
      %v2473 = vsel %vm668, %v2456, 0
      %v2476 = vsel %vm668, %v2457, 0
      %v2479 = vsel %vm668, %v2458, 0
      %v2482 = vsel %vm668, %v2459, 0
      %v2485 = vsel %vm668, %v2460, 0
      %v2488 = vsel %vm668, %v2461, 0
      %v2491 = vsel %vm668, %v2462, 0
      %v2494 = vsel %vm668, %v2463, 0
      %v2497 = vsel %vm668, %v2464, 0
      %v2500 = vsel %vm668, %v2465, 0
      %v2503 = vsel %vm668, %v2466, 0
      %v2506 = vsel %vm668, %v2467, 0
      %v2509 = vsel %vm668, %v2468, 0
      %v2512 = vsel %vm668, %v2469, 0
      %v2515 = vsel %vm668, %v2470, 0
      %v2518 = vsel %vm668, %v2471, 0
      %v2521 = vsel %vm717, %v2423, 0
      %2523 = vmatprep.subr.bf16.mxu0 0
      %2524 = vmatpush1.bf16.msra.mxu0 %v2521
      %2525 = vmatprep.subr.bf16.mxu0 0
      %2526 = vmatpush1.bf16.msra.mxu0 0
      %2527 = vmatprep.subr.bf16.mxu0 0
      %2528 = vmatpush1.bf16.msra.mxu0 0
      %2529 = vmatprep.subr.bf16.mxu0 0
      %2530 = vmatpush1.bf16.msra.mxu0 0
      %2531 = vmatprep.subr.bf16.mxu0 0
      %2532 = vmatpush1.bf16.msra.mxu0 0
      %2533 = vmatprep.subr.bf16.mxu0 0
      %2534 = vmatpush1.bf16.msra.mxu0 0
      %2535 = vmatprep.subr.bf16.mxu0 0
      %2536 = vmatpush1.bf16.msra.mxu0 0
      %2537 = vmatprep.subr.bf16.mxu0 0
      %2538 = vmatpush1.bf16.msra.mxu0 0
      %2539 = vmatprep.subr.bf16.mxu0 0
      %2540 = vmatpush1.bf16.msra.mxu0 0
      %2541 = vmatprep.subr.bf16.mxu0 0
      %2542 = vmatpush1.bf16.msra.mxu0 0
      %2543 = vmatprep.subr.bf16.mxu0 0
      %2544 = vmatpush1.bf16.msra.mxu0 0
      %2545 = vmatprep.subr.bf16.mxu0 0
      %2546 = vmatpush1.bf16.msra.mxu0 0
      %2547 = vmatprep.subr.bf16.mxu0 0
      %2548 = vmatpush1.bf16.msra.mxu0 0
      %2549 = vmatprep.subr.bf16.mxu0 0
      %2550 = vmatpush1.bf16.msra.mxu0 0
      %2551 = vmatprep.subr.bf16.mxu0 0
      %2552 = vmatpush1.bf16.msra.mxu0 0
      %2553 = vmatprep.subr.bf16.mxu0 0
      %2554 = vmatpush1.bf16.msra.mxu0 0
      %2555 = vmatprep.mubr.bf16.mxu0 0
      %2556 = vmatmul.mubr.bf16.gmra.mrb[0].mxu0 %v2473
      %v2557 = vpop.f32.mrb[0].mxu0
      %v2558 = vadd.f32 0.0, %v2557
      %v2559 = vpop.f32.mrb[0].mxu0
      %v2560 = vpop.f32.mrb[0].mxu0
      %v2561 = vadd.f32 0.0, %v2560
      %v2562 = vpop.f32.mrb[0].mxu0
      %2563 = vmatprep.mubr.bf16.mxu0 0
      %2564 = vmatmul.mubr.bf16.gmra.mrb[0].mxu0 %v2476
      %v2565 = vpop.f32.mrb[0].mxu0
      %v2566 = vadd.f32 0.0, %v2565
      %v2567 = vpop.f32.mrb[0].mxu0
      %v2568 = vpop.f32.mrb[0].mxu0
      %v2569 = vadd.f32 0.0, %v2568
      %v2570 = vpop.f32.mrb[0].mxu0
      %2571 = vmatprep.mubr.bf16.mxu0 0
      %2572 = vmatmul.mubr.bf16.gmra.mrb[0].mxu0 %v2479
      %v2573 = vpop.f32.mrb[0].mxu0
      %v2574 = vadd.f32 0.0, %v2573
      %v2575 = vpop.f32.mrb[0].mxu0
      %v2576 = vpop.f32.mrb[0].mxu0
      %v2577 = vadd.f32 0.0, %v2576
      %v2578 = vpop.f32.mrb[0].mxu0
      %2579 = vmatprep.mubr.bf16.mxu0 0
      %2580 = vmatmul.mubr.bf16.gmra.mrb[0].mxu0 %v2482
      %v2581 = vpop.f32.mrb[0].mxu0
      %v2582 = vadd.f32 0.0, %v2581
      %v2583 = vpop.f32.mrb[0].mxu0
      %v2584 = vpop.f32.mrb[0].mxu0
      %v2585 = vadd.f32 0.0, %v2584
      %v2586 = vpop.f32.mrb[0].mxu0
      %2587 = vmatprep.mubr.bf16.mxu0 0
      %2588 = vmatmul.mubr.bf16.gmra.mrb[0].mxu0 %v2485
      %v2589 = vpop.f32.mrb[0].mxu0
      %v2590 = vadd.f32 0.0, %v2589
      %v2591 = vpop.f32.mrb[0].mxu0
      %v2592 = vpop.f32.mrb[0].mxu0
      %v2593 = vadd.f32 0.0, %v2592
      %v2594 = vpop.f32.mrb[0].mxu0
      %2595 = vmatprep.mubr.bf16.mxu0 0
      %2596 = vmatmul.mubr.bf16.gmra.mrb[0].mxu0 %v2488
      %v2597 = vpop.f32.mrb[0].mxu0
      %v2598 = vadd.f32 0.0, %v2597
      %v2599 = vpop.f32.mrb[0].mxu0
      %v2600 = vpop.f32.mrb[0].mxu0
      %v2601 = vadd.f32 0.0, %v2600
      %v2602 = vpop.f32.mrb[0].mxu0
      %2603 = vmatprep.mubr.bf16.mxu0 0
      %2604 = vmatmul.mubr.bf16.gmra.mrb[0].mxu0 %v2491
      %v2605 = vpop.f32.mrb[0].mxu0
      %v2606 = vadd.f32 0.0, %v2605
      %v2607 = vpop.f32.mrb[0].mxu0
      %v2608 = vpop.f32.mrb[0].mxu0
      %v2609 = vadd.f32 0.0, %v2608
      %v2610 = vpop.f32.mrb[0].mxu0
      %2611 = vmatprep.mubr.bf16.mxu0 0
      %2612 = vmatmul.mubr.bf16.gmra.mrb[0].mxu0 %v2494
      %v2613 = vpop.f32.mrb[0].mxu0
      %v2614 = vadd.f32 0.0, %v2613
      %v2615 = vpop.f32.mrb[0].mxu0
      %v2616 = vpop.f32.mrb[0].mxu0
      %v2617 = vadd.f32 0.0, %v2616
      %v2618 = vpop.f32.mrb[0].mxu0
      %2619 = vmatprep.mubr.bf16.mxu0 0
      %2620 = vmatmul.mubr.bf16.gmra.mrb[0].mxu0 %v2497
      %v2621 = vpop.f32.mrb[0].mxu0
      %v2622 = vadd.f32 0.0, %v2621
      %v2623 = vpop.f32.mrb[0].mxu0
      %v2624 = vpop.f32.mrb[0].mxu0
      %v2625 = vadd.f32 0.0, %v2624
      %v2626 = vpop.f32.mrb[0].mxu0
      %2627 = vmatprep.mubr.bf16.mxu0 0
      %2628 = vmatmul.mubr.bf16.gmra.mrb[0].mxu0 %v2500
      %v2629 = vpop.f32.mrb[0].mxu0
      %v2630 = vadd.f32 0.0, %v2629
      %v2631 = vpop.f32.mrb[0].mxu0
      %v2632 = vpop.f32.mrb[0].mxu0
      %v2633 = vadd.f32 0.0, %v2632
      %v2634 = vpop.f32.mrb[0].mxu0
      %2635 = vmatprep.mubr.bf16.mxu0 0
      %2636 = vmatmul.mubr.bf16.gmra.mrb[0].mxu0 %v2503
      %v2637 = vpop.f32.mrb[0].mxu0
      %v2638 = vadd.f32 0.0, %v2637
      %v2639 = vpop.f32.mrb[0].mxu0
      %v2640 = vpop.f32.mrb[0].mxu0
      %v2641 = vadd.f32 0.0, %v2640
      %v2642 = vpop.f32.mrb[0].mxu0
      %2643 = vmatprep.mubr.bf16.mxu0 0
      %2644 = vmatmul.mubr.bf16.gmra.mrb[0].mxu0 %v2506
      %v2645 = vpop.f32.mrb[0].mxu0
      %v2646 = vadd.f32 0.0, %v2645
      %v2647 = vpop.f32.mrb[0].mxu0
      %v2648 = vpop.f32.mrb[0].mxu0
      %v2649 = vadd.f32 0.0, %v2648
      %v2650 = vpop.f32.mrb[0].mxu0
      %2651 = vmatprep.mubr.bf16.mxu0 0
      %2652 = vmatmul.mubr.bf16.gmra.mrb[0].mxu0 %v2509
      %v2653 = vpop.f32.mrb[0].mxu0
      %v2654 = vadd.f32 0.0, %v2653
      %v2655 = vpop.f32.mrb[0].mxu0
      %v2656 = vpop.f32.mrb[0].mxu0
      %v2657 = vadd.f32 0.0, %v2656
      %v2658 = vpop.f32.mrb[0].mxu0
      %2659 = vmatprep.mubr.bf16.mxu0 0
      %2660 = vmatmul.mubr.bf16.gmra.mrb[0].mxu0 %v2512
      %v2661 = vpop.f32.mrb[0].mxu0
      %v2662 = vadd.f32 0.0, %v2661
      %v2663 = vpop.f32.mrb[0].mxu0
      %v2664 = vpop.f32.mrb[0].mxu0
      %v2665 = vadd.f32 0.0, %v2664
      %v2666 = vpop.f32.mrb[0].mxu0
      %2667 = vmatprep.mubr.bf16.mxu0 0
      %2668 = vmatmul.mubr.bf16.gmra.mrb[0].mxu0 %v2515
      %v2669 = vpop.f32.mrb[0].mxu0
      %v2670 = vadd.f32 0.0, %v2669
      %v2671 = vpop.f32.mrb[0].mxu0
      %v2672 = vpop.f32.mrb[0].mxu0
      %v2673 = vadd.f32 0.0, %v2672
      %v2674 = vpop.f32.mrb[0].mxu0
      %2675 = vmatprep.mubr.bf16.mxu0 0
      %2676 = vmatmul.mubr.bf16.gmra.mrb[0].mxu0 %v2518
      %v2677 = vpop.f32.mrb[0].mxu0
      %v2678 = vadd.f32 0.0, %v2677
      %v2679 = vpop.f32.mrb[0].mxu0
      %v2680 = vpop.f32.mrb[0].mxu0
      %v2681 = vadd.f32 0.0, %v2680
      %v2682 = vpop.f32.mrb[0].mxu0
      %2683 = vdwg.mxu0
      %v2684 = vadd.f32 %v1958, %v2558
      %v2685 = vadd.f32 %v1959, %v2561
      %v2686 = vadd.f32 %v1960, %v2566
      %v2687 = vadd.f32 %v1961, %v2569
      %v2688 = vadd.f32 %v1962, %v2574
      %v2689 = vadd.f32 %v1963, %v2577
      %v2690 = vadd.f32 %v1964, %v2582
      %v2691 = vadd.f32 %v1965, %v2585
      %v2692 = vadd.f32 %v1966, %v2590
      %v2693 = vadd.f32 %v1967, %v2593
      %v2694 = vadd.f32 %v1968, %v2598
      %v2695 = vadd.f32 %v1969, %v2601
      %v2696 = vadd.f32 %v1970, %v2606
      %v2697 = vadd.f32 %v1971, %v2609
      %v2698 = vadd.f32 %v1972, %v2614
      %v2699 = vadd.f32 %v1973, %v2617
      %v2700 = vadd.f32 %v1974, %v2622
      %v2701 = vadd.f32 %v1975, %v2625
      %v2702 = vadd.f32 %v1976, %v2630
      %v2703 = vadd.f32 %v1977, %v2633
      %v2704 = vadd.f32 %v1978, %v2638
      %v2705 = vadd.f32 %v1979, %v2641
      %v2706 = vadd.f32 %v1980, %v2646
      %v2707 = vadd.f32 %v1981, %v2649
      %v2708 = vadd.f32 %v1982, %v2654
      %v2709 = vadd.f32 %v1983, %v2657
      %v2710 = vadd.f32 %v1984, %v2662
      %v2711 = vadd.f32 %v1985, %v2665
      %v2712 = vadd.f32 %v1986, %v2670
      %v2713 = vadd.f32 %v1987, %v2673
      %v2714 = vadd.f32 %v1988, %v2678
      %v2715 = vadd.f32 %v1989, %v2681
      %v2716 = vld [vmem:[%s1631] sm:$0xe]
      %v2717 = vld [vmem:[%s1631 + $0xc] sm:$0xe]
      %v2718 = vld [vmem:[%s1631 + $0x18] sm:$0xe]
      %v2719 = vld [vmem:[%s1631 + $0x24] sm:$0xe]
      %v2720 = vld [vmem:[%s1631 + $0x30] sm:$0xe]
      %v2721 = vld [vmem:[%s1631 + $0x3c] sm:$0xe]
      %v2722 = vld [vmem:[%s1631 + $0x48] sm:$0xe]
      %v2723 = vld [vmem:[%s1631 + $0x54] sm:$0xe]
      %v2724 = vld [vmem:[%s1631 + $0x60] sm:$0xe]
      %v2725 = vld [vmem:[%s1631 + $0x6c] sm:$0xe]
      %v2726 = vld [vmem:[%s1631 + $0x78] sm:$0xe]
      %v2727 = vld [vmem:[%s1631 + $0x84] sm:$0xe]
      %v2728 = vld [vmem:[%s1631 + $0x90] sm:$0xe]
      %v2729 = vld [vmem:[%s1631 + $0x9c] sm:$0xe]
      %v2730 = vld [vmem:[%s1631 + $0xa8] sm:$0xe]
      %v2731 = vld [vmem:[%s1631 + $0xb4] sm:$0xe]
      %v2780 = vrot.slane %v2716, 5
      %v2781 = vrot.slane %v2780, 4
      %v2782 = vrot.slane %v1991, 5
      %v2783 = vsel %vm1224, %v2781, %v2782
      %v2784 = vrot.slane %v2782, 4
      %v2785 = vrot.slane %v1992, 5
      %v2786 = vsel %vm1224, %v2784, %v2785
      %v2787 = vrot.slane %v2717, 5
      %v2788 = vrot.slane %v2787, 4
      %v2789 = vrot.slane %v1994, 5
      %v2790 = vsel %vm1224, %v2788, %v2789
      %v2791 = vrot.slane %v2789, 4
      %v2792 = vrot.slane %v1995, 5
      %v2793 = vsel %vm1224, %v2791, %v2792
      %v2794 = vrot.slane %v2718, 5
      %v2795 = vrot.slane %v2794, 4
      %v2796 = vrot.slane %v1997, 5
      %v2797 = vsel %vm1224, %v2795, %v2796
      %v2798 = vrot.slane %v2796, 4
      %v2799 = vrot.slane %v1998, 5
      %v2800 = vsel %vm1224, %v2798, %v2799
      %v2801 = vrot.slane %v2719, 5
      %v2802 = vrot.slane %v2801, 4
      %v2803 = vrot.slane %v2000, 5
      %v2804 = vsel %vm1224, %v2802, %v2803
      %v2805 = vrot.slane %v2803, 4
      %v2806 = vrot.slane %v2001, 5
      %v2807 = vsel %vm1224, %v2805, %v2806
      %v2808 = vrot.slane %v2720, 5
      %v2809 = vrot.slane %v2808, 4
      %v2810 = vrot.slane %v2003, 5
      %v2811 = vsel %vm1224, %v2809, %v2810
      %v2812 = vrot.slane %v2810, 4
      %v2813 = vrot.slane %v2004, 5
      %v2814 = vsel %vm1224, %v2812, %v2813
      %v2815 = vrot.slane %v2721, 5
      %v2816 = vrot.slane %v2815, 4
      %v2817 = vrot.slane %v2006, 5
      %v2818 = vsel %vm1224, %v2816, %v2817
      %v2819 = vrot.slane %v2817, 4
      %v2820 = vrot.slane %v2007, 5
      %v2821 = vsel %vm1224, %v2819, %v2820
      %v2822 = vrot.slane %v2722, 5
      %v2823 = vrot.slane %v2822, 4
      %v2824 = vrot.slane %v2009, 5
      %v2825 = vsel %vm1224, %v2823, %v2824
      %v2826 = vrot.slane %v2824, 4
      %v2827 = vrot.slane %v2010, 5
      %v2828 = vsel %vm1224, %v2826, %v2827
      %v2829 = vrot.slane %v2723, 5
      %v2830 = vrot.slane %v2829, 4
      %v2831 = vrot.slane %v2012, 5
      %v2832 = vsel %vm1224, %v2830, %v2831
      %v2833 = vrot.slane %v2831, 4
      %v2834 = vrot.slane %v2013, 5
      %v2835 = vsel %vm1224, %v2833, %v2834
      %v2836 = vrot.slane %v2724, 5
      %v2837 = vrot.slane %v2836, 4
      %v2838 = vrot.slane %v2015, 5
      %v2839 = vsel %vm1224, %v2837, %v2838
      %v2840 = vrot.slane %v2838, 4
      %v2841 = vrot.slane %v2016, 5
      %v2842 = vsel %vm1224, %v2840, %v2841
      %v2843 = vrot.slane %v2725, 5
      %v2844 = vrot.slane %v2843, 4
      %v2845 = vrot.slane %v2018, 5
      %v2846 = vsel %vm1224, %v2844, %v2845
      %v2847 = vrot.slane %v2845, 4
      %v2848 = vrot.slane %v2019, 5
      %v2849 = vsel %vm1224, %v2847, %v2848
      %v2850 = vrot.slane %v2726, 5
      %v2851 = vrot.slane %v2850, 4
      %v2852 = vrot.slane %v2021, 5
      %v2853 = vsel %vm1224, %v2851, %v2852
      %v2854 = vrot.slane %v2852, 4
      %v2855 = vrot.slane %v2022, 5
      %v2856 = vsel %vm1224, %v2854, %v2855
      %v2857 = vrot.slane %v2727, 5
      %v2858 = vrot.slane %v2857, 4
      %v2859 = vrot.slane %v2024, 5
      %v2860 = vsel %vm1224, %v2858, %v2859
      %v2861 = vrot.slane %v2859, 4
      %v2862 = vrot.slane %v2025, 5
      %v2863 = vsel %vm1224, %v2861, %v2862
      %v2864 = vrot.slane %v2728, 5
      %v2865 = vrot.slane %v2864, 4
      %v2866 = vrot.slane %v2027, 5
      %v2867 = vsel %vm1224, %v2865, %v2866
      %v2868 = vrot.slane %v2866, 4
      %v2869 = vrot.slane %v2028, 5
      %v2870 = vsel %vm1224, %v2868, %v2869
      %v2871 = vrot.slane %v2729, 5
      %v2872 = vrot.slane %v2871, 4
      %v2873 = vrot.slane %v2030, 5
      %v2874 = vsel %vm1224, %v2872, %v2873
      %v2875 = vrot.slane %v2873, 4
      %v2876 = vrot.slane %v2031, 5
      %v2877 = vsel %vm1224, %v2875, %v2876
      %v2878 = vrot.slane %v2730, 5
      %v2879 = vrot.slane %v2878, 4
      %v2880 = vrot.slane %v2033, 5
      %v2881 = vsel %vm1224, %v2879, %v2880
      %v2882 = vrot.slane %v2880, 4
      %v2883 = vrot.slane %v2034, 5
      %v2884 = vsel %vm1224, %v2882, %v2883
      %v2885 = vrot.slane %v2731, 5
      %v2886 = vrot.slane %v2885, 4
      %v2887 = vrot.slane %v2036, 5
      %v2888 = vsel %vm1224, %v2886, %v2887
      %v2889 = vrot.slane %v2887, 4
      %v2890 = vrot.slane %v2037, 5
      %v2891 = vsel %vm1224, %v2889, %v2890
      %s2892 = scalar_lea.vmem %s172, 10
      %v2893 = vld [vmem:[%s2892] sm:$0x3]
      %v2894 = vunpack.c.l.b16 %v2783
      %v2895 = vunpack.c.l.b16 %v2786
      %v2896 = vunpack.c.l.b16 %v2790
      %v2897 = vunpack.c.l.b16 %v2793
      %v2898 = vunpack.c.l.b16 %v2797
      %v2899 = vunpack.c.l.b16 %v2800
      %v2900 = vunpack.c.l.b16 %v2804
      %v2901 = vunpack.c.l.b16 %v2807
      %v2902 = vunpack.c.l.b16 %v2811
      %v2903 = vunpack.c.l.b16 %v2814
      %v2904 = vunpack.c.l.b16 %v2818
      %v2905 = vunpack.c.l.b16 %v2821
      %v2906 = vunpack.c.l.b16 %v2825
      %v2907 = vunpack.c.l.b16 %v2828
      %v2908 = vunpack.c.l.b16 %v2832
      %v2909 = vunpack.c.l.b16 %v2835
      %v2910 = vunpack.c.l.b16 %v2839
      %v2911 = vunpack.c.l.b16 %v2842
      %v2912 = vunpack.c.l.b16 %v2846
      %v2913 = vunpack.c.l.b16 %v2849
      %v2914 = vunpack.c.l.b16 %v2853
      %v2915 = vunpack.c.l.b16 %v2856
      %v2916 = vunpack.c.l.b16 %v2860
      %v2917 = vunpack.c.l.b16 %v2863
      %v2918 = vunpack.c.l.b16 %v2867
      %v2919 = vunpack.c.l.b16 %v2870
      %v2920 = vunpack.c.l.b16 %v2874
      %v2921 = vunpack.c.l.b16 %v2877
      %v2922 = vunpack.c.l.b16 %v2881
      %v2923 = vunpack.c.l.b16 %v2884
      %v2924 = vunpack.c.l.b16 %v2888
      %v2925 = vunpack.c.l.b16 %v2891
      %v2926 = vpack.c.b16 %v2895, %v2894
      %v2927 = vpack.c.b16 %v2897, %v2896
      %v2928 = vpack.c.b16 %v2899, %v2898
      %v2929 = vpack.c.b16 %v2901, %v2900
      %v2930 = vpack.c.b16 %v2903, %v2902
      %v2931 = vpack.c.b16 %v2905, %v2904
      %v2932 = vpack.c.b16 %v2907, %v2906
      %v2933 = vpack.c.b16 %v2909, %v2908
      %v2934 = vpack.c.b16 %v2911, %v2910
      %v2935 = vpack.c.b16 %v2913, %v2912
      %v2936 = vpack.c.b16 %v2915, %v2914
      %v2937 = vpack.c.b16 %v2917, %v2916
      %v2938 = vpack.c.b16 %v2919, %v2918
      %v2939 = vpack.c.b16 %v2921, %v2920
      %v2940 = vpack.c.b16 %v2923, %v2922
      %v2941 = vpack.c.b16 %v2925, %v2924
      %v2943 = vsel %vm668, %v2926, 0
      %v2946 = vsel %vm668, %v2927, 0
      %v2949 = vsel %vm668, %v2928, 0
      %v2952 = vsel %vm668, %v2929, 0
      %v2955 = vsel %vm668, %v2930, 0
      %v2958 = vsel %vm668, %v2931, 0
      %v2961 = vsel %vm668, %v2932, 0
      %v2964 = vsel %vm668, %v2933, 0
      %v2967 = vsel %vm668, %v2934, 0
      %v2970 = vsel %vm668, %v2935, 0
      %v2973 = vsel %vm668, %v2936, 0
      %v2976 = vsel %vm668, %v2937, 0
      %v2979 = vsel %vm668, %v2938, 0
      %v2982 = vsel %vm668, %v2939, 0
      %v2985 = vsel %vm668, %v2940, 0
      %v2988 = vsel %vm668, %v2941, 0
      %v2991 = vsel %vm717, %v2893, 0
      %2993 = vmatprep.subr.bf16.mxu0 0
      %2994 = vmatpush1.bf16.msra.mxu0 %v2991
      %2995 = vmatprep.subr.bf16.mxu0 0
      %2996 = vmatpush1.bf16.msra.mxu0 0
      %2997 = vmatprep.subr.bf16.mxu0 0
      %2998 = vmatpush1.bf16.msra.mxu0 0
      %2999 = vmatprep.subr.bf16.mxu0 0
      %3000 = vmatpush1.bf16.msra.mxu0 0
      %3001 = vmatprep.subr.bf16.mxu0 0
      %3002 = vmatpush1.bf16.msra.mxu0 0
      %3003 = vmatprep.subr.bf16.mxu0 0
      %3004 = vmatpush1.bf16.msra.mxu0 0
      %3005 = vmatprep.subr.bf16.mxu0 0
      %3006 = vmatpush1.bf16.msra.mxu0 0
      %3007 = vmatprep.subr.bf16.mxu0 0
      %3008 = vmatpush1.bf16.msra.mxu0 0
      %3009 = vmatprep.subr.bf16.mxu0 0
      %3010 = vmatpush1.bf16.msra.mxu0 0
      %3011 = vmatprep.subr.bf16.mxu0 0
      %3012 = vmatpush1.bf16.msra.mxu0 0
      %3013 = vmatprep.subr.bf16.mxu0 0
      %3014 = vmatpush1.bf16.msra.mxu0 0
      %3015 = vmatprep.subr.bf16.mxu0 0
      %3016 = vmatpush1.bf16.msra.mxu0 0
      %3017 = vmatprep.subr.bf16.mxu0 0
      %3018 = vmatpush1.bf16.msra.mxu0 0
      %3019 = vmatprep.subr.bf16.mxu0 0
      %3020 = vmatpush1.bf16.msra.mxu0 0
      %3021 = vmatprep.subr.bf16.mxu0 0
      %3022 = vmatpush1.bf16.msra.mxu0 0
      %3023 = vmatprep.subr.bf16.mxu0 0
      %3024 = vmatpush1.bf16.msra.mxu0 0
      %3025 = vmatprep.mubr.bf16.mxu0 0
      %3026 = vmatmul.mubr.bf16.gmra.mrb[0].mxu0 %v2943
      %v3027 = vpop.f32.mrb[0].mxu0
      %v3028 = vadd.f32 0.0, %v3027
      %v3029 = vpop.f32.mrb[0].mxu0
      %v3030 = vpop.f32.mrb[0].mxu0
      %v3031 = vadd.f32 0.0, %v3030
      %v3032 = vpop.f32.mrb[0].mxu0
      %3033 = vmatprep.mubr.bf16.mxu0 0
      %3034 = vmatmul.mubr.bf16.gmra.mrb[0].mxu0 %v2946
      %v3035 = vpop.f32.mrb[0].mxu0
      %v3036 = vadd.f32 0.0, %v3035
      %v3037 = vpop.f32.mrb[0].mxu0
      %v3038 = vpop.f32.mrb[0].mxu0
      %v3039 = vadd.f32 0.0, %v3038
      %v3040 = vpop.f32.mrb[0].mxu0
      %3041 = vmatprep.mubr.bf16.mxu0 0
      %3042 = vmatmul.mubr.bf16.gmra.mrb[0].mxu0 %v2949
      %v3043 = vpop.f32.mrb[0].mxu0
      %v3044 = vadd.f32 0.0, %v3043
      %v3045 = vpop.f32.mrb[0].mxu0
      %v3046 = vpop.f32.mrb[0].mxu0
      %v3047 = vadd.f32 0.0, %v3046
      %v3048 = vpop.f32.mrb[0].mxu0
      %3049 = vmatprep.mubr.bf16.mxu0 0
      %3050 = vmatmul.mubr.bf16.gmra.mrb[0].mxu0 %v2952
      %v3051 = vpop.f32.mrb[0].mxu0
      %v3052 = vadd.f32 0.0, %v3051
      %v3053 = vpop.f32.mrb[0].mxu0
      %v3054 = vpop.f32.mrb[0].mxu0
      %v3055 = vadd.f32 0.0, %v3054
      %v3056 = vpop.f32.mrb[0].mxu0
      %3057 = vmatprep.mubr.bf16.mxu0 0
      %3058 = vmatmul.mubr.bf16.gmra.mrb[0].mxu0 %v2955
      %v3059 = vpop.f32.mrb[0].mxu0
      %v3060 = vadd.f32 0.0, %v3059
      %v3061 = vpop.f32.mrb[0].mxu0
      %v3062 = vpop.f32.mrb[0].mxu0
      %v3063 = vadd.f32 0.0, %v3062
      %v3064 = vpop.f32.mrb[0].mxu0
      %3065 = vmatprep.mubr.bf16.mxu0 0
      %3066 = vmatmul.mubr.bf16.gmra.mrb[0].mxu0 %v2958
      %v3067 = vpop.f32.mrb[0].mxu0
      %v3068 = vadd.f32 0.0, %v3067
      %v3069 = vpop.f32.mrb[0].mxu0
      %v3070 = vpop.f32.mrb[0].mxu0
      %v3071 = vadd.f32 0.0, %v3070
      %v3072 = vpop.f32.mrb[0].mxu0
      %3073 = vmatprep.mubr.bf16.mxu0 0
      %3074 = vmatmul.mubr.bf16.gmra.mrb[0].mxu0 %v2961
      %v3075 = vpop.f32.mrb[0].mxu0
      %v3076 = vadd.f32 0.0, %v3075
      %v3077 = vpop.f32.mrb[0].mxu0
      %v3078 = vpop.f32.mrb[0].mxu0
      %v3079 = vadd.f32 0.0, %v3078
      %v3080 = vpop.f32.mrb[0].mxu0
      %3081 = vmatprep.mubr.bf16.mxu0 0
      %3082 = vmatmul.mubr.bf16.gmra.mrb[0].mxu0 %v2964
      %v3083 = vpop.f32.mrb[0].mxu0
      %v3084 = vadd.f32 0.0, %v3083
      %v3085 = vpop.f32.mrb[0].mxu0
      %v3086 = vpop.f32.mrb[0].mxu0
      %v3087 = vadd.f32 0.0, %v3086
      %v3088 = vpop.f32.mrb[0].mxu0
      %3089 = vmatprep.mubr.bf16.mxu0 0
      %3090 = vmatmul.mubr.bf16.gmra.mrb[0].mxu0 %v2967
      %v3091 = vpop.f32.mrb[0].mxu0
      %v3092 = vadd.f32 0.0, %v3091
      %v3093 = vpop.f32.mrb[0].mxu0
      %v3094 = vpop.f32.mrb[0].mxu0
      %v3095 = vadd.f32 0.0, %v3094
      %v3096 = vpop.f32.mrb[0].mxu0
      %3097 = vmatprep.mubr.bf16.mxu0 0
      %3098 = vmatmul.mubr.bf16.gmra.mrb[0].mxu0 %v2970
      %v3099 = vpop.f32.mrb[0].mxu0
      %v3100 = vadd.f32 0.0, %v3099
      %v3101 = vpop.f32.mrb[0].mxu0
      %v3102 = vpop.f32.mrb[0].mxu0
      %v3103 = vadd.f32 0.0, %v3102
      %v3104 = vpop.f32.mrb[0].mxu0
      %3105 = vmatprep.mubr.bf16.mxu0 0
      %3106 = vmatmul.mubr.bf16.gmra.mrb[0].mxu0 %v2973
      %v3107 = vpop.f32.mrb[0].mxu0
      %v3108 = vadd.f32 0.0, %v3107
      %v3109 = vpop.f32.mrb[0].mxu0
      %v3110 = vpop.f32.mrb[0].mxu0
      %v3111 = vadd.f32 0.0, %v3110
      %v3112 = vpop.f32.mrb[0].mxu0
      %3113 = vmatprep.mubr.bf16.mxu0 0
      %3114 = vmatmul.mubr.bf16.gmra.mrb[0].mxu0 %v2976
      %v3115 = vpop.f32.mrb[0].mxu0
      %v3116 = vadd.f32 0.0, %v3115
      %v3117 = vpop.f32.mrb[0].mxu0
      %v3118 = vpop.f32.mrb[0].mxu0
      %v3119 = vadd.f32 0.0, %v3118
      %v3120 = vpop.f32.mrb[0].mxu0
      %3121 = vmatprep.mubr.bf16.mxu0 0
      %3122 = vmatmul.mubr.bf16.gmra.mrb[0].mxu0 %v2979
      %v3123 = vpop.f32.mrb[0].mxu0
      %v3124 = vadd.f32 0.0, %v3123
      %v3125 = vpop.f32.mrb[0].mxu0
      %v3126 = vpop.f32.mrb[0].mxu0
      %v3127 = vadd.f32 0.0, %v3126
      %v3128 = vpop.f32.mrb[0].mxu0
      %3129 = vmatprep.mubr.bf16.mxu0 0
      %3130 = vmatmul.mubr.bf16.gmra.mrb[0].mxu0 %v2982
      %v3131 = vpop.f32.mrb[0].mxu0
      %v3132 = vadd.f32 0.0, %v3131
      %v3133 = vpop.f32.mrb[0].mxu0
      %v3134 = vpop.f32.mrb[0].mxu0
      %v3135 = vadd.f32 0.0, %v3134
      %v3136 = vpop.f32.mrb[0].mxu0
      %3137 = vmatprep.mubr.bf16.mxu0 0
      %3138 = vmatmul.mubr.bf16.gmra.mrb[0].mxu0 %v2985
      %v3139 = vpop.f32.mrb[0].mxu0
      %v3140 = vadd.f32 0.0, %v3139
      %v3141 = vpop.f32.mrb[0].mxu0
      %v3142 = vpop.f32.mrb[0].mxu0
      %v3143 = vadd.f32 0.0, %v3142
      %v3144 = vpop.f32.mrb[0].mxu0
      %3145 = vmatprep.mubr.bf16.mxu0 0
      %3146 = vmatmul.mubr.bf16.gmra.mrb[0].mxu0 %v2988
      %v3147 = vpop.f32.mrb[0].mxu0
      %v3148 = vadd.f32 0.0, %v3147
      %v3149 = vpop.f32.mrb[0].mxu0
      %v3150 = vpop.f32.mrb[0].mxu0
      %v3151 = vadd.f32 0.0, %v3150
      %v3152 = vpop.f32.mrb[0].mxu0
      %3153 = vdwg.mxu0
      %v3154 = vadd.f32 %v2684, %v3028
      %v3155 = vadd.f32 %v2685, %v3031
      %v3156 = vadd.f32 %v2686, %v3036
      %v3157 = vadd.f32 %v2687, %v3039
      %v3158 = vadd.f32 %v2688, %v3044
      %v3159 = vadd.f32 %v2689, %v3047
      %v3160 = vadd.f32 %v2690, %v3052
      %v3161 = vadd.f32 %v2691, %v3055
      %v3162 = vadd.f32 %v2692, %v3060
      %v3163 = vadd.f32 %v2693, %v3063
      %v3164 = vadd.f32 %v2694, %v3068
      %v3165 = vadd.f32 %v2695, %v3071
      %v3166 = vadd.f32 %v2696, %v3076
      %v3167 = vadd.f32 %v2697, %v3079
      %v3168 = vadd.f32 %v2698, %v3084
      %v3169 = vadd.f32 %v2699, %v3087
      %v3170 = vadd.f32 %v2700, %v3092
      %v3171 = vadd.f32 %v2701, %v3095
      %v3172 = vadd.f32 %v2702, %v3100
      %v3173 = vadd.f32 %v2703, %v3103
      %v3174 = vadd.f32 %v2704, %v3108
      %v3175 = vadd.f32 %v2705, %v3111
      %v3176 = vadd.f32 %v2706, %v3116
      %v3177 = vadd.f32 %v2707, %v3119
      %v3178 = vadd.f32 %v2708, %v3124
      %v3179 = vadd.f32 %v2709, %v3127
      %v3180 = vadd.f32 %v2710, %v3132
      %v3181 = vadd.f32 %v2711, %v3135
      %v3182 = vadd.f32 %v2712, %v3140
      %v3183 = vadd.f32 %v2713, %v3143
      %v3184 = vadd.f32 %v2714, %v3148
      %v3185 = vadd.f32 %v2715, %v3151
      %s3186 = scalar_lea.vmem %s168, 24
      %v3187 = vld [vmem:[%s3186] sm:$0xf]
      %v3188 = vld [vmem:[%s3186 + $0x4] sm:$0xf]
      %v3189 = vld [vmem:[%s3186 + $0xc] sm:$0xf]
      %v3190 = vld [vmem:[%s3186 + $0x10] sm:$0xf]
      %v3191 = vld [vmem:[%s3186 + $0x18] sm:$0xf]
      %v3192 = vld [vmem:[%s3186 + $0x1c] sm:$0xf]
      %v3193 = vld [vmem:[%s3186 + $0x24] sm:$0xf]
      %v3194 = vld [vmem:[%s3186 + $0x28] sm:$0xf]
      %v3195 = vld [vmem:[%s3186 + $0x30] sm:$0xf]
      %v3196 = vld [vmem:[%s3186 + $0x34] sm:$0xf]
      %v3197 = vld [vmem:[%s3186 + $0x3c] sm:$0xf]
      %v3198 = vld [vmem:[%s3186 + $0x40] sm:$0xf]
      %v3199 = vld [vmem:[%s3186 + $0x48] sm:$0xf]
      %v3200 = vld [vmem:[%s3186 + $0x4c] sm:$0xf]
      %v3201 = vld [vmem:[%s3186 + $0x54] sm:$0xf]
      %v3202 = vld [vmem:[%s3186 + $0x58] sm:$0xf]
      %v3203 = vld [vmem:[%s3186 + $0x60] sm:$0xf]
      %v3204 = vld [vmem:[%s3186 + $0x64] sm:$0xf]
      %v3205 = vld [vmem:[%s3186 + $0x6c] sm:$0xf]
      %v3206 = vld [vmem:[%s3186 + $0x70] sm:$0xf]
      %v3207 = vld [vmem:[%s3186 + $0x78] sm:$0xf]
      %v3208 = vld [vmem:[%s3186 + $0x7c] sm:$0xf]
      %v3209 = vld [vmem:[%s3186 + $0x84] sm:$0xf]
      %v3210 = vld [vmem:[%s3186 + $0x88] sm:$0xf]
      %v3211 = vld [vmem:[%s3186 + $0x90] sm:$0xf]
      %v3212 = vld [vmem:[%s3186 + $0x94] sm:$0xf]
      %v3213 = vld [vmem:[%s3186 + $0x9c] sm:$0xf]
      %v3214 = vld [vmem:[%s3186 + $0xa0] sm:$0xf]
      %v3215 = vld [vmem:[%s3186 + $0xa8] sm:$0xf]
      %v3216 = vld [vmem:[%s3186 + $0xac] sm:$0xf]
      %v3217 = vld [vmem:[%s3186 + $0xb4] sm:$0xf]
      %v3218 = vld [vmem:[%s3186 + $0xb8] sm:$0xf]
      %s3219 = scalar_lea.vmem %s172, 12
      %v3220 = vld [vmem:[%s3219] sm:$0x3]
      %v3253 = vunpack.c.l.b16 %v3187
      %v3254 = vunpack.c.l.b16 %v3188
      %v3255 = vunpack.c.l.b16 %v3189
      %v3256 = vunpack.c.l.b16 %v3190
      %v3257 = vunpack.c.l.b16 %v3191
      %v3258 = vunpack.c.l.b16 %v3192
      %v3259 = vunpack.c.l.b16 %v3193
      %v3260 = vunpack.c.l.b16 %v3194
      %v3261 = vunpack.c.l.b16 %v3195
      %v3262 = vunpack.c.l.b16 %v3196
      %v3263 = vunpack.c.l.b16 %v3197
      %v3264 = vunpack.c.l.b16 %v3198
      %v3265 = vunpack.c.l.b16 %v3199
      %v3266 = vunpack.c.l.b16 %v3200
      %v3267 = vunpack.c.l.b16 %v3201
      %v3268 = vunpack.c.l.b16 %v3202
      %v3269 = vunpack.c.l.b16 %v3203
      %v3270 = vunpack.c.l.b16 %v3204
      %v3271 = vunpack.c.l.b16 %v3205
      %v3272 = vunpack.c.l.b16 %v3206
      %v3273 = vunpack.c.l.b16 %v3207
      %v3274 = vunpack.c.l.b16 %v3208
      %v3275 = vunpack.c.l.b16 %v3209
      %v3276 = vunpack.c.l.b16 %v3210
      %v3277 = vunpack.c.l.b16 %v3211
      %v3278 = vunpack.c.l.b16 %v3212
      %v3279 = vunpack.c.l.b16 %v3213
      %v3280 = vunpack.c.l.b16 %v3214
      %v3281 = vunpack.c.l.b16 %v3215
      %v3282 = vunpack.c.l.b16 %v3216
      %v3283 = vunpack.c.l.b16 %v3217
      %v3284 = vunpack.c.l.b16 %v3218
      %v3285 = vpack.c.b16 %v3254, %v3253
      %v3286 = vpack.c.b16 %v3256, %v3255
      %v3287 = vpack.c.b16 %v3258, %v3257
      %v3288 = vpack.c.b16 %v3260, %v3259
      %v3289 = vpack.c.b16 %v3262, %v3261
      %v3290 = vpack.c.b16 %v3264, %v3263
      %v3291 = vpack.c.b16 %v3266, %v3265
      %v3292 = vpack.c.b16 %v3268, %v3267
      %v3293 = vpack.c.b16 %v3270, %v3269
      %v3294 = vpack.c.b16 %v3272, %v3271
      %v3295 = vpack.c.b16 %v3274, %v3273
      %v3296 = vpack.c.b16 %v3276, %v3275
      %v3297 = vpack.c.b16 %v3278, %v3277
      %v3298 = vpack.c.b16 %v3280, %v3279
      %v3299 = vpack.c.b16 %v3282, %v3281
      %v3300 = vpack.c.b16 %v3284, %v3283
      %v3302 = vsel %vm668, %v3285, 0
      %v3305 = vsel %vm668, %v3286, 0
      %v3308 = vsel %vm668, %v3287, 0
      %v3311 = vsel %vm668, %v3288, 0
      %v3314 = vsel %vm668, %v3289, 0
      %v3317 = vsel %vm668, %v3290, 0
      %v3320 = vsel %vm668, %v3291, 0
      %v3323 = vsel %vm668, %v3292, 0
      %v3326 = vsel %vm668, %v3293, 0
      %v3329 = vsel %vm668, %v3294, 0
      %v3332 = vsel %vm668, %v3295, 0
      %v3335 = vsel %vm668, %v3296, 0
      %v3338 = vsel %vm668, %v3297, 0
      %v3341 = vsel %vm668, %v3298, 0
      %v3344 = vsel %vm668, %v3299, 0
      %v3347 = vsel %vm668, %v3300, 0
      %v3350 = vsel %vm717, %v3220, 0
      %3352 = vmatprep.subr.bf16.mxu0 0
      %3353 = vmatpush1.bf16.msra.mxu0 %v3350
      %3354 = vmatprep.subr.bf16.mxu0 0
      %3355 = vmatpush1.bf16.msra.mxu0 0
      %3356 = vmatprep.subr.bf16.mxu0 0
      %3357 = vmatpush1.bf16.msra.mxu0 0
      %3358 = vmatprep.subr.bf16.mxu0 0
      %3359 = vmatpush1.bf16.msra.mxu0 0
      %3360 = vmatprep.subr.bf16.mxu0 0
      %3361 = vmatpush1.bf16.msra.mxu0 0
      %3362 = vmatprep.subr.bf16.mxu0 0
      %3363 = vmatpush1.bf16.msra.mxu0 0
      %3364 = vmatprep.subr.bf16.mxu0 0
      %3365 = vmatpush1.bf16.msra.mxu0 0
      %3366 = vmatprep.subr.bf16.mxu0 0
      %3367 = vmatpush1.bf16.msra.mxu0 0
      %3368 = vmatprep.subr.bf16.mxu0 0
      %3369 = vmatpush1.bf16.msra.mxu0 0
      %3370 = vmatprep.subr.bf16.mxu0 0
      %3371 = vmatpush1.bf16.msra.mxu0 0
      %3372 = vmatprep.subr.bf16.mxu0 0
      %3373 = vmatpush1.bf16.msra.mxu0 0
      %3374 = vmatprep.subr.bf16.mxu0 0
      %3375 = vmatpush1.bf16.msra.mxu0 0
      %3376 = vmatprep.subr.bf16.mxu0 0
      %3377 = vmatpush1.bf16.msra.mxu0 0
      %3378 = vmatprep.subr.bf16.mxu0 0
      %3379 = vmatpush1.bf16.msra.mxu0 0
      %3380 = vmatprep.subr.bf16.mxu0 0
      %3381 = vmatpush1.bf16.msra.mxu0 0
      %3382 = vmatprep.subr.bf16.mxu0 0
      %3383 = vmatpush1.bf16.msra.mxu0 0
      %3384 = vmatprep.mubr.bf16.mxu0 0
      %3385 = vmatmul.mubr.bf16.gmra.mrb[0].mxu0 %v3302
      %v3386 = vpop.f32.mrb[0].mxu0
      %v3387 = vadd.f32 0.0, %v3386
      %v3388 = vpop.f32.mrb[0].mxu0
      %v3389 = vpop.f32.mrb[0].mxu0
      %v3390 = vadd.f32 0.0, %v3389
      %v3391 = vpop.f32.mrb[0].mxu0
      %3392 = vmatprep.mubr.bf16.mxu0 0
      %3393 = vmatmul.mubr.bf16.gmra.mrb[0].mxu0 %v3305
      %v3394 = vpop.f32.mrb[0].mxu0
      %v3395 = vadd.f32 0.0, %v3394
      %v3396 = vpop.f32.mrb[0].mxu0
      %v3397 = vpop.f32.mrb[0].mxu0
      %v3398 = vadd.f32 0.0, %v3397
      %v3399 = vpop.f32.mrb[0].mxu0
      %3400 = vmatprep.mubr.bf16.mxu0 0
      %3401 = vmatmul.mubr.bf16.gmra.mrb[0].mxu0 %v3308
      %v3402 = vpop.f32.mrb[0].mxu0
      %v3403 = vadd.f32 0.0, %v3402
      %v3404 = vpop.f32.mrb[0].mxu0
      %v3405 = vpop.f32.mrb[0].mxu0
      %v3406 = vadd.f32 0.0, %v3405
      %v3407 = vpop.f32.mrb[0].mxu0
      %3408 = vmatprep.mubr.bf16.mxu0 0
      %3409 = vmatmul.mubr.bf16.gmra.mrb[0].mxu0 %v3311
      %v3410 = vpop.f32.mrb[0].mxu0
      %v3411 = vadd.f32 0.0, %v3410
      %v3412 = vpop.f32.mrb[0].mxu0
      %v3413 = vpop.f32.mrb[0].mxu0
      %v3414 = vadd.f32 0.0, %v3413
      %v3415 = vpop.f32.mrb[0].mxu0
      %3416 = vmatprep.mubr.bf16.mxu0 0
      %3417 = vmatmul.mubr.bf16.gmra.mrb[0].mxu0 %v3314
      %v3418 = vpop.f32.mrb[0].mxu0
      %v3419 = vadd.f32 0.0, %v3418
      %v3420 = vpop.f32.mrb[0].mxu0
      %v3421 = vpop.f32.mrb[0].mxu0
      %v3422 = vadd.f32 0.0, %v3421
      %v3423 = vpop.f32.mrb[0].mxu0
      %3424 = vmatprep.mubr.bf16.mxu0 0
      %3425 = vmatmul.mubr.bf16.gmra.mrb[0].mxu0 %v3317
      %v3426 = vpop.f32.mrb[0].mxu0
      %v3427 = vadd.f32 0.0, %v3426
      %v3428 = vpop.f32.mrb[0].mxu0
      %v3429 = vpop.f32.mrb[0].mxu0
      %v3430 = vadd.f32 0.0, %v3429
      %v3431 = vpop.f32.mrb[0].mxu0
      %3432 = vmatprep.mubr.bf16.mxu0 0
      %3433 = vmatmul.mubr.bf16.gmra.mrb[0].mxu0 %v3320
      %v3434 = vpop.f32.mrb[0].mxu0
      %v3435 = vadd.f32 0.0, %v3434
      %v3436 = vpop.f32.mrb[0].mxu0
      %v3437 = vpop.f32.mrb[0].mxu0
      %v3438 = vadd.f32 0.0, %v3437
      %v3439 = vpop.f32.mrb[0].mxu0
      %3440 = vmatprep.mubr.bf16.mxu0 0
      %3441 = vmatmul.mubr.bf16.gmra.mrb[0].mxu0 %v3323
      %v3442 = vpop.f32.mrb[0].mxu0
      %v3443 = vadd.f32 0.0, %v3442
      %v3444 = vpop.f32.mrb[0].mxu0
      %v3445 = vpop.f32.mrb[0].mxu0
      %v3446 = vadd.f32 0.0, %v3445
      %v3447 = vpop.f32.mrb[0].mxu0
      %3448 = vmatprep.mubr.bf16.mxu0 0
      %3449 = vmatmul.mubr.bf16.gmra.mrb[0].mxu0 %v3326
      %v3450 = vpop.f32.mrb[0].mxu0
      %v3451 = vadd.f32 0.0, %v3450
      %v3452 = vpop.f32.mrb[0].mxu0
      %v3453 = vpop.f32.mrb[0].mxu0
      %v3454 = vadd.f32 0.0, %v3453
      %v3455 = vpop.f32.mrb[0].mxu0
      %3456 = vmatprep.mubr.bf16.mxu0 0
      %3457 = vmatmul.mubr.bf16.gmra.mrb[0].mxu0 %v3329
      %v3458 = vpop.f32.mrb[0].mxu0
      %v3459 = vadd.f32 0.0, %v3458
      %v3460 = vpop.f32.mrb[0].mxu0
      %v3461 = vpop.f32.mrb[0].mxu0
      %v3462 = vadd.f32 0.0, %v3461
      %v3463 = vpop.f32.mrb[0].mxu0
      %3464 = vmatprep.mubr.bf16.mxu0 0
      %3465 = vmatmul.mubr.bf16.gmra.mrb[0].mxu0 %v3332
      %v3466 = vpop.f32.mrb[0].mxu0
      %v3467 = vadd.f32 0.0, %v3466
      %v3468 = vpop.f32.mrb[0].mxu0
      %v3469 = vpop.f32.mrb[0].mxu0
      %v3470 = vadd.f32 0.0, %v3469
      %v3471 = vpop.f32.mrb[0].mxu0
      %3472 = vmatprep.mubr.bf16.mxu0 0
      %3473 = vmatmul.mubr.bf16.gmra.mrb[0].mxu0 %v3335
      %v3474 = vpop.f32.mrb[0].mxu0
      %v3475 = vadd.f32 0.0, %v3474
      %v3476 = vpop.f32.mrb[0].mxu0
      %v3477 = vpop.f32.mrb[0].mxu0
      %v3478 = vadd.f32 0.0, %v3477
      %v3479 = vpop.f32.mrb[0].mxu0
      %3480 = vmatprep.mubr.bf16.mxu0 0
      %3481 = vmatmul.mubr.bf16.gmra.mrb[0].mxu0 %v3338
      %v3482 = vpop.f32.mrb[0].mxu0
      %v3483 = vadd.f32 0.0, %v3482
      %v3484 = vpop.f32.mrb[0].mxu0
      %v3485 = vpop.f32.mrb[0].mxu0
      %v3486 = vadd.f32 0.0, %v3485
      %v3487 = vpop.f32.mrb[0].mxu0
      %3488 = vmatprep.mubr.bf16.mxu0 0
      %3489 = vmatmul.mubr.bf16.gmra.mrb[0].mxu0 %v3341
      %v3490 = vpop.f32.mrb[0].mxu0
      %v3491 = vadd.f32 0.0, %v3490
      %v3492 = vpop.f32.mrb[0].mxu0
      %v3493 = vpop.f32.mrb[0].mxu0
      %v3494 = vadd.f32 0.0, %v3493
      %v3495 = vpop.f32.mrb[0].mxu0
      %3496 = vmatprep.mubr.bf16.mxu0 0
      %3497 = vmatmul.mubr.bf16.gmra.mrb[0].mxu0 %v3344
      %v3498 = vpop.f32.mrb[0].mxu0
      %v3499 = vadd.f32 0.0, %v3498
      %v3500 = vpop.f32.mrb[0].mxu0
      %v3501 = vpop.f32.mrb[0].mxu0
      %v3502 = vadd.f32 0.0, %v3501
      %v3503 = vpop.f32.mrb[0].mxu0
      %3504 = vmatprep.mubr.bf16.mxu0 0
      %3505 = vmatmul.mubr.bf16.gmra.mrb[0].mxu0 %v3347
      %v3506 = vpop.f32.mrb[0].mxu0
      %v3507 = vadd.f32 0.0, %v3506
      %v3508 = vpop.f32.mrb[0].mxu0
      %v3509 = vpop.f32.mrb[0].mxu0
      %v3510 = vadd.f32 0.0, %v3509
      %v3511 = vpop.f32.mrb[0].mxu0
      %3512 = vdwg.mxu0
      %v3513 = vadd.f32 %v3154, %v3387
      %v3514 = vadd.f32 %v3155, %v3390
      %v3515 = vadd.f32 %v3156, %v3395
      %v3516 = vadd.f32 %v3157, %v3398
      %v3517 = vadd.f32 %v3158, %v3403
      %v3518 = vadd.f32 %v3159, %v3406
      %v3519 = vadd.f32 %v3160, %v3411
      %v3520 = vadd.f32 %v3161, %v3414
      %v3521 = vadd.f32 %v3162, %v3419
      %v3522 = vadd.f32 %v3163, %v3422
      %v3523 = vadd.f32 %v3164, %v3427
      %v3524 = vadd.f32 %v3165, %v3430
      %v3525 = vadd.f32 %v3166, %v3435
      %v3526 = vadd.f32 %v3167, %v3438
      %v3527 = vadd.f32 %v3168, %v3443
      %v3528 = vadd.f32 %v3169, %v3446
      %v3529 = vadd.f32 %v3170, %v3451
      %v3530 = vadd.f32 %v3171, %v3454
      %v3531 = vadd.f32 %v3172, %v3459
      %v3532 = vadd.f32 %v3173, %v3462
      %v3533 = vadd.f32 %v3174, %v3467
      %v3534 = vadd.f32 %v3175, %v3470
      %v3535 = vadd.f32 %v3176, %v3475
      %v3536 = vadd.f32 %v3177, %v3478
      %v3537 = vadd.f32 %v3178, %v3483
      %v3538 = vadd.f32 %v3179, %v3486
      %v3539 = vadd.f32 %v3180, %v3491
      %v3540 = vadd.f32 %v3181, %v3494
      %v3541 = vadd.f32 %v3182, %v3499
      %v3542 = vadd.f32 %v3183, %v3502
      %v3543 = vadd.f32 %v3184, %v3507
      %v3544 = vadd.f32 %v3185, %v3510
      %v3545 = vld [vmem:[%s3186] sm:$0xf]
      %v3546 = vld [vmem:[%s3186 + $0x4] sm:$0xf]
      %v3547 = vld [vmem:[%s3186 + $0x8] sm:$0x1]
      %v3548 = vld [vmem:[%s3186 + $0xc] sm:$0xf]
      %v3549 = vld [vmem:[%s3186 + $0x10] sm:$0xf]
      %v3550 = vld [vmem:[%s3186 + $0x14] sm:$0x1]
      %v3551 = vld [vmem:[%s3186 + $0x18] sm:$0xf]
      %v3552 = vld [vmem:[%s3186 + $0x1c] sm:$0xf]
      %v3553 = vld [vmem:[%s3186 + $0x20] sm:$0x1]
      %v3554 = vld [vmem:[%s3186 + $0x24] sm:$0xf]
      %v3555 = vld [vmem:[%s3186 + $0x28] sm:$0xf]
      %v3556 = vld [vmem:[%s3186 + $0x2c] sm:$0x1]
      %v3557 = vld [vmem:[%s3186 + $0x30] sm:$0xf]
      %v3558 = vld [vmem:[%s3186 + $0x34] sm:$0xf]
      %v3559 = vld [vmem:[%s3186 + $0x38] sm:$0x1]
      %v3560 = vld [vmem:[%s3186 + $0x3c] sm:$0xf]
      %v3561 = vld [vmem:[%s3186 + $0x40] sm:$0xf]
      %v3562 = vld [vmem:[%s3186 + $0x44] sm:$0x1]
      %v3563 = vld [vmem:[%s3186 + $0x48] sm:$0xf]
      %v3564 = vld [vmem:[%s3186 + $0x4c] sm:$0xf]
      %v3565 = vld [vmem:[%s3186 + $0x50] sm:$0x1]
      %v3566 = vld [vmem:[%s3186 + $0x54] sm:$0xf]
      %v3567 = vld [vmem:[%s3186 + $0x58] sm:$0xf]
      %v3568 = vld [vmem:[%s3186 + $0x5c] sm:$0x1]
      %v3569 = vld [vmem:[%s3186 + $0x60] sm:$0xf]
      %v3570 = vld [vmem:[%s3186 + $0x64] sm:$0xf]
      %v3571 = vld [vmem:[%s3186 + $0x68] sm:$0x1]
      %v3572 = vld [vmem:[%s3186 + $0x6c] sm:$0xf]
      %v3573 = vld [vmem:[%s3186 + $0x70] sm:$0xf]
      %v3574 = vld [vmem:[%s3186 + $0x74] sm:$0x1]
      %v3575 = vld [vmem:[%s3186 + $0x78] sm:$0xf]
      %v3576 = vld [vmem:[%s3186 + $0x7c] sm:$0xf]
      %v3577 = vld [vmem:[%s3186 + $0x80] sm:$0x1]
      %v3578 = vld [vmem:[%s3186 + $0x84] sm:$0xf]
      %v3579 = vld [vmem:[%s3186 + $0x88] sm:$0xf]
      %v3580 = vld [vmem:[%s3186 + $0x8c] sm:$0x1]
      %v3581 = vld [vmem:[%s3186 + $0x90] sm:$0xf]
      %v3582 = vld [vmem:[%s3186 + $0x94] sm:$0xf]
      %v3583 = vld [vmem:[%s3186 + $0x98] sm:$0x1]
      %v3584 = vld [vmem:[%s3186 + $0x9c] sm:$0xf]
      %v3585 = vld [vmem:[%s3186 + $0xa0] sm:$0xf]
      %v3586 = vld [vmem:[%s3186 + $0xa4] sm:$0x1]
      %v3587 = vld [vmem:[%s3186 + $0xa8] sm:$0xf]
      %v3588 = vld [vmem:[%s3186 + $0xac] sm:$0xf]
      %v3589 = vld [vmem:[%s3186 + $0xb0] sm:$0x1]
      %v3590 = vld [vmem:[%s3186 + $0xb4] sm:$0xf]
      %v3591 = vld [vmem:[%s3186 + $0xb8] sm:$0xf]
      %v3592 = vld [vmem:[%s3186 + $0xbc] sm:$0x1]
      %v3594 = vshrl.u32 %v3545, 16
      %v3596 = vrot.slane %v3594, 4
      %v3597 = vshll.u32 %v3545, 16
      %v3599 = vrot.slane %v3597, 5
      %v3600 = vor.u32 %v3596, %v3599
      %v3601 = vrot.slane %v3600, 4
      %v3603 = vshll.u32 %v3546, 16
      %v3605 = vrot.slane %v3603, 5
      %v3606 = vsel %vm233, %v3601, %v3605
      %v3607 = vshrl.u32 %v3546, 16
      %v3609 = vrot.slane %v3607, 4
      %v3610 = vor.u32 %v3609, %v3605
      %v3611 = vrot.slane %v3610, 4
      %v3613 = vshll.u32 %v3547, 16
      %v3615 = vrot.slane %v3613, 5
      %v3616 = vsel %vm233, %v3611, %v3615
      %v3618 = vshrl.u32 %v3548, 16
      %v3620 = vrot.slane %v3618, 4
      %v3621 = vshll.u32 %v3548, 16
      %v3623 = vrot.slane %v3621, 5
      %v3624 = vor.u32 %v3620, %v3623
      %v3625 = vrot.slane %v3624, 4
      %v3627 = vshll.u32 %v3549, 16
      %v3629 = vrot.slane %v3627, 5
      %v3630 = vsel %vm233, %v3625, %v3629
      %v3631 = vshrl.u32 %v3549, 16
      %v3633 = vrot.slane %v3631, 4
      %v3634 = vor.u32 %v3633, %v3629
      %v3635 = vrot.slane %v3634, 4
      %v3637 = vshll.u32 %v3550, 16
      %v3639 = vrot.slane %v3637, 5
      %v3640 = vsel %vm233, %v3635, %v3639
      %v3642 = vshrl.u32 %v3551, 16
      %v3644 = vrot.slane %v3642, 4
      %v3645 = vshll.u32 %v3551, 16
      %v3647 = vrot.slane %v3645, 5
      %v3648 = vor.u32 %v3644, %v3647
      %v3649 = vrot.slane %v3648, 4
      %v3651 = vshll.u32 %v3552, 16
      %v3653 = vrot.slane %v3651, 5
      %v3654 = vsel %vm233, %v3649, %v3653
      %v3655 = vshrl.u32 %v3552, 16
      %v3657 = vrot.slane %v3655, 4
      %v3658 = vor.u32 %v3657, %v3653
      %v3659 = vrot.slane %v3658, 4
      %v3661 = vshll.u32 %v3553, 16
      %v3663 = vrot.slane %v3661, 5
      %v3664 = vsel %vm233, %v3659, %v3663
      %v3666 = vshrl.u32 %v3554, 16
      %v3668 = vrot.slane %v3666, 4
      %v3669 = vshll.u32 %v3554, 16
      %v3671 = vrot.slane %v3669, 5
      %v3672 = vor.u32 %v3668, %v3671
      %v3673 = vrot.slane %v3672, 4
      %v3675 = vshll.u32 %v3555, 16
      %v3677 = vrot.slane %v3675, 5
      %v3678 = vsel %vm233, %v3673, %v3677
      %v3679 = vshrl.u32 %v3555, 16
      %v3681 = vrot.slane %v3679, 4
      %v3682 = vor.u32 %v3681, %v3677
      %v3683 = vrot.slane %v3682, 4
      %v3685 = vshll.u32 %v3556, 16
      %v3687 = vrot.slane %v3685, 5
      %v3688 = vsel %vm233, %v3683, %v3687
      %v3690 = vshrl.u32 %v3557, 16
      %v3692 = vrot.slane %v3690, 4
      %v3693 = vshll.u32 %v3557, 16
      %v3695 = vrot.slane %v3693, 5
      %v3696 = vor.u32 %v3692, %v3695
      %v3697 = vrot.slane %v3696, 4
      %v3699 = vshll.u32 %v3558, 16
      %v3701 = vrot.slane %v3699, 5
      %v3702 = vsel %vm233, %v3697, %v3701
      %v3703 = vshrl.u32 %v3558, 16
      %v3705 = vrot.slane %v3703, 4
      %v3706 = vor.u32 %v3705, %v3701
      %v3707 = vrot.slane %v3706, 4
      %v3709 = vshll.u32 %v3559, 16
      %v3711 = vrot.slane %v3709, 5
      %v3712 = vsel %vm233, %v3707, %v3711
      %v3714 = vshrl.u32 %v3560, 16
      %v3716 = vrot.slane %v3714, 4
      %v3717 = vshll.u32 %v3560, 16
      %v3719 = vrot.slane %v3717, 5
      %v3720 = vor.u32 %v3716, %v3719
      %v3721 = vrot.slane %v3720, 4
      %v3723 = vshll.u32 %v3561, 16
      %v3725 = vrot.slane %v3723, 5
      %v3726 = vsel %vm233, %v3721, %v3725
      %v3727 = vshrl.u32 %v3561, 16
      %v3729 = vrot.slane %v3727, 4
      %v3730 = vor.u32 %v3729, %v3725
      %v3731 = vrot.slane %v3730, 4
      %v3733 = vshll.u32 %v3562, 16
      %v3735 = vrot.slane %v3733, 5
      %v3736 = vsel %vm233, %v3731, %v3735
      %v3738 = vshrl.u32 %v3563, 16
      %v3740 = vrot.slane %v3738, 4
      %v3741 = vshll.u32 %v3563, 16
      %v3743 = vrot.slane %v3741, 5
      %v3744 = vor.u32 %v3740, %v3743
      %v3745 = vrot.slane %v3744, 4
      %v3747 = vshll.u32 %v3564, 16
      %v3749 = vrot.slane %v3747, 5
      %v3750 = vsel %vm233, %v3745, %v3749
      %v3751 = vshrl.u32 %v3564, 16
      %v3753 = vrot.slane %v3751, 4
      %v3754 = vor.u32 %v3753, %v3749
      %v3755 = vrot.slane %v3754, 4
      %v3757 = vshll.u32 %v3565, 16
      %v3759 = vrot.slane %v3757, 5
      %v3760 = vsel %vm233, %v3755, %v3759
      %v3762 = vshrl.u32 %v3566, 16
      %v3764 = vrot.slane %v3762, 4
      %v3765 = vshll.u32 %v3566, 16
      %v3767 = vrot.slane %v3765, 5
      %v3768 = vor.u32 %v3764, %v3767
      %v3769 = vrot.slane %v3768, 4
      %v3771 = vshll.u32 %v3567, 16
      %v3773 = vrot.slane %v3771, 5
      %v3774 = vsel %vm233, %v3769, %v3773
      %v3775 = vshrl.u32 %v3567, 16
      %v3777 = vrot.slane %v3775, 4
      %v3778 = vor.u32 %v3777, %v3773
      %v3779 = vrot.slane %v3778, 4
      %v3781 = vshll.u32 %v3568, 16
      %v3783 = vrot.slane %v3781, 5
      %v3784 = vsel %vm233, %v3779, %v3783
      %v3786 = vshrl.u32 %v3569, 16
      %v3788 = vrot.slane %v3786, 4
      %v3789 = vshll.u32 %v3569, 16
      %v3791 = vrot.slane %v3789, 5
      %v3792 = vor.u32 %v3788, %v3791
      %v3793 = vrot.slane %v3792, 4
      %v3795 = vshll.u32 %v3570, 16
      %v3797 = vrot.slane %v3795, 5
      %v3798 = vsel %vm233, %v3793, %v3797
      %v3799 = vshrl.u32 %v3570, 16
      %v3801 = vrot.slane %v3799, 4
      %v3802 = vor.u32 %v3801, %v3797
      %v3803 = vrot.slane %v3802, 4
      %v3805 = vshll.u32 %v3571, 16
      %v3807 = vrot.slane %v3805, 5
      %v3808 = vsel %vm233, %v3803, %v3807
      %v3810 = vshrl.u32 %v3572, 16
      %v3812 = vrot.slane %v3810, 4
      %v3813 = vshll.u32 %v3572, 16
      %v3815 = vrot.slane %v3813, 5
      %v3816 = vor.u32 %v3812, %v3815
      %v3817 = vrot.slane %v3816, 4
      %v3819 = vshll.u32 %v3573, 16
      %v3821 = vrot.slane %v3819, 5
      %v3822 = vsel %vm233, %v3817, %v3821
      %v3823 = vshrl.u32 %v3573, 16
      %v3825 = vrot.slane %v3823, 4
      %v3826 = vor.u32 %v3825, %v3821
      %v3827 = vrot.slane %v3826, 4
      %v3829 = vshll.u32 %v3574, 16
      %v3831 = vrot.slane %v3829, 5
      %v3832 = vsel %vm233, %v3827, %v3831
      %v3834 = vshrl.u32 %v3575, 16
      %v3836 = vrot.slane %v3834, 4
      %v3837 = vshll.u32 %v3575, 16
      %v3839 = vrot.slane %v3837, 5
      %v3840 = vor.u32 %v3836, %v3839
      %v3841 = vrot.slane %v3840, 4
      %v3843 = vshll.u32 %v3576, 16
      %v3845 = vrot.slane %v3843, 5
      %v3846 = vsel %vm233, %v3841, %v3845
      %v3847 = vshrl.u32 %v3576, 16
      %v3849 = vrot.slane %v3847, 4
      %v3850 = vor.u32 %v3849, %v3845
      %v3851 = vrot.slane %v3850, 4
      %v3853 = vshll.u32 %v3577, 16
      %v3855 = vrot.slane %v3853, 5
      %v3856 = vsel %vm233, %v3851, %v3855
      %v3858 = vshrl.u32 %v3578, 16
      %v3860 = vrot.slane %v3858, 4
      %v3861 = vshll.u32 %v3578, 16
      %v3863 = vrot.slane %v3861, 5
      %v3864 = vor.u32 %v3860, %v3863
      %v3865 = vrot.slane %v3864, 4
      %v3867 = vshll.u32 %v3579, 16
      %v3869 = vrot.slane %v3867, 5
      %v3870 = vsel %vm233, %v3865, %v3869
      %v3871 = vshrl.u32 %v3579, 16
      %v3873 = vrot.slane %v3871, 4
      %v3874 = vor.u32 %v3873, %v3869
      %v3875 = vrot.slane %v3874, 4
      %v3877 = vshll.u32 %v3580, 16
      %v3879 = vrot.slane %v3877, 5
      %v3880 = vsel %vm233, %v3875, %v3879
      %v3882 = vshrl.u32 %v3581, 16
      %v3884 = vrot.slane %v3882, 4
      %v3885 = vshll.u32 %v3581, 16
      %v3887 = vrot.slane %v3885, 5
      %v3888 = vor.u32 %v3884, %v3887
      %v3889 = vrot.slane %v3888, 4
      %v3891 = vshll.u32 %v3582, 16
      %v3893 = vrot.slane %v3891, 5
      %v3894 = vsel %vm233, %v3889, %v3893
      %v3895 = vshrl.u32 %v3582, 16
      %v3897 = vrot.slane %v3895, 4
      %v3898 = vor.u32 %v3897, %v3893
      %v3899 = vrot.slane %v3898, 4
      %v3901 = vshll.u32 %v3583, 16
      %v3903 = vrot.slane %v3901, 5
      %v3904 = vsel %vm233, %v3899, %v3903
      %v3906 = vshrl.u32 %v3584, 16
      %v3908 = vrot.slane %v3906, 4
      %v3909 = vshll.u32 %v3584, 16
      %v3911 = vrot.slane %v3909, 5
      %v3912 = vor.u32 %v3908, %v3911
      %v3913 = vrot.slane %v3912, 4
      %v3915 = vshll.u32 %v3585, 16
      %v3917 = vrot.slane %v3915, 5
      %v3918 = vsel %vm233, %v3913, %v3917
      %v3919 = vshrl.u32 %v3585, 16
      %v3921 = vrot.slane %v3919, 4
      %v3922 = vor.u32 %v3921, %v3917
      %v3923 = vrot.slane %v3922, 4
      %v3925 = vshll.u32 %v3586, 16
      %v3927 = vrot.slane %v3925, 5
      %v3928 = vsel %vm233, %v3923, %v3927
      %v3930 = vshrl.u32 %v3587, 16
      %v3932 = vrot.slane %v3930, 4
      %v3933 = vshll.u32 %v3587, 16
      %v3935 = vrot.slane %v3933, 5
      %v3936 = vor.u32 %v3932, %v3935
      %v3937 = vrot.slane %v3936, 4
      %v3939 = vshll.u32 %v3588, 16
      %v3941 = vrot.slane %v3939, 5
      %v3942 = vsel %vm233, %v3937, %v3941
      %v3943 = vshrl.u32 %v3588, 16
      %v3945 = vrot.slane %v3943, 4
      %v3946 = vor.u32 %v3945, %v3941
      %v3947 = vrot.slane %v3946, 4
      %v3949 = vshll.u32 %v3589, 16
      %v3951 = vrot.slane %v3949, 5
      %v3952 = vsel %vm233, %v3947, %v3951
      %v3954 = vshrl.u32 %v3590, 16
      %v3956 = vrot.slane %v3954, 4
      %v3957 = vshll.u32 %v3590, 16
      %v3959 = vrot.slane %v3957, 5
      %v3960 = vor.u32 %v3956, %v3959
      %v3961 = vrot.slane %v3960, 4
      %v3963 = vshll.u32 %v3591, 16
      %v3965 = vrot.slane %v3963, 5
      %v3966 = vsel %vm233, %v3961, %v3965
      %v3967 = vshrl.u32 %v3591, 16
      %v3969 = vrot.slane %v3967, 4
      %v3970 = vor.u32 %v3969, %v3965
      %v3971 = vrot.slane %v3970, 4
      %v3973 = vshll.u32 %v3592, 16
      %v3975 = vrot.slane %v3973, 5
      %v3976 = vsel %vm233, %v3971, %v3975
      %s3977 = scalar_lea.vmem %s172, 14
      %v3978 = vld [vmem:[%s3977] sm:$0x3]
      %v3979 = vunpack.c.l.b16 %v3606
      %v3980 = vunpack.c.l.b16 %v3616
      %v3981 = vunpack.c.l.b16 %v3630
      %v3982 = vunpack.c.l.b16 %v3640
      %v3983 = vunpack.c.l.b16 %v3654
      %v3984 = vunpack.c.l.b16 %v3664
      %v3985 = vunpack.c.l.b16 %v3678
      %v3986 = vunpack.c.l.b16 %v3688
      %v3987 = vunpack.c.l.b16 %v3702
      %v3988 = vunpack.c.l.b16 %v3712
      %v3989 = vunpack.c.l.b16 %v3726
      %v3990 = vunpack.c.l.b16 %v3736
      %v3991 = vunpack.c.l.b16 %v3750
      %v3992 = vunpack.c.l.b16 %v3760
      %v3993 = vunpack.c.l.b16 %v3774
      %v3994 = vunpack.c.l.b16 %v3784
      %v3995 = vunpack.c.l.b16 %v3798
      %v3996 = vunpack.c.l.b16 %v3808
      %v3997 = vunpack.c.l.b16 %v3822
      %v3998 = vunpack.c.l.b16 %v3832
      %v3999 = vunpack.c.l.b16 %v3846
      %v4000 = vunpack.c.l.b16 %v3856
      %v4001 = vunpack.c.l.b16 %v3870
      %v4002 = vunpack.c.l.b16 %v3880
      %v4003 = vunpack.c.l.b16 %v3894
      %v4004 = vunpack.c.l.b16 %v3904
      %v4005 = vunpack.c.l.b16 %v3918
      %v4006 = vunpack.c.l.b16 %v3928
      %v4007 = vunpack.c.l.b16 %v3942
      %v4008 = vunpack.c.l.b16 %v3952
      %v4009 = vunpack.c.l.b16 %v3966
      %v4010 = vunpack.c.l.b16 %v3976
      %v4011 = vpack.c.b16 %v3980, %v3979
      %v4012 = vpack.c.b16 %v3982, %v3981
      %v4013 = vpack.c.b16 %v3984, %v3983
      %v4014 = vpack.c.b16 %v3986, %v3985
      %v4015 = vpack.c.b16 %v3988, %v3987
      %v4016 = vpack.c.b16 %v3990, %v3989
      %v4017 = vpack.c.b16 %v3992, %v3991
      %v4018 = vpack.c.b16 %v3994, %v3993
      %v4019 = vpack.c.b16 %v3996, %v3995
      %v4020 = vpack.c.b16 %v3998, %v3997
      %v4021 = vpack.c.b16 %v4000, %v3999
      %v4022 = vpack.c.b16 %v4002, %v4001
      %v4023 = vpack.c.b16 %v4004, %v4003
      %v4024 = vpack.c.b16 %v4006, %v4005
      %v4025 = vpack.c.b16 %v4008, %v4007
      %v4026 = vpack.c.b16 %v4010, %v4009
      %v4028 = vsel %vm668, %v4011, 0
      %v4031 = vsel %vm668, %v4012, 0
      %v4034 = vsel %vm668, %v4013, 0
      %v4037 = vsel %vm668, %v4014, 0
      %v4040 = vsel %vm668, %v4015, 0
      %v4043 = vsel %vm668, %v4016, 0
      %v4046 = vsel %vm668, %v4017, 0
      %v4049 = vsel %vm668, %v4018, 0
      %v4052 = vsel %vm668, %v4019, 0
      %v4055 = vsel %vm668, %v4020, 0
      %v4058 = vsel %vm668, %v4021, 0
      %v4061 = vsel %vm668, %v4022, 0
      %v4064 = vsel %vm668, %v4023, 0
      %v4067 = vsel %vm668, %v4024, 0
      %v4070 = vsel %vm668, %v4025, 0
      %v4073 = vsel %vm668, %v4026, 0
      %v4076 = vsel %vm717, %v3978, 0
      %4078 = vmatprep.subr.bf16.mxu0 0
      %4079 = vmatpush1.bf16.msra.mxu0 %v4076
      %4080 = vmatprep.subr.bf16.mxu0 0
      %4081 = vmatpush1.bf16.msra.mxu0 0
      %4082 = vmatprep.subr.bf16.mxu0 0
      %4083 = vmatpush1.bf16.msra.mxu0 0
      %4084 = vmatprep.subr.bf16.mxu0 0
      %4085 = vmatpush1.bf16.msra.mxu0 0
      %4086 = vmatprep.subr.bf16.mxu0 0
      %4087 = vmatpush1.bf16.msra.mxu0 0
      %4088 = vmatprep.subr.bf16.mxu0 0
      %4089 = vmatpush1.bf16.msra.mxu0 0
      %4090 = vmatprep.subr.bf16.mxu0 0
      %4091 = vmatpush1.bf16.msra.mxu0 0
      %4092 = vmatprep.subr.bf16.mxu0 0
      %4093 = vmatpush1.bf16.msra.mxu0 0
      %4094 = vmatprep.subr.bf16.mxu0 0
      %4095 = vmatpush1.bf16.msra.mxu0 0
      %4096 = vmatprep.subr.bf16.mxu0 0
      %4097 = vmatpush1.bf16.msra.mxu0 0
      %4098 = vmatprep.subr.bf16.mxu0 0
      %4099 = vmatpush1.bf16.msra.mxu0 0
      %4100 = vmatprep.subr.bf16.mxu0 0
      %4101 = vmatpush1.bf16.msra.mxu0 0
      %4102 = vmatprep.subr.bf16.mxu0 0
      %4103 = vmatpush1.bf16.msra.mxu0 0
      %4104 = vmatprep.subr.bf16.mxu0 0
      %4105 = vmatpush1.bf16.msra.mxu0 0
      %4106 = vmatprep.subr.bf16.mxu0 0
      %4107 = vmatpush1.bf16.msra.mxu0 0
      %4108 = vmatprep.subr.bf16.mxu0 0
      %4109 = vmatpush1.bf16.msra.mxu0 0
      %4110 = vmatprep.mubr.bf16.mxu0 0
      %4111 = vmatmul.mubr.bf16.gmra.mrb[0].mxu0 %v4028
      %v4112 = vpop.f32.mrb[0].mxu0
      %v4113 = vadd.f32 0.0, %v4112
      %v4114 = vpop.f32.mrb[0].mxu0
      %v4115 = vpop.f32.mrb[0].mxu0
      %v4116 = vadd.f32 0.0, %v4115
      %v4117 = vpop.f32.mrb[0].mxu0
      %4118 = vmatprep.mubr.bf16.mxu0 0
      %4119 = vmatmul.mubr.bf16.gmra.mrb[0].mxu0 %v4031
      %v4120 = vpop.f32.mrb[0].mxu0
      %v4121 = vadd.f32 0.0, %v4120
      %v4122 = vpop.f32.mrb[0].mxu0
      %v4123 = vpop.f32.mrb[0].mxu0
      %v4124 = vadd.f32 0.0, %v4123
      %v4125 = vpop.f32.mrb[0].mxu0
      %4126 = vmatprep.mubr.bf16.mxu0 0
      %4127 = vmatmul.mubr.bf16.gmra.mrb[0].mxu0 %v4034
      %v4128 = vpop.f32.mrb[0].mxu0
      %v4129 = vadd.f32 0.0, %v4128
      %v4130 = vpop.f32.mrb[0].mxu0
      %v4131 = vpop.f32.mrb[0].mxu0
      %v4132 = vadd.f32 0.0, %v4131
      %v4133 = vpop.f32.mrb[0].mxu0
      %4134 = vmatprep.mubr.bf16.mxu0 0
      %4135 = vmatmul.mubr.bf16.gmra.mrb[0].mxu0 %v4037
      %v4136 = vpop.f32.mrb[0].mxu0
      %v4137 = vadd.f32 0.0, %v4136
      %v4138 = vpop.f32.mrb[0].mxu0
      %v4139 = vpop.f32.mrb[0].mxu0
      %v4140 = vadd.f32 0.0, %v4139
      %v4141 = vpop.f32.mrb[0].mxu0
      %4142 = vmatprep.mubr.bf16.mxu0 0
      %4143 = vmatmul.mubr.bf16.gmra.mrb[0].mxu0 %v4040
      %v4144 = vpop.f32.mrb[0].mxu0
      %v4145 = vadd.f32 0.0, %v4144
      %v4146 = vpop.f32.mrb[0].mxu0
      %v4147 = vpop.f32.mrb[0].mxu0
      %v4148 = vadd.f32 0.0, %v4147
      %v4149 = vpop.f32.mrb[0].mxu0
      %4150 = vmatprep.mubr.bf16.mxu0 0
      %4151 = vmatmul.mubr.bf16.gmra.mrb[0].mxu0 %v4043
      %v4152 = vpop.f32.mrb[0].mxu0
      %v4153 = vadd.f32 0.0, %v4152
      %v4154 = vpop.f32.mrb[0].mxu0
      %v4155 = vpop.f32.mrb[0].mxu0
      %v4156 = vadd.f32 0.0, %v4155
      %v4157 = vpop.f32.mrb[0].mxu0
      %4158 = vmatprep.mubr.bf16.mxu0 0
      %4159 = vmatmul.mubr.bf16.gmra.mrb[0].mxu0 %v4046
      %v4160 = vpop.f32.mrb[0].mxu0
      %v4161 = vadd.f32 0.0, %v4160
      %v4162 = vpop.f32.mrb[0].mxu0
      %v4163 = vpop.f32.mrb[0].mxu0
      %v4164 = vadd.f32 0.0, %v4163
      %v4165 = vpop.f32.mrb[0].mxu0
      %4166 = vmatprep.mubr.bf16.mxu0 0
      %4167 = vmatmul.mubr.bf16.gmra.mrb[0].mxu0 %v4049
      %v4168 = vpop.f32.mrb[0].mxu0
      %v4169 = vadd.f32 0.0, %v4168
      %v4170 = vpop.f32.mrb[0].mxu0
      %v4171 = vpop.f32.mrb[0].mxu0
      %v4172 = vadd.f32 0.0, %v4171
      %v4173 = vpop.f32.mrb[0].mxu0
      %4174 = vmatprep.mubr.bf16.mxu0 0
      %4175 = vmatmul.mubr.bf16.gmra.mrb[0].mxu0 %v4052
      %v4176 = vpop.f32.mrb[0].mxu0
      %v4177 = vadd.f32 0.0, %v4176
      %v4178 = vpop.f32.mrb[0].mxu0
      %v4179 = vpop.f32.mrb[0].mxu0
      %v4180 = vadd.f32 0.0, %v4179
      %v4181 = vpop.f32.mrb[0].mxu0
      %4182 = vmatprep.mubr.bf16.mxu0 0
      %4183 = vmatmul.mubr.bf16.gmra.mrb[0].mxu0 %v4055
      %v4184 = vpop.f32.mrb[0].mxu0
      %v4185 = vadd.f32 0.0, %v4184
      %v4186 = vpop.f32.mrb[0].mxu0
      %v4187 = vpop.f32.mrb[0].mxu0
      %v4188 = vadd.f32 0.0, %v4187
      %v4189 = vpop.f32.mrb[0].mxu0
      %4190 = vmatprep.mubr.bf16.mxu0 0
      %4191 = vmatmul.mubr.bf16.gmra.mrb[0].mxu0 %v4058
      %v4192 = vpop.f32.mrb[0].mxu0
      %v4193 = vadd.f32 0.0, %v4192
      %v4194 = vpop.f32.mrb[0].mxu0
      %v4195 = vpop.f32.mrb[0].mxu0
      %v4196 = vadd.f32 0.0, %v4195
      %v4197 = vpop.f32.mrb[0].mxu0
      %4198 = vmatprep.mubr.bf16.mxu0 0
      %4199 = vmatmul.mubr.bf16.gmra.mrb[0].mxu0 %v4061
      %v4200 = vpop.f32.mrb[0].mxu0
      %v4201 = vadd.f32 0.0, %v4200
      %v4202 = vpop.f32.mrb[0].mxu0
      %v4203 = vpop.f32.mrb[0].mxu0
      %v4204 = vadd.f32 0.0, %v4203
      %v4205 = vpop.f32.mrb[0].mxu0
      %4206 = vmatprep.mubr.bf16.mxu0 0
      %4207 = vmatmul.mubr.bf16.gmra.mrb[0].mxu0 %v4064
      %v4208 = vpop.f32.mrb[0].mxu0
      %v4209 = vadd.f32 0.0, %v4208
      %v4210 = vpop.f32.mrb[0].mxu0
      %v4211 = vpop.f32.mrb[0].mxu0
      %v4212 = vadd.f32 0.0, %v4211
      %v4213 = vpop.f32.mrb[0].mxu0
      %4214 = vmatprep.mubr.bf16.mxu0 0
      %4215 = vmatmul.mubr.bf16.gmra.mrb[0].mxu0 %v4067
      %v4216 = vpop.f32.mrb[0].mxu0
      %v4217 = vadd.f32 0.0, %v4216
      %v4218 = vpop.f32.mrb[0].mxu0
      %v4219 = vpop.f32.mrb[0].mxu0
      %v4220 = vadd.f32 0.0, %v4219
      %v4221 = vpop.f32.mrb[0].mxu0
      %4222 = vmatprep.mubr.bf16.mxu0 0
      %4223 = vmatmul.mubr.bf16.gmra.mrb[0].mxu0 %v4070
      %v4224 = vpop.f32.mrb[0].mxu0
      %v4225 = vadd.f32 0.0, %v4224
      %v4226 = vpop.f32.mrb[0].mxu0
      %v4227 = vpop.f32.mrb[0].mxu0
      %v4228 = vadd.f32 0.0, %v4227
      %v4229 = vpop.f32.mrb[0].mxu0
      %4230 = vmatprep.mubr.bf16.mxu0 0
      %4231 = vmatmul.mubr.bf16.gmra.mrb[0].mxu0 %v4073
      %v4232 = vpop.f32.mrb[0].mxu0
      %v4233 = vadd.f32 0.0, %v4232
      %v4234 = vpop.f32.mrb[0].mxu0
      %v4235 = vpop.f32.mrb[0].mxu0
      %v4236 = vadd.f32 0.0, %v4235
      %v4237 = vpop.f32.mrb[0].mxu0
      %4238 = vdwg.mxu0
      %v4239 = vadd.f32 %v3513, %v4113
      %v4240 = vadd.f32 %v3514, %v4116
      %v4241 = vadd.f32 %v3515, %v4121
      %v4242 = vadd.f32 %v3516, %v4124
      %v4243 = vadd.f32 %v3517, %v4129
      %v4244 = vadd.f32 %v3518, %v4132
      %v4245 = vadd.f32 %v3519, %v4137
      %v4246 = vadd.f32 %v3520, %v4140
      %v4247 = vadd.f32 %v3521, %v4145
      %v4248 = vadd.f32 %v3522, %v4148
      %v4249 = vadd.f32 %v3523, %v4153
      %v4250 = vadd.f32 %v3524, %v4156
      %v4251 = vadd.f32 %v3525, %v4161
      %v4252 = vadd.f32 %v3526, %v4164
      %v4253 = vadd.f32 %v3527, %v4169
      %v4254 = vadd.f32 %v3528, %v4172
      %v4255 = vadd.f32 %v3529, %v4177
      %v4256 = vadd.f32 %v3530, %v4180
      %v4257 = vadd.f32 %v3531, %v4185
      %v4258 = vadd.f32 %v3532, %v4188
      %v4259 = vadd.f32 %v3533, %v4193
      %v4260 = vadd.f32 %v3534, %v4196
      %v4261 = vadd.f32 %v3535, %v4201
      %v4262 = vadd.f32 %v3536, %v4204
      %v4263 = vadd.f32 %v3537, %v4209
      %v4264 = vadd.f32 %v3538, %v4212
      %v4265 = vadd.f32 %v3539, %v4217
      %v4266 = vadd.f32 %v3540, %v4220
      %v4267 = vadd.f32 %v3541, %v4225
      %v4268 = vadd.f32 %v3542, %v4228
      %v4269 = vadd.f32 %v3543, %v4233
      %v4270 = vadd.f32 %v3544, %v4236
      %v4271 = vld [vmem:[%s3186] sm:$0xe]
      %v4272 = vld [vmem:[%s3186 + $0xc] sm:$0xe]
      %v4273 = vld [vmem:[%s3186 + $0x18] sm:$0xe]
      %v4274 = vld [vmem:[%s3186 + $0x24] sm:$0xe]
      %v4275 = vld [vmem:[%s3186 + $0x30] sm:$0xe]
      %v4276 = vld [vmem:[%s3186 + $0x3c] sm:$0xe]
      %v4277 = vld [vmem:[%s3186 + $0x48] sm:$0xe]
      %v4278 = vld [vmem:[%s3186 + $0x54] sm:$0xe]
      %v4279 = vld [vmem:[%s3186 + $0x60] sm:$0xe]
      %v4280 = vld [vmem:[%s3186 + $0x6c] sm:$0xe]
      %v4281 = vld [vmem:[%s3186 + $0x78] sm:$0xe]
      %v4282 = vld [vmem:[%s3186 + $0x84] sm:$0xe]
      %v4283 = vld [vmem:[%s3186 + $0x90] sm:$0xe]
      %v4284 = vld [vmem:[%s3186 + $0x9c] sm:$0xe]
      %v4285 = vld [vmem:[%s3186 + $0xa8] sm:$0xe]
      %v4286 = vld [vmem:[%s3186 + $0xb4] sm:$0xe]
      %v4335 = vrot.slane %v4271, 5
      %v4336 = vrot.slane %v4335, 4
      %v4337 = vrot.slane %v3546, 5
      %v4338 = vsel %vm1224, %v4336, %v4337
      %v4339 = vrot.slane %v4337, 4
      %v4340 = vrot.slane %v3547, 5
      %v4341 = vsel %vm1224, %v4339, %v4340
      %v4342 = vrot.slane %v4272, 5
      %v4343 = vrot.slane %v4342, 4
      %v4344 = vrot.slane %v3549, 5
      %v4345 = vsel %vm1224, %v4343, %v4344
      %v4346 = vrot.slane %v4344, 4
      %v4347 = vrot.slane %v3550, 5
      %v4348 = vsel %vm1224, %v4346, %v4347
      %v4349 = vrot.slane %v4273, 5
      %v4350 = vrot.slane %v4349, 4
      %v4351 = vrot.slane %v3552, 5
      %v4352 = vsel %vm1224, %v4350, %v4351
      %v4353 = vrot.slane %v4351, 4
      %v4354 = vrot.slane %v3553, 5
      %v4355 = vsel %vm1224, %v4353, %v4354
      %v4356 = vrot.slane %v4274, 5
      %v4357 = vrot.slane %v4356, 4
      %v4358 = vrot.slane %v3555, 5
      %v4359 = vsel %vm1224, %v4357, %v4358
      %v4360 = vrot.slane %v4358, 4
      %v4361 = vrot.slane %v3556, 5
      %v4362 = vsel %vm1224, %v4360, %v4361
      %v4363 = vrot.slane %v4275, 5
      %v4364 = vrot.slane %v4363, 4
      %v4365 = vrot.slane %v3558, 5
      %v4366 = vsel %vm1224, %v4364, %v4365
      %v4367 = vrot.slane %v4365, 4
      %v4368 = vrot.slane %v3559, 5
      %v4369 = vsel %vm1224, %v4367, %v4368
      %v4370 = vrot.slane %v4276, 5
      %v4371 = vrot.slane %v4370, 4
      %v4372 = vrot.slane %v3561, 5
      %v4373 = vsel %vm1224, %v4371, %v4372
      %v4374 = vrot.slane %v4372, 4
      %v4375 = vrot.slane %v3562, 5
      %v4376 = vsel %vm1224, %v4374, %v4375
      %v4377 = vrot.slane %v4277, 5
      %v4378 = vrot.slane %v4377, 4
      %v4379 = vrot.slane %v3564, 5
      %v4380 = vsel %vm1224, %v4378, %v4379
      %v4381 = vrot.slane %v4379, 4
      %v4382 = vrot.slane %v3565, 5
      %v4383 = vsel %vm1224, %v4381, %v4382
      %v4384 = vrot.slane %v4278, 5
      %v4385 = vrot.slane %v4384, 4
      %v4386 = vrot.slane %v3567, 5
      %v4387 = vsel %vm1224, %v4385, %v4386
      %v4388 = vrot.slane %v4386, 4
      %v4389 = vrot.slane %v3568, 5
      %v4390 = vsel %vm1224, %v4388, %v4389
      %v4391 = vrot.slane %v4279, 5
      %v4392 = vrot.slane %v4391, 4
      %v4393 = vrot.slane %v3570, 5
      %v4394 = vsel %vm1224, %v4392, %v4393
      %v4395 = vrot.slane %v4393, 4
      %v4396 = vrot.slane %v3571, 5
      %v4397 = vsel %vm1224, %v4395, %v4396
      %v4398 = vrot.slane %v4280, 5
      %v4399 = vrot.slane %v4398, 4
      %v4400 = vrot.slane %v3573, 5
      %v4401 = vsel %vm1224, %v4399, %v4400
      %v4402 = vrot.slane %v4400, 4
      %v4403 = vrot.slane %v3574, 5
      %v4404 = vsel %vm1224, %v4402, %v4403
      %v4405 = vrot.slane %v4281, 5
      %v4406 = vrot.slane %v4405, 4
      %v4407 = vrot.slane %v3576, 5
      %v4408 = vsel %vm1224, %v4406, %v4407
      %v4409 = vrot.slane %v4407, 4
      %v4410 = vrot.slane %v3577, 5
      %v4411 = vsel %vm1224, %v4409, %v4410
      %v4412 = vrot.slane %v4282, 5
      %v4413 = vrot.slane %v4412, 4
      %v4414 = vrot.slane %v3579, 5
      %v4415 = vsel %vm1224, %v4413, %v4414
      %v4416 = vrot.slane %v4414, 4
      %v4417 = vrot.slane %v3580, 5
      %v4418 = vsel %vm1224, %v4416, %v4417
      %v4419 = vrot.slane %v4283, 5
      %v4420 = vrot.slane %v4419, 4
      %v4421 = vrot.slane %v3582, 5
      %v4422 = vsel %vm1224, %v4420, %v4421
      %v4423 = vrot.slane %v4421, 4
      %v4424 = vrot.slane %v3583, 5
      %v4425 = vsel %vm1224, %v4423, %v4424
      %v4426 = vrot.slane %v4284, 5
      %v4427 = vrot.slane %v4426, 4
      %v4428 = vrot.slane %v3585, 5
      %v4429 = vsel %vm1224, %v4427, %v4428
      %v4430 = vrot.slane %v4428, 4
      %v4431 = vrot.slane %v3586, 5
      %v4432 = vsel %vm1224, %v4430, %v4431
      %v4433 = vrot.slane %v4285, 5
      %v4434 = vrot.slane %v4433, 4
      %v4435 = vrot.slane %v3588, 5
      %v4436 = vsel %vm1224, %v4434, %v4435
      %v4437 = vrot.slane %v4435, 4
      %v4438 = vrot.slane %v3589, 5
      %v4439 = vsel %vm1224, %v4437, %v4438
      %v4440 = vrot.slane %v4286, 5
      %v4441 = vrot.slane %v4440, 4
      %v4442 = vrot.slane %v3591, 5
      %v4443 = vsel %vm1224, %v4441, %v4442
      %v4444 = vrot.slane %v4442, 4
      %v4445 = vrot.slane %v3592, 5
      %v4446 = vsel %vm1224, %v4444, %v4445
      %s4447 = scalar_lea.vmem %s172, 16
      %v4448 = vld [vmem:[%s4447] sm:$0x3]
      %v4449 = vunpack.c.l.b16 %v4338
      %v4450 = vunpack.c.l.b16 %v4341
      %v4451 = vunpack.c.l.b16 %v4345
      %v4452 = vunpack.c.l.b16 %v4348
      %v4453 = vunpack.c.l.b16 %v4352
      %v4454 = vunpack.c.l.b16 %v4355
      %v4455 = vunpack.c.l.b16 %v4359
      %v4456 = vunpack.c.l.b16 %v4362
      %v4457 = vunpack.c.l.b16 %v4366
      %v4458 = vunpack.c.l.b16 %v4369
      %v4459 = vunpack.c.l.b16 %v4373
      %v4460 = vunpack.c.l.b16 %v4376
      %v4461 = vunpack.c.l.b16 %v4380
      %v4462 = vunpack.c.l.b16 %v4383
      %v4463 = vunpack.c.l.b16 %v4387
      %v4464 = vunpack.c.l.b16 %v4390
      %v4465 = vunpack.c.l.b16 %v4394
      %v4466 = vunpack.c.l.b16 %v4397
      %v4467 = vunpack.c.l.b16 %v4401
      %v4468 = vunpack.c.l.b16 %v4404
      %v4469 = vunpack.c.l.b16 %v4408
      %v4470 = vunpack.c.l.b16 %v4411
      %v4471 = vunpack.c.l.b16 %v4415
      %v4472 = vunpack.c.l.b16 %v4418
      %v4473 = vunpack.c.l.b16 %v4422
      %v4474 = vunpack.c.l.b16 %v4425
      %v4475 = vunpack.c.l.b16 %v4429
      %v4476 = vunpack.c.l.b16 %v4432
      %v4477 = vunpack.c.l.b16 %v4436
      %v4478 = vunpack.c.l.b16 %v4439
      %v4479 = vunpack.c.l.b16 %v4443
      %v4480 = vunpack.c.l.b16 %v4446
      %v4481 = vpack.c.b16 %v4450, %v4449
      %v4482 = vpack.c.b16 %v4452, %v4451
      %v4483 = vpack.c.b16 %v4454, %v4453
      %v4484 = vpack.c.b16 %v4456, %v4455
      %v4485 = vpack.c.b16 %v4458, %v4457
      %v4486 = vpack.c.b16 %v4460, %v4459
      %v4487 = vpack.c.b16 %v4462, %v4461
      %v4488 = vpack.c.b16 %v4464, %v4463
      %v4489 = vpack.c.b16 %v4466, %v4465
      %v4490 = vpack.c.b16 %v4468, %v4467
      %v4491 = vpack.c.b16 %v4470, %v4469
      %v4492 = vpack.c.b16 %v4472, %v4471
      %v4493 = vpack.c.b16 %v4474, %v4473
      %v4494 = vpack.c.b16 %v4476, %v4475
      %v4495 = vpack.c.b16 %v4478, %v4477
      %v4496 = vpack.c.b16 %v4480, %v4479
      %v4498 = vsel %vm668, %v4481, 0
      %v4501 = vsel %vm668, %v4482, 0
      %v4504 = vsel %vm668, %v4483, 0
      %v4507 = vsel %vm668, %v4484, 0
      %v4510 = vsel %vm668, %v4485, 0
      %v4513 = vsel %vm668, %v4486, 0
      %v4516 = vsel %vm668, %v4487, 0
      %v4519 = vsel %vm668, %v4488, 0
      %v4522 = vsel %vm668, %v4489, 0
      %v4525 = vsel %vm668, %v4490, 0
      %v4528 = vsel %vm668, %v4491, 0
      %v4531 = vsel %vm668, %v4492, 0
      %v4534 = vsel %vm668, %v4493, 0
      %v4537 = vsel %vm668, %v4494, 0
      %v4540 = vsel %vm668, %v4495, 0
      %v4543 = vsel %vm668, %v4496, 0
      %v4546 = vsel %vm717, %v4448, 0
      %4548 = vmatprep.subr.bf16.mxu0 0
      %4549 = vmatpush1.bf16.msra.mxu0 %v4546
      %4550 = vmatprep.subr.bf16.mxu0 0
      %4551 = vmatpush1.bf16.msra.mxu0 0
      %4552 = vmatprep.subr.bf16.mxu0 0
      %4553 = vmatpush1.bf16.msra.mxu0 0
      %4554 = vmatprep.subr.bf16.mxu0 0
      %4555 = vmatpush1.bf16.msra.mxu0 0
      %4556 = vmatprep.subr.bf16.mxu0 0
      %4557 = vmatpush1.bf16.msra.mxu0 0
      %4558 = vmatprep.subr.bf16.mxu0 0
      %4559 = vmatpush1.bf16.msra.mxu0 0
      %4560 = vmatprep.subr.bf16.mxu0 0
      %4561 = vmatpush1.bf16.msra.mxu0 0
      %4562 = vmatprep.subr.bf16.mxu0 0
      %4563 = vmatpush1.bf16.msra.mxu0 0
      %4564 = vmatprep.subr.bf16.mxu0 0
      %4565 = vmatpush1.bf16.msra.mxu0 0
      %4566 = vmatprep.subr.bf16.mxu0 0
      %4567 = vmatpush1.bf16.msra.mxu0 0
      %4568 = vmatprep.subr.bf16.mxu0 0
      %4569 = vmatpush1.bf16.msra.mxu0 0
      %4570 = vmatprep.subr.bf16.mxu0 0
      %4571 = vmatpush1.bf16.msra.mxu0 0
      %4572 = vmatprep.subr.bf16.mxu0 0
      %4573 = vmatpush1.bf16.msra.mxu0 0
      %4574 = vmatprep.subr.bf16.mxu0 0
      %4575 = vmatpush1.bf16.msra.mxu0 0
      %4576 = vmatprep.subr.bf16.mxu0 0
      %4577 = vmatpush1.bf16.msra.mxu0 0
      %4578 = vmatprep.subr.bf16.mxu0 0
      %4579 = vmatpush1.bf16.msra.mxu0 0
      %4580 = vmatprep.mubr.bf16.mxu0 0
      %4581 = vmatmul.mubr.bf16.gmra.mrb[0].mxu0 %v4498
      %v4582 = vpop.f32.mrb[0].mxu0
      %v4583 = vadd.f32 0.0, %v4582
      %v4584 = vpop.f32.mrb[0].mxu0
      %v4585 = vpop.f32.mrb[0].mxu0
      %v4586 = vadd.f32 0.0, %v4585
      %v4587 = vpop.f32.mrb[0].mxu0
      %4588 = vmatprep.mubr.bf16.mxu0 0
      %4589 = vmatmul.mubr.bf16.gmra.mrb[0].mxu0 %v4501
      %v4590 = vpop.f32.mrb[0].mxu0
      %v4591 = vadd.f32 0.0, %v4590
      %v4592 = vpop.f32.mrb[0].mxu0
      %v4593 = vpop.f32.mrb[0].mxu0
      %v4594 = vadd.f32 0.0, %v4593
      %v4595 = vpop.f32.mrb[0].mxu0
      %4596 = vmatprep.mubr.bf16.mxu0 0
      %4597 = vmatmul.mubr.bf16.gmra.mrb[0].mxu0 %v4504
      %v4598 = vpop.f32.mrb[0].mxu0
      %v4599 = vadd.f32 0.0, %v4598
      %v4600 = vpop.f32.mrb[0].mxu0
      %v4601 = vpop.f32.mrb[0].mxu0
      %v4602 = vadd.f32 0.0, %v4601
      %v4603 = vpop.f32.mrb[0].mxu0
      %4604 = vmatprep.mubr.bf16.mxu0 0
      %4605 = vmatmul.mubr.bf16.gmra.mrb[0].mxu0 %v4507
      %v4606 = vpop.f32.mrb[0].mxu0
      %v4607 = vadd.f32 0.0, %v4606
      %v4608 = vpop.f32.mrb[0].mxu0
      %v4609 = vpop.f32.mrb[0].mxu0
      %v4610 = vadd.f32 0.0, %v4609
      %v4611 = vpop.f32.mrb[0].mxu0
      %4612 = vmatprep.mubr.bf16.mxu0 0
      %4613 = vmatmul.mubr.bf16.gmra.mrb[0].mxu0 %v4510
      %v4614 = vpop.f32.mrb[0].mxu0
      %v4615 = vadd.f32 0.0, %v4614
      %v4616 = vpop.f32.mrb[0].mxu0
      %v4617 = vpop.f32.mrb[0].mxu0
      %v4618 = vadd.f32 0.0, %v4617
      %v4619 = vpop.f32.mrb[0].mxu0
      %4620 = vmatprep.mubr.bf16.mxu0 0
      %4621 = vmatmul.mubr.bf16.gmra.mrb[0].mxu0 %v4513
      %v4622 = vpop.f32.mrb[0].mxu0
      %v4623 = vadd.f32 0.0, %v4622
      %v4624 = vpop.f32.mrb[0].mxu0
      %v4625 = vpop.f32.mrb[0].mxu0
      %v4626 = vadd.f32 0.0, %v4625
      %v4627 = vpop.f32.mrb[0].mxu0
      %4628 = vmatprep.mubr.bf16.mxu0 0
      %4629 = vmatmul.mubr.bf16.gmra.mrb[0].mxu0 %v4516
      %v4630 = vpop.f32.mrb[0].mxu0
      %v4631 = vadd.f32 0.0, %v4630
      %v4632 = vpop.f32.mrb[0].mxu0
      %v4633 = vpop.f32.mrb[0].mxu0
      %v4634 = vadd.f32 0.0, %v4633
      %v4635 = vpop.f32.mrb[0].mxu0
      %4636 = vmatprep.mubr.bf16.mxu0 0
      %4637 = vmatmul.mubr.bf16.gmra.mrb[0].mxu0 %v4519
      %v4638 = vpop.f32.mrb[0].mxu0
      %v4639 = vadd.f32 0.0, %v4638
      %v4640 = vpop.f32.mrb[0].mxu0
      %v4641 = vpop.f32.mrb[0].mxu0
      %v4642 = vadd.f32 0.0, %v4641
      %v4643 = vpop.f32.mrb[0].mxu0
      %4644 = vmatprep.mubr.bf16.mxu0 0
      %4645 = vmatmul.mubr.bf16.gmra.mrb[0].mxu0 %v4522
      %v4646 = vpop.f32.mrb[0].mxu0
      %v4647 = vadd.f32 0.0, %v4646
      %v4648 = vpop.f32.mrb[0].mxu0
      %v4649 = vpop.f32.mrb[0].mxu0
      %v4650 = vadd.f32 0.0, %v4649
      %v4651 = vpop.f32.mrb[0].mxu0
      %4652 = vmatprep.mubr.bf16.mxu0 0
      %4653 = vmatmul.mubr.bf16.gmra.mrb[0].mxu0 %v4525
      %v4654 = vpop.f32.mrb[0].mxu0
      %v4655 = vadd.f32 0.0, %v4654
      %v4656 = vpop.f32.mrb[0].mxu0
      %v4657 = vpop.f32.mrb[0].mxu0
      %v4658 = vadd.f32 0.0, %v4657
      %v4659 = vpop.f32.mrb[0].mxu0
      %4660 = vmatprep.mubr.bf16.mxu0 0
      %4661 = vmatmul.mubr.bf16.gmra.mrb[0].mxu0 %v4528
      %v4662 = vpop.f32.mrb[0].mxu0
      %v4663 = vadd.f32 0.0, %v4662
      %v4664 = vpop.f32.mrb[0].mxu0
      %v4665 = vpop.f32.mrb[0].mxu0
      %v4666 = vadd.f32 0.0, %v4665
      %v4667 = vpop.f32.mrb[0].mxu0
      %4668 = vmatprep.mubr.bf16.mxu0 0
      %4669 = vmatmul.mubr.bf16.gmra.mrb[0].mxu0 %v4531
      %v4670 = vpop.f32.mrb[0].mxu0
      %v4671 = vadd.f32 0.0, %v4670
      %v4672 = vpop.f32.mrb[0].mxu0
      %v4673 = vpop.f32.mrb[0].mxu0
      %v4674 = vadd.f32 0.0, %v4673
      %v4675 = vpop.f32.mrb[0].mxu0
      %4676 = vmatprep.mubr.bf16.mxu0 0
      %4677 = vmatmul.mubr.bf16.gmra.mrb[0].mxu0 %v4534
      %v4678 = vpop.f32.mrb[0].mxu0
      %v4679 = vadd.f32 0.0, %v4678
      %v4680 = vpop.f32.mrb[0].mxu0
      %v4681 = vpop.f32.mrb[0].mxu0
      %v4682 = vadd.f32 0.0, %v4681
      %v4683 = vpop.f32.mrb[0].mxu0
      %4684 = vmatprep.mubr.bf16.mxu0 0
      %4685 = vmatmul.mubr.bf16.gmra.mrb[0].mxu0 %v4537
      %v4686 = vpop.f32.mrb[0].mxu0
      %v4687 = vadd.f32 0.0, %v4686
      %v4688 = vpop.f32.mrb[0].mxu0
      %v4689 = vpop.f32.mrb[0].mxu0
      %v4690 = vadd.f32 0.0, %v4689
      %v4691 = vpop.f32.mrb[0].mxu0
      %4692 = vmatprep.mubr.bf16.mxu0 0
      %4693 = vmatmul.mubr.bf16.gmra.mrb[0].mxu0 %v4540
      %v4694 = vpop.f32.mrb[0].mxu0
      %v4695 = vadd.f32 0.0, %v4694
      %v4696 = vpop.f32.mrb[0].mxu0
      %v4697 = vpop.f32.mrb[0].mxu0
      %v4698 = vadd.f32 0.0, %v4697
      %v4699 = vpop.f32.mrb[0].mxu0
      %4700 = vmatprep.mubr.bf16.mxu0 0
      %4701 = vmatmul.mubr.bf16.gmra.mrb[0].mxu0 %v4543
      %v4702 = vpop.f32.mrb[0].mxu0
      %v4703 = vadd.f32 0.0, %v4702
      %v4704 = vpop.f32.mrb[0].mxu0
      %v4705 = vpop.f32.mrb[0].mxu0
      %v4706 = vadd.f32 0.0, %v4705
      %v4707 = vpop.f32.mrb[0].mxu0
      %4708 = vdwg.mxu0
      %v4709 = vadd.f32 %v4239, %v4583
      %v4710 = vadd.f32 %v4240, %v4586
      %v4711 = vadd.f32 %v4241, %v4591
      %v4712 = vadd.f32 %v4242, %v4594
      %v4713 = vadd.f32 %v4243, %v4599
      %v4714 = vadd.f32 %v4244, %v4602
      %v4715 = vadd.f32 %v4245, %v4607
      %v4716 = vadd.f32 %v4246, %v4610
      %v4717 = vadd.f32 %v4247, %v4615
      %v4718 = vadd.f32 %v4248, %v4618
      %v4719 = vadd.f32 %v4249, %v4623
      %v4720 = vadd.f32 %v4250, %v4626
      %v4721 = vadd.f32 %v4251, %v4631
      %v4722 = vadd.f32 %v4252, %v4634
      %v4723 = vadd.f32 %v4253, %v4639
      %v4724 = vadd.f32 %v4254, %v4642
      %v4725 = vadd.f32 %v4255, %v4647
      %v4726 = vadd.f32 %v4256, %v4650
      %v4727 = vadd.f32 %v4257, %v4655
      %v4728 = vadd.f32 %v4258, %v4658
      %v4729 = vadd.f32 %v4259, %v4663
      %v4730 = vadd.f32 %v4260, %v4666
      %v4731 = vadd.f32 %v4261, %v4671
      %v4732 = vadd.f32 %v4262, %v4674
      %v4733 = vadd.f32 %v4263, %v4679
      %v4734 = vadd.f32 %v4264, %v4682
      %v4735 = vadd.f32 %v4265, %v4687
      %v4736 = vadd.f32 %v4266, %v4690
      %v4737 = vadd.f32 %v4267, %v4695
      %v4738 = vadd.f32 %v4268, %v4698
      %v4739 = vadd.f32 %v4269, %v4703
      %v4740 = vadd.f32 %v4270, %v4706
      %v4741 = vadd.f32 %v4709, %v4710
      %v4742 = vadd.f32 %v4741, %v4711
      %v4743 = vadd.f32 %v4742, %v4712
      %v4744 = vadd.f32 %v4743, %v4713
      %v4745 = vadd.f32 %v4744, %v4714
      %v4746 = vadd.f32 %v4745, %v4715
      %v4747 = vadd.f32 %v4746, %v4716
      %v4748 = vadd.f32 %v4747, %v4717
      %v4749 = vadd.f32 %v4748, %v4718
      %v4750 = vadd.f32 %v4749, %v4719
      %v4751 = vadd.f32 %v4750, %v4720
      %v4752 = vadd.f32 %v4751, %v4721
      %v4753 = vadd.f32 %v4752, %v4722
      %v4754 = vadd.f32 %v4753, %v4723
      %v4755 = vadd.f32 %v4754, %v4724
      %v4756 = vadd.f32 %v4755, %v4725
      %v4757 = vadd.f32 %v4756, %v4726
      %v4758 = vadd.f32 %v4757, %v4727
      %v4759 = vadd.f32 %v4758, %v4728
      %v4760 = vadd.f32 %v4759, %v4729
      %v4761 = vadd.f32 %v4760, %v4730
      %v4762 = vadd.f32 %v4761, %v4731
      %v4763 = vadd.f32 %v4762, %v4732
      %v4764 = vadd.f32 %v4763, %v4733
      %v4765 = vadd.f32 %v4764, %v4734
      %v4766 = vadd.f32 %v4765, %v4735
      %v4767 = vadd.f32 %v4766, %v4736
      %v4768 = vadd.f32 %v4767, %v4737
      %v4769 = vadd.f32 %v4768, %v4738
      %v4770 = vadd.f32 %v4769, %v4739
      %v4771 = vadd.f32 %v4770, %v4740
      %v4772 = vrot.slane %v4771, 4
      %v4773 = vadd.f32 %v4771, %v4772
      %v4774 = vrot.slane %v4773, 2
      %v4775 = vadd.f32 %v4773, %v4774
      %v4776 = vrot.slane %v4775, 1
      %v4777 = vadd.f32 %v4775, %v4776
      %v4778 = vmul.f32 %v4777, 0.00390625
      %v4779 = vsub.f32 %v4709, %v4778
      %v4780 = vsub.f32 %v4710, %v4778
      %v4781 = vsub.f32 %v4711, %v4778
      %v4782 = vsub.f32 %v4712, %v4778
      %v4783 = vsub.f32 %v4713, %v4778
      %v4784 = vsub.f32 %v4714, %v4778
      %v4785 = vsub.f32 %v4715, %v4778
      %v4786 = vsub.f32 %v4716, %v4778
      %v4787 = vsub.f32 %v4717, %v4778
      %v4788 = vsub.f32 %v4718, %v4778
      %v4789 = vsub.f32 %v4719, %v4778
      %v4790 = vsub.f32 %v4720, %v4778
      %v4791 = vsub.f32 %v4721, %v4778
      %v4792 = vsub.f32 %v4722, %v4778
      %v4793 = vsub.f32 %v4723, %v4778
      %v4794 = vsub.f32 %v4724, %v4778
      %v4795 = vsub.f32 %v4725, %v4778
      %v4796 = vsub.f32 %v4726, %v4778
      %v4797 = vsub.f32 %v4727, %v4778
      %v4798 = vsub.f32 %v4728, %v4778
      %v4799 = vsub.f32 %v4729, %v4778
      %v4800 = vsub.f32 %v4730, %v4778
      %v4801 = vsub.f32 %v4731, %v4778
      %v4802 = vsub.f32 %v4732, %v4778
      %v4803 = vsub.f32 %v4733, %v4778
      %v4804 = vsub.f32 %v4734, %v4778
      %v4805 = vsub.f32 %v4735, %v4778
      %v4806 = vsub.f32 %v4736, %v4778
      %v4807 = vsub.f32 %v4737, %v4778
      %v4808 = vsub.f32 %v4738, %v4778
      %v4809 = vsub.f32 %v4739, %v4778
      %v4810 = vsub.f32 %v4740, %v4778
      %v4811 = vmul.f32 %v4779, %v4779
      %v4812 = vmul.f32 %v4780, %v4780
      %v4813 = vmul.f32 %v4781, %v4781
      %v4814 = vmul.f32 %v4782, %v4782
      %v4815 = vmul.f32 %v4783, %v4783
      %v4816 = vmul.f32 %v4784, %v4784
      %v4817 = vmul.f32 %v4785, %v4785
      %v4818 = vmul.f32 %v4786, %v4786
      %v4819 = vmul.f32 %v4787, %v4787
      %v4820 = vmul.f32 %v4788, %v4788
      %v4821 = vmul.f32 %v4789, %v4789
      %v4822 = vmul.f32 %v4790, %v4790
      %v4823 = vmul.f32 %v4791, %v4791
      %v4824 = vmul.f32 %v4792, %v4792
      %v4825 = vmul.f32 %v4793, %v4793
      %v4826 = vmul.f32 %v4794, %v4794
      %v4827 = vmul.f32 %v4795, %v4795
      %v4828 = vmul.f32 %v4796, %v4796
      %v4829 = vmul.f32 %v4797, %v4797
      %v4830 = vmul.f32 %v4798, %v4798
      %v4831 = vmul.f32 %v4799, %v4799
      %v4832 = vmul.f32 %v4800, %v4800
      %v4833 = vmul.f32 %v4801, %v4801
      %v4834 = vmul.f32 %v4802, %v4802
      %v4835 = vmul.f32 %v4803, %v4803
      %v4836 = vmul.f32 %v4804, %v4804
      %v4837 = vmul.f32 %v4805, %v4805
      %v4838 = vmul.f32 %v4806, %v4806
      %v4839 = vmul.f32 %v4807, %v4807
      %v4840 = vmul.f32 %v4808, %v4808
      %v4841 = vmul.f32 %v4809, %v4809
      %v4842 = vmul.f32 %v4810, %v4810
      %v4843 = vadd.f32 %v4811, %v4812
      %v4844 = vadd.f32 %v4843, %v4813
      %v4845 = vadd.f32 %v4844, %v4814
      %v4846 = vadd.f32 %v4845, %v4815
      %v4847 = vadd.f32 %v4846, %v4816
      %v4848 = vadd.f32 %v4847, %v4817
      %v4849 = vadd.f32 %v4848, %v4818
      %v4850 = vadd.f32 %v4849, %v4819
      %v4851 = vadd.f32 %v4850, %v4820
      %v4852 = vadd.f32 %v4851, %v4821
      %v4853 = vadd.f32 %v4852, %v4822
      %v4854 = vadd.f32 %v4853, %v4823
      %v4855 = vadd.f32 %v4854, %v4824
      %v4856 = vadd.f32 %v4855, %v4825
      %v4857 = vadd.f32 %v4856, %v4826
      %v4858 = vadd.f32 %v4857, %v4827
      %v4859 = vadd.f32 %v4858, %v4828
      %v4860 = vadd.f32 %v4859, %v4829
      %v4861 = vadd.f32 %v4860, %v4830
      %v4862 = vadd.f32 %v4861, %v4831
      %v4863 = vadd.f32 %v4862, %v4832
      %v4864 = vadd.f32 %v4863, %v4833
      %v4865 = vadd.f32 %v4864, %v4834
      %v4866 = vadd.f32 %v4865, %v4835
      %v4867 = vadd.f32 %v4866, %v4836
      %v4868 = vadd.f32 %v4867, %v4837
      %v4869 = vadd.f32 %v4868, %v4838
      %v4870 = vadd.f32 %v4869, %v4839
      %v4871 = vadd.f32 %v4870, %v4840
      %v4872 = vadd.f32 %v4871, %v4841
      %v4873 = vadd.f32 %v4872, %v4842
      %v4874 = vrot.slane %v4873, 4
      %v4875 = vadd.f32 %v4873, %v4874
      %v4876 = vrot.slane %v4875, 2
      %v4877 = vadd.f32 %v4875, %v4876
      %v4878 = vrot.slane %v4877, 1
      %v4879 = vadd.f32 %v4877, %v4878
      %v4880 = vmul.f32 %v4879, 0.00390625
      %v4881 = vadd.f32 %v4880, 1e-05
      %v4882 = vrsqrt.pop %v4881
      %v4883 = vmul.f32 %v4779, %v4882
      %v4884 = vmul.f32 %v4780, %v4882
      %v4885 = vmul.f32 %v4781, %v4882
      %v4886 = vmul.f32 %v4782, %v4882
      %v4887 = vmul.f32 %v4783, %v4882
      %v4888 = vmul.f32 %v4784, %v4882
      %v4889 = vmul.f32 %v4785, %v4882
      %v4890 = vmul.f32 %v4786, %v4882
      %v4891 = vmul.f32 %v4787, %v4882
      %v4892 = vmul.f32 %v4788, %v4882
      %v4893 = vmul.f32 %v4789, %v4882
      %v4894 = vmul.f32 %v4790, %v4882
      %v4895 = vmul.f32 %v4791, %v4882
      %v4896 = vmul.f32 %v4792, %v4882
      %v4897 = vmul.f32 %v4793, %v4882
      %v4898 = vmul.f32 %v4794, %v4882
      %v4899 = vmul.f32 %v4795, %v4882
      %v4900 = vmul.f32 %v4796, %v4882
      %v4901 = vmul.f32 %v4797, %v4882
      %v4902 = vmul.f32 %v4798, %v4882
      %v4903 = vmul.f32 %v4799, %v4882
      %v4904 = vmul.f32 %v4800, %v4882
      %v4905 = vmul.f32 %v4801, %v4882
      %v4906 = vmul.f32 %v4802, %v4882
      %v4907 = vmul.f32 %v4803, %v4882
      %v4908 = vmul.f32 %v4804, %v4882
      %v4909 = vmul.f32 %v4805, %v4882
      %v4910 = vmul.f32 %v4806, %v4882
      %v4911 = vmul.f32 %v4807, %v4882
      %v4912 = vmul.f32 %v4808, %v4882
      %v4913 = vmul.f32 %v4809, %v4882
      %v4914 = vmul.f32 %v4810, %v4882
      %v4915 = vmax.f32 %v4883, 0.0
      %v4916 = vmax.f32 %v4884, 0.0
      %v4917 = vmax.f32 %v4885, 0.0
      %v4918 = vmax.f32 %v4886, 0.0
      %v4919 = vmax.f32 %v4887, 0.0
      %v4920 = vmax.f32 %v4888, 0.0
      %v4921 = vmax.f32 %v4889, 0.0
      %v4922 = vmax.f32 %v4890, 0.0
      %v4923 = vmax.f32 %v4891, 0.0
      %v4924 = vmax.f32 %v4892, 0.0
      %v4925 = vmax.f32 %v4893, 0.0
      %v4926 = vmax.f32 %v4894, 0.0
      %v4927 = vmax.f32 %v4895, 0.0
      %v4928 = vmax.f32 %v4896, 0.0
      %v4929 = vmax.f32 %v4897, 0.0
      %v4930 = vmax.f32 %v4898, 0.0
      %v4931 = vmax.f32 %v4899, 0.0
      %v4932 = vmax.f32 %v4900, 0.0
      %v4933 = vmax.f32 %v4901, 0.0
      %v4934 = vmax.f32 %v4902, 0.0
      %v4935 = vmax.f32 %v4903, 0.0
      %v4936 = vmax.f32 %v4904, 0.0
      %v4937 = vmax.f32 %v4905, 0.0
      %v4938 = vmax.f32 %v4906, 0.0
      %v4939 = vmax.f32 %v4907, 0.0
      %v4940 = vmax.f32 %v4908, 0.0
      %v4941 = vmax.f32 %v4909, 0.0
      %v4942 = vmax.f32 %v4910, 0.0
      %v4943 = vmax.f32 %v4911, 0.0
      %v4944 = vmax.f32 %v4912, 0.0
      %v4945 = vmax.f32 %v4913, 0.0
      %v4946 = vmax.f32 %v4914, 0.0
      %4947 = vst [vmem:[%s180] sm:$0xff] %v4915
      %4948 = vst [vmem:[%s180 + $0x8] sm:$0xff] %v4916
      %4949 = vst [vmem:[%s180 + $0x10] sm:$0xff] %v4917
      %4950 = vst [vmem:[%s180 + $0x18] sm:$0xff] %v4918
      %4951 = vst [vmem:[%s180 + $0x20] sm:$0xff] %v4919
      %4952 = vst [vmem:[%s180 + $0x28] sm:$0xff] %v4920
      %4953 = vst [vmem:[%s180 + $0x30] sm:$0xff] %v4921
      %4954 = vst [vmem:[%s180 + $0x38] sm:$0xff] %v4922
      %4955 = vst [vmem:[%s180 + $0x40] sm:$0xff] %v4923
      %4956 = vst [vmem:[%s180 + $0x48] sm:$0xff] %v4924
      %4957 = vst [vmem:[%s180 + $0x50] sm:$0xff] %v4925
      %4958 = vst [vmem:[%s180 + $0x58] sm:$0xff] %v4926
      %4959 = vst [vmem:[%s180 + $0x60] sm:$0xff] %v4927
      %4960 = vst [vmem:[%s180 + $0x68] sm:$0xff] %v4928
      %4961 = vst [vmem:[%s180 + $0x70] sm:$0xff] %v4929
      %4962 = vst [vmem:[%s180 + $0x78] sm:$0xff] %v4930
      %4963 = vst [vmem:[%s180 + $0x80] sm:$0xff] %v4931
      %4964 = vst [vmem:[%s180 + $0x88] sm:$0xff] %v4932
      %4965 = vst [vmem:[%s180 + $0x90] sm:$0xff] %v4933
      %4966 = vst [vmem:[%s180 + $0x98] sm:$0xff] %v4934
      %4967 = vst [vmem:[%s180 + $0xa0] sm:$0xff] %v4935
      %4968 = vst [vmem:[%s180 + $0xa8] sm:$0xff] %v4936
      %4969 = vst [vmem:[%s180 + $0xb0] sm:$0xff] %v4937
      %4970 = vst [vmem:[%s180 + $0xb8] sm:$0xff] %v4938
      %4971 = vst [vmem:[%s180 + $0xc0] sm:$0xff] %v4939
      %4972 = vst [vmem:[%s180 + $0xc8] sm:$0xff] %v4940
      %4973 = vst [vmem:[%s180 + $0xd0] sm:$0xff] %v4941
      %4974 = vst [vmem:[%s180 + $0xd8] sm:$0xff] %v4942
      %4975 = vst [vmem:[%s180 + $0xe0] sm:$0xff] %v4943
      %4976 = vst [vmem:[%s180 + $0xe8] sm:$0xff] %v4944
      %4977 = vst [vmem:[%s180 + $0xf0] sm:$0xff] %v4945
      %4978 = vst [vmem:[%s180 + $0xf8] sm:$0xff] %v4946
      %p4979 = scmp.lt.s32.totalorder %s17, 1
      %s4980 = scalar_select %p4979, %s17, 1
      %p4981 = scmp.lt.s32.totalorder %s18, 0
      %s4982 = scalar_select %p4981, %s18, 0
      %s4983 = smul.addr %s4980, 32
      %s4984 = sadd.s32 %s4982, %s4983
      %s4985 = smul.addr %s4984, 8
      %s4986 = scalar_lea.vmem %s2, %s4985
      // Predicated region
      $region29: #{conv_norm_relu.1} parent=27 // pred_check
        %p4987 = pneg %p97
      $region30: #{conv_norm_relu.1} parent=27 // pred_check_branch
        %4989 = sbr.rel (%p4987) target = $region32
      $region31: #{conv_norm_relu.1} parent=27 // pred_region
        _
      $region32: #{conv_norm_relu.1} parent=27 // pred_fallthru
        _
    $region28: #{conv_norm_relu.1} parent=5 // pred_fallthru
      _
    %p4990 = scmp.le.s32.totalorder 2, %s8
    // Predicated region
    $region33: #{conv_norm_relu.1} parent=5 // pred_check
      %p4991 = pneg %p4990
    $region34: #{conv_norm_relu.1} parent=5 // pred_check_branch
      %4993 = sbr.rel (%p4991) target = $region36
    $region35: #{conv_norm_relu.1} parent=5 // pred_region
      %s4994 = ssub.s32 %s8, 2
      // Predicated region
      $region37: #{conv_norm_relu.1} parent=35 // pred_check
        %p4995 = pneg %p103
      $region38: #{conv_norm_relu.1} parent=35 // pred_check_branch
        %4997 = sbr.rel (%p4995) target = $region40
      $region39: #{conv_norm_relu.1} parent=35 // pred_region
        %p4998 = scmp.lt.s32.totalorder %s19, 1
        %s4999 = scalar_select %p4998, %s19, 1
        %p5000 = scmp.lt.s32.totalorder %s20, 0
        %s5001 = scalar_select %p5000, %s20, 0
        %s5002 = smul.addr %s4999, 32
        %s5003 = sadd.s32 %s5001, %s5002
        %s5004 = smul.addr %s5003, 8
        %s5005 = scalar_lea.vmem %s2, %s5004
      $region40: #{conv_norm_relu.1} parent=35 // pred_fallthru
        _
    $region36: #{conv_norm_relu.1} parent=5 // pred_fallthru
      _
  $region6: #{conv_norm_relu.1} parent=0 // loop_footer
    %s12 = sadd.s32 1, %s8
  $region7: #{conv_norm_relu.1} parent=0 // loop_footer_branch
    %7 = sbr.rel target = $region3
  $region8: #{conv_norm_relu.1} parent=0 // loop_exit
    _

</llo_original>
